<compile_context>
chip_gen: v7x
topology: tpu7x:2x2x1
jax: 0.10.0
libtpu: 0.0.40
codegen_flags: <defaults>
</compile_context>

<pallas_src>
import functools

import jax
import jax.numpy as jnp
from jax.experimental import pallas as pl
from jax.experimental.pallas import tpu as pltpu


def _round_up(x, m):
    return ((x + m - 1) // m) * m


def _make_kernel(TB, H, W, Cp, Cmp, K):
    HW = H * W
    M = TB * HW
    KK = K * K
    pad = K // 2

    def kernel(xp_ref, wkey_ref, b1_ref, wvx_ref, b2_ref,
               w1k_ref, b3_ref, w2_ref, b4_ref, out_ref):
        f32 = jnp.float32
        bf16 = jnp.bfloat16

        def tap(ky, kx):
            # Static VMEM window into the halo'd slab; x is fetched from HBM once.
            return xp_ref[:, ky:ky + H, kx:kx + W, :].reshape(M, Cp)

        x = tap(pad, pad)                                    # center tap == x (bf16)

        # ---- key_embed: grouped KxK conv as KK accumulating (M,Cp)@(Cp,Cp) GEMMs
        #      (per-tap block-diagonal weights, BN1 scale folded, f32 accumulate).
        k1 = jnp.dot(tap(0, 0), wkey_ref[0], preferred_element_type=f32)
        for t in range(1, KK):
            ky, kx = divmod(t, K)
            k1 = k1 + jnp.dot(tap(ky, kx), wkey_ref[t],
                              preferred_element_type=f32)
        k1 = jnp.maximum(k1 + b1_ref[...], 0.0)              # BN1 bias + ReLU (f32)

        # ---- value_embed + x-half of attention conv1: one fused 2*Cp-wide GEMM.
        vx = jnp.dot(x, wvx_ref[...], preferred_element_type=f32)     # (M, Cp+Cmp)
        v = vx[:, :Cp] + b2_ref[...]                          # BN2 bias (f32)
        mid = vx[:, Cp:Cp + Cmp] + jnp.dot(k1.astype(bf16), w1k_ref[...],
                                           preferred_element_type=f32)
        mid = jnp.maximum(mid + b3_ref[...], 0.0)             # BN3 bias + ReLU (f32)

        # ---- attention conv2 (mean over the KK taps folded into the weights).
        att = jnp.dot(mid.astype(bf16), w2_ref[...],
                      preferred_element_type=f32) + b4_ref[...]

        # ---- softmax over spatial positions, per (batch element, channel).
        att3 = att.reshape(TB, HW, Cp)
        m = jnp.max(att3, axis=1, keepdims=True)
        e = jnp.exp(att3 - m)
        denom = jnp.sum(e, axis=1, keepdims=True)
        sm = e * pl.reciprocal(denom, approx=True)            # EUP slot
        k2 = sm * v.reshape(TB, HW, Cp)

        out_ref[...] = (k1.reshape(TB, HW, Cp) + k2).astype(out_ref.dtype)

    return kernel


def pack_cot_params(params, kernel_size=3, groups=4, eps=1e-5):
    """One-time weight packing (hoisted out of the per-call path).

    Inference-mode BatchNorm running stats are folded into the conv weights.
    # TODO(synk): training-mode BN (batch statistics) is not reproduced.
    """
    f32, bf16 = jnp.float32, jnp.bfloat16
    K = kernel_size
    KK = K * K
    C = params['wval'].shape[0]
    Cg = C // groups
    Cm = params['watt1'].shape[0]
    Cp = _round_up(C, 128)
    Cmp = _round_up(Cm, 128)

    def bn_fold(gamma, beta, mean, var):
        s = gamma / jnp.sqrt(var + eps)
        return s.astype(f32), (beta - mean * s).astype(f32)

    s1, b1 = bn_fold(*params['bn1'])
    s2, b2 = bn_fold(*params['bn2'])
    s3, b3 = bn_fold(*params['bn3'])

    # key_embed grouped conv -> per-tap block-diagonal (Cp, Cp), BN1 scale folded.
    wk = params['wkey'].astype(f32).reshape(groups, Cg, Cg, K, K)     # (g,o,i,ky,kx)
    blk = jnp.transpose(wk, (3, 4, 0, 2, 1)).reshape(KK, groups, Cg, Cg)  # (t,g,i,o)
    wkey_full = jnp.zeros((KK, C, C), f32)
    for g in range(groups):
        wkey_full = wkey_full.at[:, g * Cg:(g + 1) * Cg,
                                 g * Cg:(g + 1) * Cg].set(blk[:, g])
    wkey_full = wkey_full * s1[None, None, :]
    # TODO(synk): for production Cg >= 128 use compact per-group (KK*Cg, Cg)
    # weights + group-major tap packing instead of this dense block-diagonal
    # form (4x less MXU work and 4x less weight VMEM on the dominant GEMM).
    wkey_p = jnp.zeros((KK, Cp, Cp), f32).at[:, :C, :C].set(wkey_full).astype(bf16)
    b1_p = jnp.zeros((1, Cp), f32).at[0, :C].set(b1)

    # value_embed 1x1 conv (BN2 scale folded) fused column-wise with the x-half
    # of attention conv1 (BN3 scale folded): one 2*128-wide MXU RHS.
    wval = params['wval'][:, :, 0, 0].astype(f32).T * s2[None, :]     # (Cin, Cout)
    watt1 = params['watt1'][:, :, 0, 0].astype(f32).T                 # (2C, Cm)
    w1k = watt1[:C] * s3[None, :]
    w1x = watt1[C:] * s3[None, :]
    wvx_p = (jnp.zeros((Cp, Cp + Cmp), f32)
             .at[:C, :C].set(wval)
             .at[:C, Cp:Cp + Cm].set(w1x)).astype(bf16)
    b2_p = jnp.zeros((1, Cp), f32).at[0, :C].set(b2)
    w1k_p = jnp.zeros((Cp, Cmp), f32).at[:C, :Cm].set(w1k).astype(bf16)
    b3_p = jnp.zeros((1, Cmp), f32).at[0, :Cm].set(b3)

    # attention conv2 with the mean over the KK taps folded in
    # (the mean commutes with the final 1x1 conv).
    watt2 = params['watt2'][:, :, 0, 0].astype(f32).T                 # (Cm, KK*C)
    watt2_avg = watt2.reshape(Cm, C, KK).mean(-1)                     # (Cm, C)
    batt2_avg = params['batt2'].astype(f32).reshape(C, KK).mean(-1)
    w2_p = jnp.zeros((Cmp, Cp), f32).at[:Cm, :C].set(watt2_avg).astype(bf16)
    b4_p = jnp.zeros((1, Cp), f32).at[0, :C].set(batt2_avg)

    return dict(wkey=wkey_p, b1=b1_p, wvx=wvx_p, b2=b2_p,
                w1k=w1k_p, b3=b3_p, w2=w2_p, b4=b4_p)


def _pick_tb(bs, per_b_bytes, budget_bytes):
    """Largest batch block that (a) keeps >=2 grid steps so the batch axis can
    shard across v7x's two TensorCores, and (b) fits the VMEM budget."""
    tb = 1
    for d in range(1, bs + 1):
        if bs % d:
            continue
        if bs >= 2 and bs // d < 2:
            continue
        if d * per_b_bytes > budget_bytes:
            continue
        tb = d
    return tb


@functools.partial(jax.jit, static_argnames=("kernel_size",))
def cot_attention_pallas(x_nchw, packed, kernel_size=3):
    f32, bf16 = jnp.float32, jnp.bfloat16
    bs, C, H, W = x_nchw.shape
    K = kernel_size
    KK = K * K
    pad = K // 2
    HW = H * W
    Hp, Wp = H + 2 * pad, W + 2 * pad
    Cp = packed['b1'].shape[1]
    Cmp = packed['b3'].shape[1]

    # ---- wrapper-side prep: cast to bf16 FIRST, then halo + channel pad (no im2col).
    x_nhwc = jnp.transpose(x_nchw, (0, 2, 3, 1)).astype(bf16)
    x_p = jnp.pad(x_nhwc, ((0, 0), (pad, pad), (pad, pad), (0, Cp - C)))

    # ---- batch blocking / explicit VMEM sizing (re-derived per generation shapes).
    weights_bytes = sum(int(v.size) * v.dtype.itemsize for v in packed.values())
    in_pb = Hp * Wp * Cp * 2                              # bf16 halo slab / batch elem
    out_pb = HW * Cp * 2                                  # bf16 output / batch elem
    interm_pb = HW * (4 * Cp + (Cp + Cmp) + 2 * Cmp) * 4  # rough live f32 intermediates
    per_b = 2 * in_pb + 2 * out_pb + interm_pb            # double-buffered in/out
    TB = _pick_tb(bs, per_b, (40 << 20) - weights_bytes)
    vmem_limit = int(min(max(weights_bytes + TB * per_b + (4 << 20), 32 << 20),
                         48 << 20))

    kernel = _make_kernel(TB, H, W, Cp, Cmp, K)

    def wspec(shape):
        zeros = (0,) * len(shape)
        return pl.BlockSpec(shape, lambda b, _z=zeros: _z)
    # NOTE: the constant-index_map weight inputs could additionally be
    # single-buffered (pipeline_mode=pl.Buffered(1)) to halve their VMEM
    # footprint at production channel counts.

    flops_per_row = 2 * (KK * Cp * Cp + Cp * (Cp + Cmp) + Cp * Cmp + Cmp * Cp)
    cost = pl.CostEstimate(
        flops=int(bs * HW * flops_per_row),
        transcendentals=int(bs * HW * Cp),
        bytes_accessed=int(x_p.size * 2 + weights_bytes + bs * HW * Cp * 2),
    )

    out = pl.pallas_call(
        kernel,
        out_shape=jax.ShapeDtypeStruct((bs, HW, Cp), bf16),
        grid=(bs // TB,),
        in_specs=[
            pl.BlockSpec((TB, Hp, Wp, Cp), lambda b: (b, 0, 0, 0)),
            wspec((KK, Cp, Cp)),
            wspec((1, Cp)),
            wspec((Cp, Cp + Cmp)),
            wspec((1, Cp)),
            wspec((Cp, Cmp)),
            wspec((1, Cmp)),
            wspec((Cmp, Cp)),
            wspec((1, Cp)),
        ],
        out_specs=pl.BlockSpec((TB, HW, Cp), lambda b: (b, 0, 0)),
        compiler_params=pltpu.CompilerParams(
            dimension_semantics=("parallel",),
            vmem_limit_bytes=vmem_limit),
        cost_estimate=cost,
    )(x_p, packed['wkey'], packed['b1'], packed['wvx'], packed['b2'],
      packed['w1k'], packed['b3'], packed['w2'], packed['b4'])

    out = out.reshape(bs, H, W, Cp)[:, :, :, :C]           # bf16 slice / transpose
    return jnp.transpose(out, (0, 3, 1, 2)).astype(f32)    # NCHW, f32 at the end


def cot_attention_reference(x, params, kernel_size=3):
    """Pure-JAX f32 reference mirroring the PyTorch forward (inference-mode BN)."""
    bs, C, H, W = x.shape
    K = kernel_size
    eps = 1e-5

    def bn(z, p):
        gamma, beta, mean, var = p
        inv = gamma / jnp.sqrt(var + eps)
        return z * inv[None, :, None, None] + (beta - mean * inv)[None, :, None, None]

    dn = ('NCHW', 'OIHW', 'NCHW')
    k1 = jax.lax.conv_general_dilated(
        x, params['wkey'], (1, 1), [(K // 2, K // 2)] * 2,
        dimension_numbers=dn, feature_group_count=4)
    k1 = jnp.maximum(bn(k1, params['bn1']), 0.0)

    v = jax.lax.conv_general_dilated(
        x, params['wval'], (1, 1), [(0, 0)] * 2, dimension_numbers=dn)
    v = bn(v, params['bn2']).reshape(bs, C, -1)

    y = jnp.concatenate([k1, x], axis=1)
    a = jax.lax.conv_general_dilated(
        y, params['watt1'], (1, 1), [(0, 0)] * 2, dimension_numbers=dn)
    a = jnp.maximum(bn(a, params['bn3']), 0.0)
    a = jax.lax.conv_general_dilated(
        a, params['watt2'], (1, 1), [(0, 0)] * 2,
        dimension_numbers=dn) + params['batt2'][None, :, None, None]
    a = a.reshape(bs, C, K * K, H, W).mean(2).reshape(bs, C, -1)
    k2 = (jax.nn.softmax(a, axis=-1) * v).reshape(bs, C, H, W)
    return k1 + k2


if __name__ == "__main__":
    bs, C, H, W = 4, 64, 8, 8        # small shapes; C divisible by groups=4
    K = 3
    groups = 4
    Cg = C // groups
    Cm = 2 * C // 4

    ks = jax.random.split(jax.random.PRNGKey(0), 16)
    params = {
        'wkey': jax.random.normal(ks[0], (C, Cg, K, K), jnp.float32) * 0.1,
        'bn1': (1.0 + 0.1 * jax.random.normal(ks[1], (C,)),
                0.1 * jax.random.normal(ks[2], (C,)),
                0.1 * jax.random.normal(ks[3], (C,)),
                0.5 + jax.random.uniform(ks[4], (C,))),
        'wval': jax.random.normal(ks[5], (C, C, 1, 1), jnp.float32) * 0.1,
        'bn2': (1.0 + 0.1 * jax.random.normal(ks[6], (C,)),
                0.1 * jax.random.normal(ks[7], (C,)),
                0.1 * jax.random.normal(ks[8], (C,)),
                0.5 + jax.random.uniform(ks[9], (C,))),
        'watt1': jax.random.normal(ks[10], (Cm, 2 * C, 1, 1), jnp.float32) * 0.1,
        'bn3': (1.0 + 0.1 * jax.random.normal(ks[11], (Cm,)),
                0.1 * jax.random.normal(ks[12], (Cm,)),
                0.1 * jax.random.normal(ks[13], (Cm,)),
                0.5 + jax.random.uniform(ks[14], (Cm,))),
        'watt2': jax.random.normal(ks[15], (K * K * C, Cm, 1, 1), jnp.float32) * 0.1,
        'batt2': 0.1 * jax.random.normal(jax.random.PRNGKey(1), (K * K * C,)),
    }

    x = jax.random.normal(jax.random.PRNGKey(2), (bs, C, H, W), jnp.float32)

    packed = pack_cot_params(params, kernel_size=K, groups=groups)  # one-time packing
    out = jax.block_until_ready(cot_attention_pallas(x, packed, kernel_size=K))
    ref = jax.block_until_ready(cot_attention_reference(x, params, kernel_size=K))

    assert out.shape == ref.shape == (bs, C, H, W)
    # Tolerance reflects bf16 MXU operands / bf16 output (f32 accumulation & math).
    max_err = float(jnp.max(jnp.abs(out - ref)))
    assert max_err < 5e-2, f"max abs error too large: {max_err}"
    print("KERNEL_OK")
</pallas_src>

<mosaic_0001>
module attributes {stable_mosaic.version = 11 : i64} {
  func.func @kernel(%arg0: i32, %arg1: memref<2x10x10x128xbf16, #tpu.memory_space<vmem>>, %arg2: memref<9x128x128xbf16, #tpu.memory_space<vmem>>, %arg3: memref<1x128xf32, #tpu.memory_space<vmem>>, %arg4: memref<128x256xbf16, #tpu.memory_space<vmem>>, %arg5: memref<1x128xf32, #tpu.memory_space<vmem>>, %arg6: memref<128x128xbf16, #tpu.memory_space<vmem>>, %arg7: memref<1x128xf32, #tpu.memory_space<vmem>>, %arg8: memref<128x128xbf16, #tpu.memory_space<vmem>>, %arg9: memref<1x128xf32, #tpu.memory_space<vmem>>, %arg10: memref<2x64x128xbf16, #tpu.memory_space<vmem>>) attributes {dimension_semantics = [#tpu.dimension_semantics<parallel>], iteration_bounds = array<i64: 2>, scalar_prefetch = 0 : i64, scratch_operands = 0 : i64, tpu.core_type = #tpu.core_type<tc>, window_params = [{transform_indices = @transform_0, window_bounds = array<i64: 2, 10, 10, 128>}, {pipeline_mode = #tpu.pipeline_mode<synchronous>, transform_indices = @transform_1, window_bounds = array<i64: 9, 128, 128>}, {pipeline_mode = #tpu.pipeline_mode<synchronous>, transform_indices = @transform_2, window_bounds = array<i64: 1, 128>}, {pipeline_mode = #tpu.pipeline_mode<synchronous>, transform_indices = @transform_3, window_bounds = array<i64: 128, 256>}, {pipeline_mode = #tpu.pipeline_mode<synchronous>, transform_indices = @transform_4, window_bounds = array<i64: 1, 128>}, {pipeline_mode = #tpu.pipeline_mode<synchronous>, transform_indices = @transform_5, window_bounds = array<i64: 128, 128>}, {pipeline_mode = #tpu.pipeline_mode<synchronous>, transform_indices = @transform_6, window_bounds = array<i64: 1, 128>}, {pipeline_mode = #tpu.pipeline_mode<synchronous>, transform_indices = @transform_7, window_bounds = array<i64: 128, 128>}, {pipeline_mode = #tpu.pipeline_mode<synchronous>, transform_indices = @transform_8, window_bounds = array<i64: 1, 128>}, {transform_indices = @transform_9, window_bounds = array<i64: 2, 64, 128>}]} {
    %c0 = arith.constant 0 : index
    %c1 = arith.constant 1 : index
    %c1_0 = arith.constant 1 : index
    %c0_1 = arith.constant 0 : index
    %0 = vector.load %arg1[%c0, %c1, %c1_0, %c0_1] : memref<2x10x10x128xbf16, #tpu.memory_space<vmem>>, vector<2x8x8x128xbf16>
    %1 = vector.shape_cast %0 : vector<2x8x8x128xbf16> to vector<128x128xbf16>
    %c0_2 = arith.constant 0 : index
    %c0_3 = arith.constant 0 : index
    %c0_4 = arith.constant 0 : index
    %c0_5 = arith.constant 0 : index
    %2 = vector.load %arg1[%c0_2, %c0_3, %c0_4, %c0_5] : memref<2x10x10x128xbf16, #tpu.memory_space<vmem>>, vector<2x8x8x128xbf16>
    %3 = vector.shape_cast %2 : vector<2x8x8x128xbf16> to vector<128x128xbf16>
    %c0_6 = arith.constant 0 : index
    %c0_7 = arith.constant 0 : index
    %c0_8 = arith.constant 0 : index
    %4 = vector.load %arg2[%c0_6, %c0_7, %c0_8] : memref<9x128x128xbf16, #tpu.memory_space<vmem>>, vector<1x128x128xbf16>
    %5 = vector.shape_cast %4 : vector<1x128x128xbf16> to vector<128x128xbf16>
    %cst = arith.constant dense<0.000000e+00> : vector<128x128xf32>
    %6 = tpu.matmul %3, %5, %cst {dimension_numbers = #tpu.dot_dimension_numbers<[1], [0], [0], [1], [0, 0, 1, 1], [], []>} : vector<128x128xbf16>, vector<128x128xbf16>, vector<128x128xf32> -> vector<128x128xf32>
    %c0_9 = arith.constant 0 : index
    %c0_10 = arith.constant 0 : index
    %c1_11 = arith.constant 1 : index
    %c0_12 = arith.constant 0 : index
    %7 = vector.load %arg1[%c0_9, %c0_10, %c1_11, %c0_12] : memref<2x10x10x128xbf16, #tpu.memory_space<vmem>>, vector<2x8x8x128xbf16>
    %8 = vector.shape_cast %7 : vector<2x8x8x128xbf16> to vector<128x128xbf16>
    %c1_13 = arith.constant 1 : index
    %c0_14 = arith.constant 0 : index
    %c0_15 = arith.constant 0 : index
    %9 = vector.load %arg2[%c1_13, %c0_14, %c0_15] : memref<9x128x128xbf16, #tpu.memory_space<vmem>>, vector<1x128x128xbf16>
    %10 = vector.shape_cast %9 : vector<1x128x128xbf16> to vector<128x128xbf16>
    %cst_16 = arith.constant dense<0.000000e+00> : vector<128x128xf32>
    %11 = tpu.matmul %8, %10, %cst_16 {dimension_numbers = #tpu.dot_dimension_numbers<[1], [0], [0], [1], [0, 0, 1, 1], [], []>} : vector<128x128xbf16>, vector<128x128xbf16>, vector<128x128xf32> -> vector<128x128xf32>
    %12 = arith.addf %6, %11 : vector<128x128xf32>
    %c0_17 = arith.constant 0 : index
    %c0_18 = arith.constant 0 : index
    %c2 = arith.constant 2 : index
    %c0_19 = arith.constant 0 : index
    %13 = vector.load %arg1[%c0_17, %c0_18, %c2, %c0_19] : memref<2x10x10x128xbf16, #tpu.memory_space<vmem>>, vector<2x8x8x128xbf16>
    %14 = vector.shape_cast %13 : vector<2x8x8x128xbf16> to vector<128x128xbf16>
    %c2_20 = arith.constant 2 : index
    %c0_21 = arith.constant 0 : index
    %c0_22 = arith.constant 0 : index
    %15 = vector.load %arg2[%c2_20, %c0_21, %c0_22] : memref<9x128x128xbf16, #tpu.memory_space<vmem>>, vector<1x128x128xbf16>
    %16 = vector.shape_cast %15 : vector<1x128x128xbf16> to vector<128x128xbf16>
    %cst_23 = arith.constant dense<0.000000e+00> : vector<128x128xf32>
    %17 = tpu.matmul %14, %16, %cst_23 {dimension_numbers = #tpu.dot_dimension_numbers<[1], [0], [0], [1], [0, 0, 1, 1], [], []>} : vector<128x128xbf16>, vector<128x128xbf16>, vector<128x128xf32> -> vector<128x128xf32>
    %18 = arith.addf %12, %17 : vector<128x128xf32>
    %c0_24 = arith.constant 0 : index
    %c1_25 = arith.constant 1 : index
    %c0_26 = arith.constant 0 : index
    %c0_27 = arith.constant 0 : index
    %19 = vector.load %arg1[%c0_24, %c1_25, %c0_26, %c0_27] : memref<2x10x10x128xbf16, #tpu.memory_space<vmem>>, vector<2x8x8x128xbf16>
    %20 = vector.shape_cast %19 : vector<2x8x8x128xbf16> to vector<128x128xbf16>
    %c3 = arith.constant 3 : index
    %c0_28 = arith.constant 0 : index
    %c0_29 = arith.constant 0 : index
    %21 = vector.load %arg2[%c3, %c0_28, %c0_29] : memref<9x128x128xbf16, #tpu.memory_space<vmem>>, vector<1x128x128xbf16>
    %22 = vector.shape_cast %21 : vector<1x128x128xbf16> to vector<128x128xbf16>
    %cst_30 = arith.constant dense<0.000000e+00> : vector<128x128xf32>
    %23 = tpu.matmul %20, %22, %cst_30 {dimension_numbers = #tpu.dot_dimension_numbers<[1], [0], [0], [1], [0, 0, 1, 1], [], []>} : vector<128x128xbf16>, vector<128x128xbf16>, vector<128x128xf32> -> vector<128x128xf32>
    %24 = arith.addf %18, %23 : vector<128x128xf32>
    %c0_31 = arith.constant 0 : index
    %c1_32 = arith.constant 1 : index
    %c1_33 = arith.constant 1 : index
    %c0_34 = arith.constant 0 : index
    %25 = vector.load %arg1[%c0_31, %c1_32, %c1_33, %c0_34] : memref<2x10x10x128xbf16, #tpu.memory_space<vmem>>, vector<2x8x8x128xbf16>
    %26 = vector.shape_cast %25 : vector<2x8x8x128xbf16> to vector<128x128xbf16>
    %c4 = arith.constant 4 : index
    %c0_35 = arith.constant 0 : index
    %c0_36 = arith.constant 0 : index
    %27 = vector.load %arg2[%c4, %c0_35, %c0_36] : memref<9x128x128xbf16, #tpu.memory_space<vmem>>, vector<1x128x128xbf16>
    %28 = vector.shape_cast %27 : vector<1x128x128xbf16> to vector<128x128xbf16>
    %cst_37 = arith.constant dense<0.000000e+00> : vector<128x128xf32>
    %29 = tpu.matmul %26, %28, %cst_37 {dimension_numbers = #tpu.dot_dimension_numbers<[1], [0], [0], [1], [0, 0, 1, 1], [], []>} : vector<128x128xbf16>, vector<128x128xbf16>, vector<128x128xf32> -> vector<128x128xf32>
    %30 = arith.addf %24, %29 : vector<128x128xf32>
    %c0_38 = arith.constant 0 : index
    %c1_39 = arith.constant 1 : index
    %c2_40 = arith.constant 2 : index
    %c0_41 = arith.constant 0 : index
    %31 = vector.load %arg1[%c0_38, %c1_39, %c2_40, %c0_41] : memref<2x10x10x128xbf16, #tpu.memory_space<vmem>>, vector<2x8x8x128xbf16>
    %32 = vector.shape_cast %31 : vector<2x8x8x128xbf16> to vector<128x128xbf16>
    %c5 = arith.constant 5 : index
    %c0_42 = arith.constant 0 : index
    %c0_43 = arith.constant 0 : index
    %33 = vector.load %arg2[%c5, %c0_42, %c0_43] : memref<9x128x128xbf16, #tpu.memory_space<vmem>>, vector<1x128x128xbf16>
    %34 = vector.shape_cast %33 : vector<1x128x128xbf16> to vector<128x128xbf16>
    %cst_44 = arith.constant dense<0.000000e+00> : vector<128x128xf32>
    %35 = tpu.matmul %32, %34, %cst_44 {dimension_numbers = #tpu.dot_dimension_numbers<[1], [0], [0], [1], [0, 0, 1, 1], [], []>} : vector<128x128xbf16>, vector<128x128xbf16>, vector<128x128xf32> -> vector<128x128xf32>
    %36 = arith.addf %30, %35 : vector<128x128xf32>
    %c0_45 = arith.constant 0 : index
    %c2_46 = arith.constant 2 : index
    %c0_47 = arith.constant 0 : index
    %c0_48 = arith.constant 0 : index
    %37 = vector.load %arg1[%c0_45, %c2_46, %c0_47, %c0_48] : memref<2x10x10x128xbf16, #tpu.memory_space<vmem>>, vector<2x8x8x128xbf16>
    %38 = vector.shape_cast %37 : vector<2x8x8x128xbf16> to vector<128x128xbf16>
    %c6 = arith.constant 6 : index
    %c0_49 = arith.constant 0 : index
    %c0_50 = arith.constant 0 : index
    %39 = vector.load %arg2[%c6, %c0_49, %c0_50] : memref<9x128x128xbf16, #tpu.memory_space<vmem>>, vector<1x128x128xbf16>
    %40 = vector.shape_cast %39 : vector<1x128x128xbf16> to vector<128x128xbf16>
    %cst_51 = arith.constant dense<0.000000e+00> : vector<128x128xf32>
    %41 = tpu.matmul %38, %40, %cst_51 {dimension_numbers = #tpu.dot_dimension_numbers<[1], [0], [0], [1], [0, 0, 1, 1], [], []>} : vector<128x128xbf16>, vector<128x128xbf16>, vector<128x128xf32> -> vector<128x128xf32>
    %42 = arith.addf %36, %41 : vector<128x128xf32>
    %c0_52 = arith.constant 0 : index
    %c2_53 = arith.constant 2 : index
    %c1_54 = arith.constant 1 : index
    %c0_55 = arith.constant 0 : index
    %43 = vector.load %arg1[%c0_52, %c2_53, %c1_54, %c0_55] : memref<2x10x10x128xbf16, #tpu.memory_space<vmem>>, vector<2x8x8x128xbf16>
    %44 = vector.shape_cast %43 : vector<2x8x8x128xbf16> to vector<128x128xbf16>
    %c7 = arith.constant 7 : index
    %c0_56 = arith.constant 0 : index
    %c0_57 = arith.constant 0 : index
    %45 = vector.load %arg2[%c7, %c0_56, %c0_57] : memref<9x128x128xbf16, #tpu.memory_space<vmem>>, vector<1x128x128xbf16>
    %46 = vector.shape_cast %45 : vector<1x128x128xbf16> to vector<128x128xbf16>
    %cst_58 = arith.constant dense<0.000000e+00> : vector<128x128xf32>
    %47 = tpu.matmul %44, %46, %cst_58 {dimension_numbers = #tpu.dot_dimension_numbers<[1], [0], [0], [1], [0, 0, 1, 1], [], []>} : vector<128x128xbf16>, vector<128x128xbf16>, vector<128x128xf32> -> vector<128x128xf32>
    %48 = arith.addf %42, %47 : vector<128x128xf32>
    %c0_59 = arith.constant 0 : index
    %c2_60 = arith.constant 2 : index
    %c2_61 = arith.constant 2 : index
    %c0_62 = arith.constant 0 : index
    %49 = vector.load %arg1[%c0_59, %c2_60, %c2_61, %c0_62] : memref<2x10x10x128xbf16, #tpu.memory_space<vmem>>, vector<2x8x8x128xbf16>
    %50 = vector.shape_cast %49 : vector<2x8x8x128xbf16> to vector<128x128xbf16>
    %c8 = arith.constant 8 : index
    %c0_63 = arith.constant 0 : index
    %c0_64 = arith.constant 0 : index
    %51 = vector.load %arg2[%c8, %c0_63, %c0_64] : memref<9x128x128xbf16, #tpu.memory_space<vmem>>, vector<1x128x128xbf16>
    %52 = vector.shape_cast %51 : vector<1x128x128xbf16> to vector<128x128xbf16>
    %cst_65 = arith.constant dense<0.000000e+00> : vector<128x128xf32>
    %53 = tpu.matmul %50, %52, %cst_65 {dimension_numbers = #tpu.dot_dimension_numbers<[1], [0], [0], [1], [0, 0, 1, 1], [], []>} : vector<128x128xbf16>, vector<128x128xbf16>, vector<128x128xf32> -> vector<128x128xf32>
    %54 = arith.addf %48, %53 : vector<128x128xf32>
    %c0_66 = arith.constant 0 : index
    %c0_67 = arith.constant 0 : index
    %55 = vector.load %arg3[%c0_66, %c0_67] : memref<1x128xf32, #tpu.memory_space<vmem>>, vector<1x128xf32>
    %56 = vector.broadcast %55 : vector<1x128xf32> to vector<128x128xf32>
    %57 = arith.addf %54, %56 : vector<128x128xf32>
    %cst_68 = arith.constant 0.000000e+00 : f32
    %58 = vector.broadcast %cst_68 : f32 to vector<128x128xf32>
    %59 = arith.maximumf %57, %58 : vector<128x128xf32>
    %c0_69 = arith.constant 0 : index
    %c0_70 = arith.constant 0 : index
    %60 = vector.load %arg4[%c0_69, %c0_70] : memref<128x256xbf16, #tpu.memory_space<vmem>>, vector<128x256xbf16>
    %cst_71 = arith.constant dense<0.000000e+00> : vector<128x256xf32>
    %61 = tpu.matmul %1, %60, %cst_71 {dimension_numbers = #tpu.dot_dimension_numbers<[1], [0], [0], [1], [0, 0, 1, 1], [], []>} : vector<128x128xbf16>, vector<128x256xbf16>, vector<128x256xf32> -> vector<128x256xf32>
    %62 = vector.extract_strided_slice %61 {offsets = [0, 0], sizes = [128, 128], strides = [1, 1]} : vector<128x256xf32> to vector<128x128xf32>
    %c0_72 = arith.constant 0 : index
    %c0_73 = arith.constant 0 : index
    %63 = vector.load %arg5[%c0_72, %c0_73] : memref<1x128xf32, #tpu.memory_space<vmem>>, vector<1x128xf32>
    %64 = vector.broadcast %63 : vector<1x128xf32> to vector<128x128xf32>
    %65 = arith.addf %62, %64 : vector<128x128xf32>
    %66 = vector.extract_strided_slice %61 {offsets = [0, 128], sizes = [128, 128], strides = [1, 1]} : vector<128x256xf32> to vector<128x128xf32>
    %67 = arith.truncf %59 : vector<128x128xf32> to vector<128x128xbf16>
    %c0_74 = arith.constant 0 : index
    %c0_75 = arith.constant 0 : index
    %68 = vector.load %arg6[%c0_74, %c0_75] : memref<128x128xbf16, #tpu.memory_space<vmem>>, vector<128x128xbf16>
    %cst_76 = arith.constant dense<0.000000e+00> : vector<128x128xf32>
    %69 = tpu.matmul %67, %68, %cst_76 {dimension_numbers = #tpu.dot_dimension_numbers<[1], [0], [0], [1], [0, 0, 1, 1], [], []>} : vector<128x128xbf16>, vector<128x128xbf16>, vector<128x128xf32> -> vector<128x128xf32>
    %70 = arith.addf %66, %69 : vector<128x128xf32>
    %c0_77 = arith.constant 0 : index
    %c0_78 = arith.constant 0 : index
    %71 = vector.load %arg7[%c0_77, %c0_78] : memref<1x128xf32, #tpu.memory_space<vmem>>, vector<1x128xf32>
    %72 = vector.broadcast %71 : vector<1x128xf32> to vector<128x128xf32>
    %73 = arith.addf %70, %72 : vector<128x128xf32>
    %cst_79 = arith.constant 0.000000e+00 : f32
    %74 = vector.broadcast %cst_79 : f32 to vector<128x128xf32>
    %75 = arith.maximumf %73, %74 : vector<128x128xf32>
    %76 = arith.truncf %75 : vector<128x128xf32> to vector<128x128xbf16>
    %c0_80 = arith.constant 0 : index
    %c0_81 = arith.constant 0 : index
    %77 = vector.load %arg8[%c0_80, %c0_81] : memref<128x128xbf16, #tpu.memory_space<vmem>>, vector<128x128xbf16>
    %cst_82 = arith.constant dense<0.000000e+00> : vector<128x128xf32>
    %78 = tpu.matmul %76, %77, %cst_82 {dimension_numbers = #tpu.dot_dimension_numbers<[1], [0], [0], [1], [0, 0, 1, 1], [], []>} : vector<128x128xbf16>, vector<128x128xbf16>, vector<128x128xf32> -> vector<128x128xf32>
    %c0_83 = arith.constant 0 : index
    %c0_84 = arith.constant 0 : index
    %79 = vector.load %arg9[%c0_83, %c0_84] : memref<1x128xf32, #tpu.memory_space<vmem>>, vector<1x128xf32>
    %80 = vector.broadcast %79 : vector<1x128xf32> to vector<128x128xf32>
    %81 = arith.addf %78, %80 : vector<128x128xf32>
    %82 = vector.shape_cast %81 : vector<128x128xf32> to vector<2x64x128xf32>
    %cst_85 = arith.constant dense<0xFF800000> : vector<2x128xf32>
    %83 = vector.multi_reduction <maximumf>, %82, %cst_85 [1] : vector<2x64x128xf32> to vector<2x128xf32>
    %84 = vector.shape_cast %83 : vector<2x128xf32> to vector<2x1x128xf32>
    %85 = vector.broadcast %84 : vector<2x1x128xf32> to vector<2x64x128xf32>
    %86 = arith.subf %82, %85 : vector<2x64x128xf32>
    %87 = math.exp %86 : vector<2x64x128xf32>
    %cst_86 = arith.constant dense<0.000000e+00> : vector<2x128xf32>
    %88 = vector.multi_reduction <add>, %87, %cst_86 [1] : vector<2x64x128xf32> to vector<2x128xf32>
    %89 = vector.shape_cast %88 : vector<2x128xf32> to vector<2x1x128xf32>
    %90 = tpu.reciprocal %89 {approx = true} : vector<2x1x128xf32> -> vector<2x1x128xf32>
    %91 = vector.broadcast %90 : vector<2x1x128xf32> to vector<2x64x128xf32>
    %92 = arith.mulf %87, %91 : vector<2x64x128xf32>
    %93 = vector.shape_cast %65 : vector<128x128xf32> to vector<2x64x128xf32>
    %94 = arith.mulf %92, %93 : vector<2x64x128xf32>
    %95 = vector.shape_cast %59 : vector<128x128xf32> to vector<2x64x128xf32>
    %96 = arith.addf %95, %94 : vector<2x64x128xf32>
    %97 = arith.truncf %96 : vector<2x64x128xf32> to vector<2x64x128xbf16>
    %c0_87 = arith.constant 0 : index
    %c0_88 = arith.constant 0 : index
    %c0_89 = arith.constant 0 : index
    %98 = vector.load %arg10[%c0_87, %c0_88, %c0_89] : memref<2x64x128xbf16, #tpu.memory_space<vmem>>, vector<2x64x128xbf16>
    tpu.vector_store %arg10[%c0_87, %c0_88, %c0_89], %97 {strides = array<i32>} : memref<2x64x128xbf16, #tpu.memory_space<vmem>>, vector<2x64x128xbf16>,
    return
  }
  func.func @transform_0(%arg0: i32) -> (i32, i32, i32, i32) {
    %c0_i32 = arith.constant 0 : i32
    %c0_i32_0 = arith.constant 0 : i32
    %c0_i32_1 = arith.constant 0 : i32
    %c0_i32_2 = arith.constant 0 : i32
    return %arg0, %c0_i32, %c0_i32_0, %c0_i32_1 : i32, i32, i32, i32
  }
  func.func @transform_1(%arg0: i32) -> (i32, i32, i32) {
    %c0_i32 = arith.constant 0 : i32
    %c0_i32_0 = arith.constant 0 : i32
    %c0_i32_1 = arith.constant 0 : i32
    %c0_i32_2 = arith.constant 0 : i32
    return %c0_i32, %c0_i32_0, %c0_i32_1 : i32, i32, i32
  }
  func.func @transform_2(%arg0: i32) -> (i32, i32) {
    %c0_i32 = arith.constant 0 : i32
    %c0_i32_0 = arith.constant 0 : i32
    %c0_i32_1 = arith.constant 0 : i32
    return %c0_i32, %c0_i32_0 : i32, i32
  }
  func.func @transform_3(%arg0: i32) -> (i32, i32) {
    %c0_i32 = arith.constant 0 : i32
    %c0_i32_0 = arith.constant 0 : i32
    %c0_i32_1 = arith.constant 0 : i32
    return %c0_i32, %c0_i32_0 : i32, i32
  }
  func.func @transform_4(%arg0: i32) -> (i32, i32) {
    %c0_i32 = arith.constant 0 : i32
    %c0_i32_0 = arith.constant 0 : i32
    %c0_i32_1 = arith.constant 0 : i32
    return %c0_i32, %c0_i32_0 : i32, i32
  }
  func.func @transform_5(%arg0: i32) -> (i32, i32) {
    %c0_i32 = arith.constant 0 : i32
    %c0_i32_0 = arith.constant 0 : i32
    %c0_i32_1 = arith.constant 0 : i32
    return %c0_i32, %c0_i32_0 : i32, i32
  }
  func.func @transform_6(%arg0: i32) -> (i32, i32) {
    %c0_i32 = arith.constant 0 : i32
    %c0_i32_0 = arith.constant 0 : i32
    %c0_i32_1 = arith.constant 0 : i32
    return %c0_i32, %c0_i32_0 : i32, i32
  }
  func.func @transform_7(%arg0: i32) -> (i32, i32) {
    %c0_i32 = arith.constant 0 : i32
    %c0_i32_0 = arith.constant 0 : i32
    %c0_i32_1 = arith.constant 0 : i32
    return %c0_i32, %c0_i32_0 : i32, i32
  }
  func.func @transform_8(%arg0: i32) -> (i32, i32) {
    %c0_i32 = arith.constant 0 : i32
    %c0_i32_0 = arith.constant 0 : i32
    %c0_i32_1 = arith.constant 0 : i32
    return %c0_i32, %c0_i32_0 : i32, i32
  }
  func.func @transform_9(%arg0: i32) -> (i32, i32, i32) {
    %c0_i32 = arith.constant 0 : i32
    %c0_i32_0 = arith.constant 0 : i32
    %c0_i32_1 = arith.constant 0 : i32
    return %arg0, %c0_i32, %c0_i32_0 : i32, i32, i32
  }
}

</mosaic_0001>

<llo_original>
// kernel: cot_attention_pallas.1
$region0: #{cot_attention_pallas.1}
  #allocation0 [shape = 'u32[]', space=smem, size = 0x4, offset = 0x4, fixed_abs, tag = 'smem constant byte address 0x4 - core index']
  #allocation1 [shape = 'u32[144,128]{1,0:T(1,128)}', space=vmem, size = 0x12000, scoped, tag = 'internal scratch']
  %s0 = inlined_call_operand.vmem [shape: bf16[4,10,10,128], index: 0, kind: input, shape index: {}]
  %s1 = inlined_call_operand.vmem [shape: bf16[9,128,128], index: 1, kind: input, shape index: {}]
  %s2 = inlined_call_operand.vmem [shape: f32[1,128], index: 2, kind: input, shape index: {}]
  %s3 = inlined_call_operand.vmem [shape: bf16[128,256], index: 3, kind: input, shape index: {}]
  %s4 = inlined_call_operand.vmem [shape: f32[1,128], index: 4, kind: input, shape index: {}]
  %s5 = inlined_call_operand.vmem [shape: bf16[128,128], index: 5, kind: input, shape index: {}]
  %s6 = inlined_call_operand.vmem [shape: f32[1,128], index: 6, kind: input, shape index: {}]
  %s7 = inlined_call_operand.vmem [shape: bf16[128,128], index: 7, kind: input, shape index: {}]
  %s8 = inlined_call_operand.vmem [shape: f32[1,128], index: 8, kind: input, shape index: {}]
  %s9 = inlined_call_operand.vmem [shape: bf16[4,64,128], index: 9, kind: output, shape index: {}]
  %s10 = sld [smem:[#allocation0]]
  $region69: #{cot_attention_pallas.1} parent=0
    _
  %s12 = ssub.s32 1, %s10
  %s13 = scalar_select 0, %s12, %s10
  loop: start=0, step=1, limit=4
  $region2: #{cot_attention_pallas.1} parent=0 // loop_pre_header
    _
  $region3: #{cot_attention_pallas.1} parent=0 // loop_header
    %s15 = sphi 0, %s19
    %p16 = scmp.ge.s32.totalorder %s15, 4
    %s25 = sphi 0, %s27
    %s28 = sphi 0, %s25
    %s29 = sphi 0, %s28
    %s45 = sphi 0, %s29
    %s49 = sphi 0, %s49
    %s51 = sphi 0, %s49
    %s52 = sphi 0, %s51
    %s66 = sphi 0, %s52
    %s70 = sphi 0, %s70
    %s72 = sphi 0, %s70
    %s73 = sphi 0, %s72
    %s87 = sphi 0, %s73
    %s91 = sphi 0, %s91
    %s93 = sphi 0, %s91
    %s94 = sphi 0, %s93
    %s108 = sphi 0, %s94
    %s112 = sphi 0, %s112
    %s114 = sphi 0, %s112
    %s115 = sphi 0, %s114
    %s129 = sphi 0, %s115
    %s133 = sphi 0, %s133
    %s135 = sphi 0, %s133
    %s136 = sphi 0, %s135
    %s150 = sphi 0, %s136
    %s154 = sphi 0, %s154
    %s156 = sphi 0, %s154
    %s157 = sphi 0, %s156
    %s171 = sphi 0, %s157
    %s175 = sphi 0, %s175
    %s177 = sphi 0, %s175
    %s178 = sphi 0, %s177
    %s192 = sphi 0, %s178
    %s196 = sphi 0, %s196
    %s198 = sphi 0, %s196
    %s199 = sphi 0, %s198
    %s213 = sphi 0, %s199
    %s219 = sphi 0, %s221
    %s222 = sphi 0, %s219
    %s223 = sphi 0, %s222
    %s239 = sphi 0, %s223
  $region4: #{cot_attention_pallas.1} parent=0 // loop_header_branch
    %18 = sbr.rel (%p16) target = $region8
  $region5: #{cot_attention_pallas.1} parent=0 // loop_body
    %s20 = ssub.s32 %s15, 1
    %s21 = ssub.s32 %s15, 2
    %s22 = sadd.s32 %s15, 1
    %s23 = ssub.s32 %s15, %s22
    %p24 = scmp.eq.s32.totalorder %s23, 0
    %s26 = sadd.s32 %s25, 1
    %s27 = scalar_select %p24, %s25, %s26
    %p30 = pneg %p24
    %p31 = scmp.eq.s32.totalorder %s15, 1
    %p32 = por %p30, %p31
    %p33 = scmp.ne.s32.totalorder %s25, %s28
    %p34 = scmp.eq.s32.totalorder %s15, 0
    %p35 = por %p33, %p34
    %p36 = scmp.ne.s32.totalorder %s25, %s28
    %p37 = scmp.eq.s32.totalorder %s20, 1
    %p38 = por %p36, %p37
    %p39 = scmp.ne.s32.totalorder %s28, %s29
    %p40 = scmp.eq.s32.totalorder %s20, 0
    %p41 = por %p39, %p40
    %p42 = scmp.ne.s32.totalorder %s28, %s29
    %p43 = scmp.eq.s32.totalorder %s21, 1
    %p44 = por %p42, %p43
    %p46 = scmp.ne.s32.totalorder %s29, %s45
    %p47 = scmp.eq.s32.totalorder %s21, 0
    %p48 = por %p46, %p47
    %s50 = sadd.s32 %s49, 1
    %p53 = scmp.eq.s32.totalorder %s15, 1
    %p54 = scmp.ne.s32.totalorder %s49, %s51
    %p55 = scmp.eq.s32.totalorder %s15, 0
    %p56 = por %p54, %p55
    %p57 = scmp.ne.s32.totalorder %s49, %s51
    %p58 = scmp.eq.s32.totalorder %s20, 1
    %p59 = por %p57, %p58
    %p60 = scmp.ne.s32.totalorder %s51, %s52
    %p61 = scmp.eq.s32.totalorder %s20, 0
    %p62 = por %p60, %p61
    %p63 = scmp.ne.s32.totalorder %s51, %s52
    %p64 = scmp.eq.s32.totalorder %s21, 1
    %p65 = por %p63, %p64
    %p67 = scmp.ne.s32.totalorder %s52, %s66
    %p68 = scmp.eq.s32.totalorder %s21, 0
    %p69 = por %p67, %p68
    %s71 = sadd.s32 %s70, 1
    %p74 = scmp.eq.s32.totalorder %s15, 1
    %p75 = scmp.ne.s32.totalorder %s70, %s72
    %p76 = scmp.eq.s32.totalorder %s15, 0
    %p77 = por %p75, %p76
    %p78 = scmp.ne.s32.totalorder %s70, %s72
    %p79 = scmp.eq.s32.totalorder %s20, 1
    %p80 = por %p78, %p79
    %p81 = scmp.ne.s32.totalorder %s72, %s73
    %p82 = scmp.eq.s32.totalorder %s20, 0
    %p83 = por %p81, %p82
    %p84 = scmp.ne.s32.totalorder %s72, %s73
    %p85 = scmp.eq.s32.totalorder %s21, 1
    %p86 = por %p84, %p85
    %p88 = scmp.ne.s32.totalorder %s73, %s87
    %p89 = scmp.eq.s32.totalorder %s21, 0
    %p90 = por %p88, %p89
    %s92 = sadd.s32 %s91, 1
    %p95 = scmp.eq.s32.totalorder %s15, 1
    %p96 = scmp.ne.s32.totalorder %s91, %s93
    %p97 = scmp.eq.s32.totalorder %s15, 0
    %p98 = por %p96, %p97
    %p99 = scmp.ne.s32.totalorder %s91, %s93
    %p100 = scmp.eq.s32.totalorder %s20, 1
    %p101 = por %p99, %p100
    %p102 = scmp.ne.s32.totalorder %s93, %s94
    %p103 = scmp.eq.s32.totalorder %s20, 0
    %p104 = por %p102, %p103
    %p105 = scmp.ne.s32.totalorder %s93, %s94
    %p106 = scmp.eq.s32.totalorder %s21, 1
    %p107 = por %p105, %p106
    %p109 = scmp.ne.s32.totalorder %s94, %s108
    %p110 = scmp.eq.s32.totalorder %s21, 0
    %p111 = por %p109, %p110
    %s113 = sadd.s32 %s112, 1
    %p116 = scmp.eq.s32.totalorder %s15, 1
    %p117 = scmp.ne.s32.totalorder %s112, %s114
    %p118 = scmp.eq.s32.totalorder %s15, 0
    %p119 = por %p117, %p118
    %p120 = scmp.ne.s32.totalorder %s112, %s114
    %p121 = scmp.eq.s32.totalorder %s20, 1
    %p122 = por %p120, %p121
    %p123 = scmp.ne.s32.totalorder %s114, %s115
    %p124 = scmp.eq.s32.totalorder %s20, 0
    %p125 = por %p123, %p124
    %p126 = scmp.ne.s32.totalorder %s114, %s115
    %p127 = scmp.eq.s32.totalorder %s21, 1
    %p128 = por %p126, %p127
    %p130 = scmp.ne.s32.totalorder %s115, %s129
    %p131 = scmp.eq.s32.totalorder %s21, 0
    %p132 = por %p130, %p131
    %s134 = sadd.s32 %s133, 1
    %p137 = scmp.eq.s32.totalorder %s15, 1
    %p138 = scmp.ne.s32.totalorder %s133, %s135
    %p139 = scmp.eq.s32.totalorder %s15, 0
    %p140 = por %p138, %p139
    %p141 = scmp.ne.s32.totalorder %s133, %s135
    %p142 = scmp.eq.s32.totalorder %s20, 1
    %p143 = por %p141, %p142
    %p144 = scmp.ne.s32.totalorder %s135, %s136
    %p145 = scmp.eq.s32.totalorder %s20, 0
    %p146 = por %p144, %p145
    %p147 = scmp.ne.s32.totalorder %s135, %s136
    %p148 = scmp.eq.s32.totalorder %s21, 1
    %p149 = por %p147, %p148
    %p151 = scmp.ne.s32.totalorder %s136, %s150
    %p152 = scmp.eq.s32.totalorder %s21, 0
    %p153 = por %p151, %p152
    %s155 = sadd.s32 %s154, 1
    %p158 = scmp.eq.s32.totalorder %s15, 1
    %p159 = scmp.ne.s32.totalorder %s154, %s156
    %p160 = scmp.eq.s32.totalorder %s15, 0
    %p161 = por %p159, %p160
    %p162 = scmp.ne.s32.totalorder %s154, %s156
    %p163 = scmp.eq.s32.totalorder %s20, 1
    %p164 = por %p162, %p163
    %p165 = scmp.ne.s32.totalorder %s156, %s157
    %p166 = scmp.eq.s32.totalorder %s20, 0
    %p167 = por %p165, %p166
    %p168 = scmp.ne.s32.totalorder %s156, %s157
    %p169 = scmp.eq.s32.totalorder %s21, 1
    %p170 = por %p168, %p169
    %p172 = scmp.ne.s32.totalorder %s157, %s171
    %p173 = scmp.eq.s32.totalorder %s21, 0
    %p174 = por %p172, %p173
    %s176 = sadd.s32 %s175, 1
    %p179 = scmp.eq.s32.totalorder %s15, 1
    %p180 = scmp.ne.s32.totalorder %s175, %s177
    %p181 = scmp.eq.s32.totalorder %s15, 0
    %p182 = por %p180, %p181
    %p183 = scmp.ne.s32.totalorder %s175, %s177
    %p184 = scmp.eq.s32.totalorder %s20, 1
    %p185 = por %p183, %p184
    %p186 = scmp.ne.s32.totalorder %s177, %s178
    %p187 = scmp.eq.s32.totalorder %s20, 0
    %p188 = por %p186, %p187
    %p189 = scmp.ne.s32.totalorder %s177, %s178
    %p190 = scmp.eq.s32.totalorder %s21, 1
    %p191 = por %p189, %p190
    %p193 = scmp.ne.s32.totalorder %s178, %s192
    %p194 = scmp.eq.s32.totalorder %s21, 0
    %p195 = por %p193, %p194
    %s197 = sadd.s32 %s196, 1
    %p200 = scmp.eq.s32.totalorder %s15, 1
    %p201 = scmp.ne.s32.totalorder %s196, %s198
    %p202 = scmp.eq.s32.totalorder %s15, 0
    %p203 = por %p201, %p202
    %p204 = scmp.ne.s32.totalorder %s196, %s198
    %p205 = scmp.eq.s32.totalorder %s20, 1
    %p206 = por %p204, %p205
    %p207 = scmp.ne.s32.totalorder %s198, %s199
    %p208 = scmp.eq.s32.totalorder %s20, 0
    %p209 = por %p207, %p208
    %p210 = scmp.ne.s32.totalorder %s198, %s199
    %p211 = scmp.eq.s32.totalorder %s21, 1
    %p212 = por %p210, %p211
    %p214 = scmp.ne.s32.totalorder %s199, %s213
    %p215 = scmp.eq.s32.totalorder %s21, 0
    %p216 = por %p214, %p215
    %s217 = ssub.s32 %s15, %s22
    %p218 = scmp.eq.s32.totalorder %s217, 0
    %s220 = sadd.s32 %s219, 1
    %s221 = scalar_select %p218, %s219, %s220
    %p224 = pneg %p218
    %p225 = scmp.eq.s32.totalorder %s15, 1
    %p226 = por %p224, %p225
    %p227 = scmp.ne.s32.totalorder %s219, %s222
    %p228 = scmp.eq.s32.totalorder %s15, 0
    %p229 = por %p227, %p228
    %p230 = scmp.ne.s32.totalorder %s219, %s222
    %p231 = scmp.eq.s32.totalorder %s20, 1
    %p232 = por %p230, %p231
    %p233 = scmp.ne.s32.totalorder %s222, %s223
    %p234 = scmp.eq.s32.totalorder %s20, 0
    %p235 = por %p233, %p234
    %p236 = scmp.ne.s32.totalorder %s222, %s223
    %p237 = scmp.eq.s32.totalorder %s21, 1
    %p238 = por %p236, %p237
    %p240 = scmp.ne.s32.totalorder %s223, %s239
    %p241 = scmp.eq.s32.totalorder %s21, 0
    %p242 = por %p240, %p241
    %p243 = scmp.le.s32.totalorder 1, %s15
    %p244 = scmp.lt.s32.totalorder %s15, 3
    %p245 = pnand %p243, %p244
    %p246 = pneg %p245
    // Predicated region
    $region9: #{cot_attention_pallas.1} parent=5 // pred_check
      _
    $region10: #{cot_attention_pallas.1} parent=5 // pred_check_branch
      %248 = sbr.rel (%p245) target = $region12
    $region11: #{cot_attention_pallas.1} parent=5 // pred_region
      %s249 = ssub.s32 %s15, 1
      // Predicated region
      $region13: #{cot_attention_pallas.1} parent=11 // pred_check
        %p250 = pneg %p62
      $region14: #{cot_attention_pallas.1} parent=11 // pred_check_branch
        %252 = sbr.rel (%p250) target = $region16
      $region15: #{cot_attention_pallas.1} parent=11 // pred_region
        _
      $region16: #{cot_attention_pallas.1} parent=11 // pred_fallthru
        _
      // Predicated region
      $region17: #{cot_attention_pallas.1} parent=11 // pred_check
        %p253 = pneg %p83
      $region18: #{cot_attention_pallas.1} parent=11 // pred_check_branch
        %255 = sbr.rel (%p253) target = $region20
      $region19: #{cot_attention_pallas.1} parent=11 // pred_region
        _
      $region20: #{cot_attention_pallas.1} parent=11 // pred_fallthru
        _
      // Predicated region
      $region21: #{cot_attention_pallas.1} parent=11 // pred_check
        %p256 = pneg %p104
      $region22: #{cot_attention_pallas.1} parent=11 // pred_check_branch
        %258 = sbr.rel (%p256) target = $region24
      $region23: #{cot_attention_pallas.1} parent=11 // pred_region
        _
      $region24: #{cot_attention_pallas.1} parent=11 // pred_fallthru
        _
      // Predicated region
      $region25: #{cot_attention_pallas.1} parent=11 // pred_check
        %p259 = pneg %p125
      $region26: #{cot_attention_pallas.1} parent=11 // pred_check_branch
        %261 = sbr.rel (%p259) target = $region28
      $region27: #{cot_attention_pallas.1} parent=11 // pred_region
        _
      $region28: #{cot_attention_pallas.1} parent=11 // pred_fallthru
        _
      // Predicated region
      $region29: #{cot_attention_pallas.1} parent=11 // pred_check
        %p262 = pneg %p146
      $region30: #{cot_attention_pallas.1} parent=11 // pred_check_branch
        %264 = sbr.rel (%p262) target = $region32
      $region31: #{cot_attention_pallas.1} parent=11 // pred_region
        _
      $region32: #{cot_attention_pallas.1} parent=11 // pred_fallthru
        _
      // Predicated region
      $region33: #{cot_attention_pallas.1} parent=11 // pred_check
        %p265 = pneg %p167
      $region34: #{cot_attention_pallas.1} parent=11 // pred_check_branch
        %267 = sbr.rel (%p265) target = $region36
      $region35: #{cot_attention_pallas.1} parent=11 // pred_region
        _
      $region36: #{cot_attention_pallas.1} parent=11 // pred_fallthru
        _
      // Predicated region
      $region37: #{cot_attention_pallas.1} parent=11 // pred_check
        %p268 = pneg %p188
      $region38: #{cot_attention_pallas.1} parent=11 // pred_check_branch
        %270 = sbr.rel (%p268) target = $region40
      $region39: #{cot_attention_pallas.1} parent=11 // pred_region
        _
      $region40: #{cot_attention_pallas.1} parent=11 // pred_fallthru
        _
      // Predicated region
      $region41: #{cot_attention_pallas.1} parent=11 // pred_check
        %p271 = pneg %p209
      $region42: #{cot_attention_pallas.1} parent=11 // pred_check_branch
        %273 = sbr.rel (%p271) target = $region44
      $region43: #{cot_attention_pallas.1} parent=11 // pred_region
        _
      $region44: #{cot_attention_pallas.1} parent=11 // pred_fallthru
        _
    $region12: #{cot_attention_pallas.1} parent=5 // pred_fallthru
      _
    %p274 = scmp.lt.s32.totalorder %s15, 2
    // Predicated region
    $region45: #{cot_attention_pallas.1} parent=5 // pred_check
      %p275 = pneg %p274
    $region46: #{cot_attention_pallas.1} parent=5 // pred_check_branch
      %277 = sbr.rel (%p275) target = $region48
    $region47: #{cot_attention_pallas.1} parent=5 // pred_region
      // Predicated region
      $region49: #{cot_attention_pallas.1} parent=47 // pred_check
        %p278 = pneg %p35
      $region50: #{cot_attention_pallas.1} parent=47 // pred_check_branch
        %280 = sbr.rel (%p278) target = $region52
      $region51: #{cot_attention_pallas.1} parent=47 // pred_region
        %s281 = smul.u32 2, %s15
        %p282 = scmp.lt.s32.totalorder %s281, 3
        %s283 = scalar_select %p282, %s281, 3
        %s284 = smul.addr %s283, 20
        %s285 = smul.addr %s284, 4
        %s286 = scalar_lea.vmem %s0, %s285
        %s287 = smul.u32 2, %s15
      $region52: #{cot_attention_pallas.1} parent=47 // pred_fallthru
        _
    $region48: #{cot_attention_pallas.1} parent=5 // pred_fallthru
      _
    %p288 = scmp.le.s32.totalorder 1, %s15
    %p289 = scmp.lt.s32.totalorder %s15, 3
    %p290 = pnand %p288, %p289
    %p291 = pneg %p290
    // Predicated region
    $region53: #{cot_attention_pallas.1} parent=5 // pred_check
      _
    $region54: #{cot_attention_pallas.1} parent=5 // pred_check_branch
      %293 = sbr.rel (%p290) target = $region56
    $region55: #{cot_attention_pallas.1} parent=5 // pred_region
      %s294 = ssub.s32 %s15, 1
      %s295 = smul.u32 2, %s20
      %p296 = scmp.lt.s32.totalorder %s295, 3
      %s297 = scalar_select %p296, %s295, 3
      %s298 = smul.addr %s297, 20
      %s299 = smul.addr %s298, 4
      %s300 = scalar_lea.vmem %s0, %s299
      %p301 = pneg %p41
      %p302 = pneg %p38
      %p303 = pneg %p62
      %p304 = pneg %p59
      %p305 = pneg %p83
      %p306 = pneg %p80
      %p307 = pneg %p104
      %p308 = pneg %p101
      %p309 = pneg %p125
      %p310 = pneg %p122
      %p311 = pneg %p146
      %p312 = pneg %p143
      %p313 = pneg %p167
      %p314 = pneg %p164
      %p315 = pneg %p188
      %p316 = pneg %p185
      %p317 = pneg %p209
      %p318 = pneg %p206
      %p319 = pneg %p235
      %p320 = pneg %p232
      %s321 = smul.u32 2, %s20
      %p322 = scmp.lt.s32.totalorder %s321, 3
      %s323 = scalar_select %p322, %s321, 3
      %s324 = smul.addr %s323, 8
      %s325 = smul.addr %s324, 4
      %s326 = scalar_lea.vmem %s9, %s325
      %s327 = smul.u32 2, %s20
      %p328 = scmp.lt.s32.totalorder %s327, 3
      %s329 = scalar_select %p328, %s327, 3
      %s330 = smul.addr %s329, 20
      %s331 = smul.addr %s330, 4
      %s332 = scalar_lea.vmem %s0, %s331
      %s333 = smul.u32 2, %s20
      %s334 = smul.u32 2, %s20
      %p335 = scmp.lt.s32.totalorder %s334, 3
      %s336 = scalar_select %p335, %s334, 3
      %s337 = smul.addr %s336, 8
      %s338 = smul.addr %s337, 4
      %s339 = scalar_lea.vmem %s9, %s338
      %s340 = smul.u32 2, %s20
      %s342 = scalar_lea.vmem %s332, 8
      %v343 = vld [vmem:[%s342] sm:$0xf]
      %v344 = vld [vmem:[%s342 + $0x4] sm:$0x1]
      %v345 = vld [vmem:[%s342 + $0x8] sm:$0xf]
      %v346 = vld [vmem:[%s342 + $0xc] sm:$0x1]
      %v347 = vld [vmem:[%s342 + $0x10] sm:$0xf]
      %v348 = vld [vmem:[%s342 + $0x14] sm:$0x1]
      %v349 = vld [vmem:[%s342 + $0x18] sm:$0xf]
      %v350 = vld [vmem:[%s342 + $0x1c] sm:$0x1]
      %v351 = vld [vmem:[%s342 + $0x20] sm:$0xf]
      %v352 = vld [vmem:[%s342 + $0x24] sm:$0x1]
      %v353 = vld [vmem:[%s342 + $0x28] sm:$0xf]
      %v354 = vld [vmem:[%s342 + $0x2c] sm:$0x1]
      %v355 = vld [vmem:[%s342 + $0x30] sm:$0xf]
      %v356 = vld [vmem:[%s342 + $0x34] sm:$0x1]
      %v357 = vld [vmem:[%s342 + $0x38] sm:$0xf]
      %v358 = vld [vmem:[%s342 + $0x3c] sm:$0x1]
      %v359 = vld [vmem:[%s342 + $0x50] sm:$0xf]
      %v360 = vld [vmem:[%s342 + $0x54] sm:$0x1]
      %v361 = vld [vmem:[%s342 + $0x58] sm:$0xf]
      %v362 = vld [vmem:[%s342 + $0x5c] sm:$0x1]
      %v363 = vld [vmem:[%s342 + $0x60] sm:$0xf]
      %v364 = vld [vmem:[%s342 + $0x64] sm:$0x1]
      %v365 = vld [vmem:[%s342 + $0x68] sm:$0xf]
      %v366 = vld [vmem:[%s342 + $0x6c] sm:$0x1]
      %v367 = vld [vmem:[%s342 + $0x70] sm:$0xf]
      %v368 = vld [vmem:[%s342 + $0x74] sm:$0x1]
      %v369 = vld [vmem:[%s342 + $0x78] sm:$0xf]
      %v370 = vld [vmem:[%s342 + $0x7c] sm:$0x1]
      %v371 = vld [vmem:[%s342 + $0x80] sm:$0xf]
      %v372 = vld [vmem:[%s342 + $0x84] sm:$0x1]
      %v373 = vld [vmem:[%s342 + $0x88] sm:$0xf]
      %v374 = vld [vmem:[%s342 + $0x8c] sm:$0x1]
      %vm375 = vsmask.f32 3328
      %vm376 = vsmask.f32 7440
      %vm377 = vmor %vm375, %vm376
      %v379 = vshrl.u32 %v343, 16
      %v381 = vrot.slane %v379, 4
      %v382 = vshll.u32 %v343, 16
      %v384 = vrot.slane %v382, 5
      %v385 = vor.u32 %v381, %v384
      %v386 = vrot.slane %v385, 4
      %v388 = vshll.u32 %v344, 16
      %v390 = vrot.slane %v388, 5
      %v391 = vsel %vm377, %v386, %v390
      %v393 = vshrl.u32 %v345, 16
      %v395 = vrot.slane %v393, 4
      %v396 = vshll.u32 %v345, 16
      %v398 = vrot.slane %v396, 5
      %v399 = vor.u32 %v395, %v398
      %v400 = vrot.slane %v399, 4
      %v402 = vshll.u32 %v346, 16
      %v404 = vrot.slane %v402, 5
      %v405 = vsel %vm377, %v400, %v404
      %v407 = vshrl.u32 %v347, 16
      %v409 = vrot.slane %v407, 4
      %v410 = vshll.u32 %v347, 16
      %v412 = vrot.slane %v410, 5
      %v413 = vor.u32 %v409, %v412
      %v414 = vrot.slane %v413, 4
      %v416 = vshll.u32 %v348, 16
      %v418 = vrot.slane %v416, 5
      %v419 = vsel %vm377, %v414, %v418
      %v421 = vshrl.u32 %v349, 16
      %v423 = vrot.slane %v421, 4
      %v424 = vshll.u32 %v349, 16
      %v426 = vrot.slane %v424, 5
      %v427 = vor.u32 %v423, %v426
      %v428 = vrot.slane %v427, 4
      %v430 = vshll.u32 %v350, 16
      %v432 = vrot.slane %v430, 5
      %v433 = vsel %vm377, %v428, %v432
      %v435 = vshrl.u32 %v351, 16
      %v437 = vrot.slane %v435, 4
      %v438 = vshll.u32 %v351, 16
      %v440 = vrot.slane %v438, 5
      %v441 = vor.u32 %v437, %v440
      %v442 = vrot.slane %v441, 4
      %v444 = vshll.u32 %v352, 16
      %v446 = vrot.slane %v444, 5
      %v447 = vsel %vm377, %v442, %v446
      %v449 = vshrl.u32 %v353, 16
      %v451 = vrot.slane %v449, 4
      %v452 = vshll.u32 %v353, 16
      %v454 = vrot.slane %v452, 5
      %v455 = vor.u32 %v451, %v454
      %v456 = vrot.slane %v455, 4
      %v458 = vshll.u32 %v354, 16
      %v460 = vrot.slane %v458, 5
      %v461 = vsel %vm377, %v456, %v460
      %v463 = vshrl.u32 %v355, 16
      %v465 = vrot.slane %v463, 4
      %v466 = vshll.u32 %v355, 16
      %v468 = vrot.slane %v466, 5
      %v469 = vor.u32 %v465, %v468
      %v470 = vrot.slane %v469, 4
      %v472 = vshll.u32 %v356, 16
      %v474 = vrot.slane %v472, 5
      %v475 = vsel %vm377, %v470, %v474
      %v477 = vshrl.u32 %v357, 16
      %v479 = vrot.slane %v477, 4
      %v480 = vshll.u32 %v357, 16
      %v482 = vrot.slane %v480, 5
      %v483 = vor.u32 %v479, %v482
      %v484 = vrot.slane %v483, 4
      %v486 = vshll.u32 %v358, 16
      %v488 = vrot.slane %v486, 5
      %v489 = vsel %vm377, %v484, %v488
      %v491 = vshrl.u32 %v359, 16
      %v493 = vrot.slane %v491, 4
      %v494 = vshll.u32 %v359, 16
      %v496 = vrot.slane %v494, 5
      %v497 = vor.u32 %v493, %v496
      %v498 = vrot.slane %v497, 4
      %v500 = vshll.u32 %v360, 16
      %v502 = vrot.slane %v500, 5
      %v503 = vsel %vm377, %v498, %v502
      %v505 = vshrl.u32 %v361, 16
      %v507 = vrot.slane %v505, 4
      %v508 = vshll.u32 %v361, 16
      %v510 = vrot.slane %v508, 5
      %v511 = vor.u32 %v507, %v510
      %v512 = vrot.slane %v511, 4
      %v514 = vshll.u32 %v362, 16
      %v516 = vrot.slane %v514, 5
      %v517 = vsel %vm377, %v512, %v516
      %v519 = vshrl.u32 %v363, 16
      %v521 = vrot.slane %v519, 4
      %v522 = vshll.u32 %v363, 16
      %v524 = vrot.slane %v522, 5
      %v525 = vor.u32 %v521, %v524
      %v526 = vrot.slane %v525, 4
      %v528 = vshll.u32 %v364, 16
      %v530 = vrot.slane %v528, 5
      %v531 = vsel %vm377, %v526, %v530
      %v533 = vshrl.u32 %v365, 16
      %v535 = vrot.slane %v533, 4
      %v536 = vshll.u32 %v365, 16
      %v538 = vrot.slane %v536, 5
      %v539 = vor.u32 %v535, %v538
      %v540 = vrot.slane %v539, 4
      %v542 = vshll.u32 %v366, 16
      %v544 = vrot.slane %v542, 5
      %v545 = vsel %vm377, %v540, %v544
      %v547 = vshrl.u32 %v367, 16
      %v549 = vrot.slane %v547, 4
      %v550 = vshll.u32 %v367, 16
      %v552 = vrot.slane %v550, 5
      %v553 = vor.u32 %v549, %v552
      %v554 = vrot.slane %v553, 4
      %v556 = vshll.u32 %v368, 16
      %v558 = vrot.slane %v556, 5
      %v559 = vsel %vm377, %v554, %v558
      %v561 = vshrl.u32 %v369, 16
      %v563 = vrot.slane %v561, 4
      %v564 = vshll.u32 %v369, 16
      %v566 = vrot.slane %v564, 5
      %v567 = vor.u32 %v563, %v566
      %v568 = vrot.slane %v567, 4
      %v570 = vshll.u32 %v370, 16
      %v572 = vrot.slane %v570, 5
      %v573 = vsel %vm377, %v568, %v572
      %v575 = vshrl.u32 %v371, 16
      %v577 = vrot.slane %v575, 4
      %v578 = vshll.u32 %v371, 16
      %v580 = vrot.slane %v578, 5
      %v581 = vor.u32 %v577, %v580
      %v582 = vrot.slane %v581, 4
      %v584 = vshll.u32 %v372, 16
      %v586 = vrot.slane %v584, 5
      %v587 = vsel %vm377, %v582, %v586
      %v589 = vshrl.u32 %v373, 16
      %v591 = vrot.slane %v589, 4
      %v592 = vshll.u32 %v373, 16
      %v594 = vrot.slane %v592, 5
      %v595 = vor.u32 %v591, %v594
      %v596 = vrot.slane %v595, 4
      %v598 = vshll.u32 %v374, 16
      %v600 = vrot.slane %v598, 5
      %v601 = vsel %vm377, %v596, %v600
      %v602 = vld [vmem:[%s332] sm:$0xf]
      %v603 = vld [vmem:[%s332 + $0x8] sm:$0xf]
      %v604 = vld [vmem:[%s332 + $0x10] sm:$0xf]
      %v605 = vld [vmem:[%s332 + $0x18] sm:$0xf]
      %v606 = vld [vmem:[%s332 + $0x20] sm:$0xf]
      %v607 = vld [vmem:[%s332 + $0x28] sm:$0xf]
      %v608 = vld [vmem:[%s332 + $0x30] sm:$0xf]
      %v609 = vld [vmem:[%s332 + $0x38] sm:$0xf]
      %v610 = vld [vmem:[%s332 + $0x50] sm:$0xf]
      %v611 = vld [vmem:[%s332 + $0x58] sm:$0xf]
      %v612 = vld [vmem:[%s332 + $0x60] sm:$0xf]
      %v613 = vld [vmem:[%s332 + $0x68] sm:$0xf]
      %v614 = vld [vmem:[%s332 + $0x70] sm:$0xf]
      %v615 = vld [vmem:[%s332 + $0x78] sm:$0xf]
      %v616 = vld [vmem:[%s332 + $0x80] sm:$0xf]
      %v617 = vld [vmem:[%s332 + $0x88] sm:$0xf]
      %v618 = vld [vmem:[%s1] sm:$0xf]
      %v619 = vld [vmem:[%s1 + $0x4] sm:$0xf]
      %v620 = vld [vmem:[%s1 + $0x8] sm:$0xf]
      %v621 = vld [vmem:[%s1 + $0xc] sm:$0xf]
      %v622 = vld [vmem:[%s1 + $0x10] sm:$0xf]
      %v623 = vld [vmem:[%s1 + $0x14] sm:$0xf]
      %v624 = vld [vmem:[%s1 + $0x18] sm:$0xf]
      %v625 = vld [vmem:[%s1 + $0x1c] sm:$0xf]
      %v626 = vld [vmem:[%s1 + $0x20] sm:$0xf]
      %v627 = vld [vmem:[%s1 + $0x24] sm:$0xf]
      %v628 = vld [vmem:[%s1 + $0x28] sm:$0xf]
      %v629 = vld [vmem:[%s1 + $0x2c] sm:$0xf]
      %v630 = vld [vmem:[%s1 + $0x30] sm:$0xf]
      %v631 = vld [vmem:[%s1 + $0x34] sm:$0xf]
      %v632 = vld [vmem:[%s1 + $0x38] sm:$0xf]
      %v633 = vld [vmem:[%s1 + $0x3c] sm:$0xf]
      %v634 = vld [vmem:[%s332 + $0x4] sm:$0x1]
      %v635 = vld [vmem:[%s332 + $0xc] sm:$0x1]
      %v636 = vld [vmem:[%s332 + $0x14] sm:$0x1]
      %v637 = vld [vmem:[%s332 + $0x1c] sm:$0x1]
      %v638 = vld [vmem:[%s332 + $0x24] sm:$0x1]
      %v639 = vld [vmem:[%s332 + $0x2c] sm:$0x1]
      %v640 = vld [vmem:[%s332 + $0x34] sm:$0x1]
      %v641 = vld [vmem:[%s332 + $0x3c] sm:$0x1]
      %v642 = vld [vmem:[%s332 + $0x54] sm:$0x1]
      %v643 = vld [vmem:[%s332 + $0x5c] sm:$0x1]
      %v644 = vld [vmem:[%s332 + $0x64] sm:$0x1]
      %v645 = vld [vmem:[%s332 + $0x6c] sm:$0x1]
      %v646 = vld [vmem:[%s332 + $0x74] sm:$0x1]
      %v647 = vld [vmem:[%s332 + $0x7c] sm:$0x1]
      %v648 = vld [vmem:[%s332 + $0x84] sm:$0x1]
      %v649 = vld [vmem:[%s332 + $0x8c] sm:$0x1]
      %v651 = vshrl.u32 %v602, 16
      %v653 = vrot.slane %v651, 4
      %v654 = vshll.u32 %v602, 16
      %v656 = vrot.slane %v654, 5
      %v657 = vor.u32 %v653, %v656
      %v658 = vrot.slane %v657, 4
      %v660 = vshll.u32 %v634, 16
      %v662 = vrot.slane %v660, 5
      %v663 = vsel %vm377, %v658, %v662
      %v665 = vshrl.u32 %v603, 16
      %v667 = vrot.slane %v665, 4
      %v668 = vshll.u32 %v603, 16
      %v670 = vrot.slane %v668, 5
      %v671 = vor.u32 %v667, %v670
      %v672 = vrot.slane %v671, 4
      %v674 = vshll.u32 %v635, 16
      %v676 = vrot.slane %v674, 5
      %v677 = vsel %vm377, %v672, %v676
      %v679 = vshrl.u32 %v604, 16
      %v681 = vrot.slane %v679, 4
      %v682 = vshll.u32 %v604, 16
      %v684 = vrot.slane %v682, 5
      %v685 = vor.u32 %v681, %v684
      %v686 = vrot.slane %v685, 4
      %v688 = vshll.u32 %v636, 16
      %v690 = vrot.slane %v688, 5
      %v691 = vsel %vm377, %v686, %v690
      %v693 = vshrl.u32 %v605, 16
      %v695 = vrot.slane %v693, 4
      %v696 = vshll.u32 %v605, 16
      %v698 = vrot.slane %v696, 5
      %v699 = vor.u32 %v695, %v698
      %v700 = vrot.slane %v699, 4
      %v702 = vshll.u32 %v637, 16
      %v704 = vrot.slane %v702, 5
      %v705 = vsel %vm377, %v700, %v704
      %v707 = vshrl.u32 %v606, 16
      %v709 = vrot.slane %v707, 4
      %v710 = vshll.u32 %v606, 16
      %v712 = vrot.slane %v710, 5
      %v713 = vor.u32 %v709, %v712
      %v714 = vrot.slane %v713, 4
      %v716 = vshll.u32 %v638, 16
      %v718 = vrot.slane %v716, 5
      %v719 = vsel %vm377, %v714, %v718
      %v721 = vshrl.u32 %v607, 16
      %v723 = vrot.slane %v721, 4
      %v724 = vshll.u32 %v607, 16
      %v726 = vrot.slane %v724, 5
      %v727 = vor.u32 %v723, %v726
      %v728 = vrot.slane %v727, 4
      %v730 = vshll.u32 %v639, 16
      %v732 = vrot.slane %v730, 5
      %v733 = vsel %vm377, %v728, %v732
      %v735 = vshrl.u32 %v608, 16
      %v737 = vrot.slane %v735, 4
      %v738 = vshll.u32 %v608, 16
      %v740 = vrot.slane %v738, 5
      %v741 = vor.u32 %v737, %v740
      %v742 = vrot.slane %v741, 4
      %v744 = vshll.u32 %v640, 16
      %v746 = vrot.slane %v744, 5
      %v747 = vsel %vm377, %v742, %v746
      %v749 = vshrl.u32 %v609, 16
      %v751 = vrot.slane %v749, 4
      %v752 = vshll.u32 %v609, 16
      %v754 = vrot.slane %v752, 5
      %v755 = vor.u32 %v751, %v754
      %v756 = vrot.slane %v755, 4
      %v758 = vshll.u32 %v641, 16
      %v760 = vrot.slane %v758, 5
      %v761 = vsel %vm377, %v756, %v760
      %v763 = vshrl.u32 %v610, 16
      %v765 = vrot.slane %v763, 4
      %v766 = vshll.u32 %v610, 16
      %v768 = vrot.slane %v766, 5
      %v769 = vor.u32 %v765, %v768
      %v770 = vrot.slane %v769, 4
      %v772 = vshll.u32 %v642, 16
      %v774 = vrot.slane %v772, 5
      %v775 = vsel %vm377, %v770, %v774
      %v777 = vshrl.u32 %v611, 16
      %v779 = vrot.slane %v777, 4
      %v780 = vshll.u32 %v611, 16
      %v782 = vrot.slane %v780, 5
      %v783 = vor.u32 %v779, %v782
      %v784 = vrot.slane %v783, 4
      %v786 = vshll.u32 %v643, 16
      %v788 = vrot.slane %v786, 5
      %v789 = vsel %vm377, %v784, %v788
      %v791 = vshrl.u32 %v612, 16
      %v793 = vrot.slane %v791, 4
      %v794 = vshll.u32 %v612, 16
      %v796 = vrot.slane %v794, 5
      %v797 = vor.u32 %v793, %v796
      %v798 = vrot.slane %v797, 4
      %v800 = vshll.u32 %v644, 16
      %v802 = vrot.slane %v800, 5
      %v803 = vsel %vm377, %v798, %v802
      %v805 = vshrl.u32 %v613, 16
      %v807 = vrot.slane %v805, 4
      %v808 = vshll.u32 %v613, 16
      %v810 = vrot.slane %v808, 5
      %v811 = vor.u32 %v807, %v810
      %v812 = vrot.slane %v811, 4
      %v814 = vshll.u32 %v645, 16
      %v816 = vrot.slane %v814, 5
      %v817 = vsel %vm377, %v812, %v816
      %v819 = vshrl.u32 %v614, 16
      %v821 = vrot.slane %v819, 4
      %v822 = vshll.u32 %v614, 16
      %v824 = vrot.slane %v822, 5
      %v825 = vor.u32 %v821, %v824
      %v826 = vrot.slane %v825, 4
      %v828 = vshll.u32 %v646, 16
      %v830 = vrot.slane %v828, 5
      %v831 = vsel %vm377, %v826, %v830
      %v833 = vshrl.u32 %v615, 16
      %v835 = vrot.slane %v833, 4
      %v836 = vshll.u32 %v615, 16
      %v838 = vrot.slane %v836, 5
      %v839 = vor.u32 %v835, %v838
      %v840 = vrot.slane %v839, 4
      %v842 = vshll.u32 %v647, 16
      %v844 = vrot.slane %v842, 5
      %v845 = vsel %vm377, %v840, %v844
      %v847 = vshrl.u32 %v616, 16
      %v849 = vrot.slane %v847, 4
      %v850 = vshll.u32 %v616, 16
      %v852 = vrot.slane %v850, 5
      %v853 = vor.u32 %v849, %v852
      %v854 = vrot.slane %v853, 4
      %v856 = vshll.u32 %v648, 16
      %v858 = vrot.slane %v856, 5
      %v859 = vsel %vm377, %v854, %v858
      %v861 = vshrl.u32 %v617, 16
      %v863 = vrot.slane %v861, 4
      %v864 = vshll.u32 %v617, 16
      %v866 = vrot.slane %v864, 5
      %v867 = vor.u32 %v863, %v866
      %v868 = vrot.slane %v867, 4
      %v870 = vshll.u32 %v649, 16
      %v872 = vrot.slane %v870, 5
      %v873 = vsel %vm377, %v868, %v872
      %s874 = scalar_lea.vmem %s1, 64
      %v875 = vld [vmem:[%s874] sm:$0xf]
      %v876 = vld [vmem:[%s874 + $0x4] sm:$0xf]
      %v877 = vld [vmem:[%s874 + $0x8] sm:$0xf]
      %v878 = vld [vmem:[%s874 + $0xc] sm:$0xf]
      %v879 = vld [vmem:[%s874 + $0x10] sm:$0xf]
      %v880 = vld [vmem:[%s874 + $0x14] sm:$0xf]
      %v881 = vld [vmem:[%s874 + $0x18] sm:$0xf]
      %v882 = vld [vmem:[%s874 + $0x1c] sm:$0xf]
      %v883 = vld [vmem:[%s874 + $0x20] sm:$0xf]
      %v884 = vld [vmem:[%s874 + $0x24] sm:$0xf]
      %v885 = vld [vmem:[%s874 + $0x28] sm:$0xf]
      %v886 = vld [vmem:[%s874 + $0x2c] sm:$0xf]
      %v887 = vld [vmem:[%s874 + $0x30] sm:$0xf]
      %v888 = vld [vmem:[%s874 + $0x34] sm:$0xf]
      %v889 = vld [vmem:[%s874 + $0x38] sm:$0xf]
      %v890 = vld [vmem:[%s874 + $0x3c] sm:$0xf]
      %v891 = vunpack.c.l.b16 %v663
      %v892 = vunpack.c.l.b16 %v677
      %v893 = vunpack.c.l.b16 %v691
      %v894 = vunpack.c.l.b16 %v705
      %v895 = vunpack.c.l.b16 %v719
      %v896 = vunpack.c.l.b16 %v733
      %v897 = vunpack.c.l.b16 %v747
      %v898 = vunpack.c.l.b16 %v761
      %v899 = vunpack.c.l.b16 %v775
      %v900 = vunpack.c.l.b16 %v789
      %v901 = vunpack.c.l.b16 %v803
      %v902 = vunpack.c.l.b16 %v817
      %v903 = vunpack.c.l.b16 %v831
      %v904 = vunpack.c.l.b16 %v845
      %v905 = vunpack.c.l.b16 %v859
      %v906 = vunpack.c.l.b16 %v873
      %v907 = vpack.c.b16 %v892, %v891
      %v908 = vpack.c.b16 %v894, %v893
      %v909 = vpack.c.b16 %v896, %v895
      %v910 = vpack.c.b16 %v898, %v897
      %v911 = vpack.c.b16 %v900, %v899
      %v912 = vpack.c.b16 %v902, %v901
      %v913 = vpack.c.b16 %v904, %v903
      %v914 = vpack.c.b16 %v906, %v905
      %v939 = vunpack.c.l.b16 %v875
      %v940 = vunpack.c.l.b16 %v876
      %v941 = vunpack.c.l.b16 %v877
      %v942 = vunpack.c.l.b16 %v878
      %v943 = vunpack.c.l.b16 %v879
      %v944 = vunpack.c.l.b16 %v880
      %v945 = vunpack.c.l.b16 %v881
      %v946 = vunpack.c.l.b16 %v882
      %v947 = vunpack.c.l.b16 %v883
      %v948 = vunpack.c.l.b16 %v884
      %v949 = vunpack.c.l.b16 %v885
      %v950 = vunpack.c.l.b16 %v886
      %v951 = vunpack.c.l.b16 %v887
      %v952 = vunpack.c.l.b16 %v888
      %v953 = vunpack.c.l.b16 %v889
      %v954 = vunpack.c.l.b16 %v890
      %v955 = vpack.c.b16 %v940, %v939
      %v956 = vpack.c.b16 %v942, %v941
      %v957 = vpack.c.b16 %v944, %v943
      %v958 = vpack.c.b16 %v946, %v945
      %v959 = vpack.c.b16 %v948, %v947
      %v960 = vpack.c.b16 %v950, %v949
      %v961 = vpack.c.b16 %v952, %v951
      %v962 = vpack.c.b16 %v954, %v953
      %971 = vmatprep.subr.bf16.mxu0 0
      %972 = vmatpush1.bf16.msra.mxu0 %v955
      %973 = vmatprep.subr.bf16.mxu0 0
      %974 = vmatpush1.bf16.msra.mxu0 %v956
      %975 = vmatprep.subr.bf16.mxu0 0
      %976 = vmatpush1.bf16.msra.mxu0 %v957
      %977 = vmatprep.subr.bf16.mxu0 0
      %978 = vmatpush1.bf16.msra.mxu0 %v958
      %979 = vmatprep.subr.bf16.mxu0 0
      %980 = vmatpush1.bf16.msra.mxu0 %v959
      %981 = vmatprep.subr.bf16.mxu0 0
      %982 = vmatpush1.bf16.msra.mxu0 %v960
      %983 = vmatprep.subr.bf16.mxu0 0
      %984 = vmatpush1.bf16.msra.mxu0 %v961
      %985 = vmatprep.subr.bf16.mxu0 0
      %986 = vmatpush1.bf16.msra.mxu0 %v962
      %987 = vmatprep.subr.bf16.mxu0 0
      %988 = vmatpush1.bf16.msra.mxu0 0
      %989 = vmatprep.subr.bf16.mxu0 0
      %990 = vmatpush1.bf16.msra.mxu0 0
      %991 = vmatprep.subr.bf16.mxu0 0
      %992 = vmatpush1.bf16.msra.mxu0 0
      %993 = vmatprep.subr.bf16.mxu0 0
      %994 = vmatpush1.bf16.msra.mxu0 0
      %995 = vmatprep.subr.bf16.mxu0 0
      %996 = vmatpush1.bf16.msra.mxu0 0
      %997 = vmatprep.subr.bf16.mxu0 0
      %998 = vmatpush1.bf16.msra.mxu0 0
      %999 = vmatprep.subr.bf16.mxu0 0
      %1000 = vmatpush1.bf16.msra.mxu0 0
      %1001 = vmatprep.subr.bf16.mxu0 0
      %1002 = vmatpush1.bf16.msra.mxu0 0
      %1003 = vmatprep.mubr.bf16.mxu0 0
      %1004 = vmatmul.mubr.bf16.gmra.mrb[0].mxu0 %v907
      %v1005 = vpop.f32.mrb[0].mxu0
      %v1006 = vadd.f32 0.0, %v1005
      %v1007 = vpop.f32.mrb[0].mxu0
      %v1008 = vpop.f32.mrb[0].mxu0
      %v1009 = vadd.f32 0.0, %v1008
      %v1010 = vpop.f32.mrb[0].mxu0
      %1011 = vmatprep.mubr.bf16.mxu0 0
      %1012 = vmatmul.mubr.bf16.gmra.mrb[0].mxu0 %v908
      %v1013 = vpop.f32.mrb[0].mxu0
      %v1014 = vadd.f32 0.0, %v1013
      %v1015 = vpop.f32.mrb[0].mxu0
      %v1016 = vpop.f32.mrb[0].mxu0
      %v1017 = vadd.f32 0.0, %v1016
      %v1018 = vpop.f32.mrb[0].mxu0
      %1019 = vmatprep.mubr.bf16.mxu0 0
      %1020 = vmatmul.mubr.bf16.gmra.mrb[0].mxu0 %v909
      %v1021 = vpop.f32.mrb[0].mxu0
      %v1022 = vadd.f32 0.0, %v1021
      %v1023 = vpop.f32.mrb[0].mxu0
      %v1024 = vpop.f32.mrb[0].mxu0
      %v1025 = vadd.f32 0.0, %v1024
      %v1026 = vpop.f32.mrb[0].mxu0
      %1027 = vmatprep.mubr.bf16.mxu0 0
      %1028 = vmatmul.mubr.bf16.gmra.mrb[0].mxu0 %v910
      %v1029 = vpop.f32.mrb[0].mxu0
      %v1030 = vadd.f32 0.0, %v1029
      %v1031 = vpop.f32.mrb[0].mxu0
      %v1032 = vpop.f32.mrb[0].mxu0
      %v1033 = vadd.f32 0.0, %v1032
      %v1034 = vpop.f32.mrb[0].mxu0
      %1035 = vmatprep.mubr.bf16.mxu0 0
      %1036 = vmatmul.mubr.bf16.gmra.mrb[0].mxu0 %v911
      %v1037 = vpop.f32.mrb[0].mxu0
      %v1038 = vadd.f32 0.0, %v1037
      %v1039 = vpop.f32.mrb[0].mxu0
      %v1040 = vpop.f32.mrb[0].mxu0
      %v1041 = vadd.f32 0.0, %v1040
      %v1042 = vpop.f32.mrb[0].mxu0
      %1043 = vmatprep.mubr.bf16.mxu0 0
      %1044 = vmatmul.mubr.bf16.gmra.mrb[0].mxu0 %v912
      %v1045 = vpop.f32.mrb[0].mxu0
      %v1046 = vadd.f32 0.0, %v1045
      %v1047 = vpop.f32.mrb[0].mxu0
      %v1048 = vpop.f32.mrb[0].mxu0
      %v1049 = vadd.f32 0.0, %v1048
      %v1050 = vpop.f32.mrb[0].mxu0
      %1051 = vmatprep.mubr.bf16.mxu0 0
      %1052 = vmatmul.mubr.bf16.gmra.mrb[0].mxu0 %v913
      %v1053 = vpop.f32.mrb[0].mxu0
      %v1054 = vadd.f32 0.0, %v1053
      %v1055 = vpop.f32.mrb[0].mxu0
      %v1056 = vpop.f32.mrb[0].mxu0
      %v1057 = vadd.f32 0.0, %v1056
      %v1058 = vpop.f32.mrb[0].mxu0
      %1059 = vmatprep.mubr.bf16.mxu0 0
      %1060 = vmatmul.mubr.bf16.gmra.mrb[0].mxu0 %v914
      %v1061 = vpop.f32.mrb[0].mxu0
      %v1062 = vadd.f32 0.0, %v1061
      %v1063 = vpop.f32.mrb[0].mxu0
      %v1064 = vpop.f32.mrb[0].mxu0
      %v1065 = vadd.f32 0.0, %v1064
      %v1066 = vpop.f32.mrb[0].mxu0
      %1067 = vdwg.mxu0
      %v1084 = vunpack.c.l.b16 %v602
      %v1085 = vunpack.c.l.b16 %v603
      %v1086 = vunpack.c.l.b16 %v604
      %v1087 = vunpack.c.l.b16 %v605
      %v1088 = vunpack.c.l.b16 %v606
      %v1089 = vunpack.c.l.b16 %v607
      %v1090 = vunpack.c.l.b16 %v608
      %v1091 = vunpack.c.l.b16 %v609
      %v1092 = vunpack.c.l.b16 %v610
      %v1093 = vunpack.c.l.b16 %v611
      %v1094 = vunpack.c.l.b16 %v612
      %v1095 = vunpack.c.l.b16 %v613
      %v1096 = vunpack.c.l.b16 %v614
      %v1097 = vunpack.c.l.b16 %v615
      %v1098 = vunpack.c.l.b16 %v616
      %v1099 = vunpack.c.l.b16 %v617
      %v1100 = vpack.c.b16 %v1085, %v1084
      %v1101 = vpack.c.b16 %v1087, %v1086
      %v1102 = vpack.c.b16 %v1089, %v1088
      %v1103 = vpack.c.b16 %v1091, %v1090
      %v1104 = vpack.c.b16 %v1093, %v1092
      %v1105 = vpack.c.b16 %v1095, %v1094
      %v1106 = vpack.c.b16 %v1097, %v1096
      %v1107 = vpack.c.b16 %v1099, %v1098
      %v1132 = vunpack.c.l.b16 %v618
      %v1133 = vunpack.c.l.b16 %v619
      %v1134 = vunpack.c.l.b16 %v620
      %v1135 = vunpack.c.l.b16 %v621
      %v1136 = vunpack.c.l.b16 %v622
      %v1137 = vunpack.c.l.b16 %v623
      %v1138 = vunpack.c.l.b16 %v624
      %v1139 = vunpack.c.l.b16 %v625
      %v1140 = vunpack.c.l.b16 %v626
      %v1141 = vunpack.c.l.b16 %v627
      %v1142 = vunpack.c.l.b16 %v628
      %v1143 = vunpack.c.l.b16 %v629
      %v1144 = vunpack.c.l.b16 %v630
      %v1145 = vunpack.c.l.b16 %v631
      %v1146 = vunpack.c.l.b16 %v632
      %v1147 = vunpack.c.l.b16 %v633
      %v1148 = vpack.c.b16 %v1133, %v1132
      %v1149 = vpack.c.b16 %v1135, %v1134
      %v1150 = vpack.c.b16 %v1137, %v1136
      %v1151 = vpack.c.b16 %v1139, %v1138
      %v1152 = vpack.c.b16 %v1141, %v1140
      %v1153 = vpack.c.b16 %v1143, %v1142
      %v1154 = vpack.c.b16 %v1145, %v1144
      %v1155 = vpack.c.b16 %v1147, %v1146
      %1164 = vmatprep.subr.bf16.mxu0 0
      %1165 = vmatpush1.bf16.msra.mxu0 %v1148
      %1166 = vmatprep.subr.bf16.mxu0 0
      %1167 = vmatpush1.bf16.msra.mxu0 %v1149
      %1168 = vmatprep.subr.bf16.mxu0 0
      %1169 = vmatpush1.bf16.msra.mxu0 %v1150
      %1170 = vmatprep.subr.bf16.mxu0 0
      %1171 = vmatpush1.bf16.msra.mxu0 %v1151
      %1172 = vmatprep.subr.bf16.mxu0 0
      %1173 = vmatpush1.bf16.msra.mxu0 %v1152
      %1174 = vmatprep.subr.bf16.mxu0 0
      %1175 = vmatpush1.bf16.msra.mxu0 %v1153
      %1176 = vmatprep.subr.bf16.mxu0 0
      %1177 = vmatpush1.bf16.msra.mxu0 %v1154
      %1178 = vmatprep.subr.bf16.mxu0 0
      %1179 = vmatpush1.bf16.msra.mxu0 %v1155
      %1180 = vmatprep.subr.bf16.mxu0 0
      %1181 = vmatpush1.bf16.msra.mxu0 0
      %1182 = vmatprep.subr.bf16.mxu0 0
      %1183 = vmatpush1.bf16.msra.mxu0 0
      %1184 = vmatprep.subr.bf16.mxu0 0
      %1185 = vmatpush1.bf16.msra.mxu0 0
      %1186 = vmatprep.subr.bf16.mxu0 0
      %1187 = vmatpush1.bf16.msra.mxu0 0
      %1188 = vmatprep.subr.bf16.mxu0 0
      %1189 = vmatpush1.bf16.msra.mxu0 0
      %1190 = vmatprep.subr.bf16.mxu0 0
      %1191 = vmatpush1.bf16.msra.mxu0 0
      %1192 = vmatprep.subr.bf16.mxu0 0
      %1193 = vmatpush1.bf16.msra.mxu0 0
      %1194 = vmatprep.subr.bf16.mxu0 0
      %1195 = vmatpush1.bf16.msra.mxu0 0
      %1196 = vmatprep.mubr.bf16.mxu0 0
      %1197 = vmatmul.mubr.bf16.gmra.mrb[0].mxu0 %v1100
      %v1198 = vpop.f32.mrb[0].mxu0
      %v1199 = vadd.f32 %v1006, %v1198
      %v1200 = vpop.f32.mrb[0].mxu0
      %v1201 = vpop.f32.mrb[0].mxu0
      %v1202 = vadd.f32 %v1009, %v1201
      %v1203 = vpop.f32.mrb[0].mxu0
      %1204 = vmatprep.mubr.bf16.mxu0 0
      %1205 = vmatmul.mubr.bf16.gmra.mrb[0].mxu0 %v1101
      %v1206 = vpop.f32.mrb[0].mxu0
      %v1207 = vadd.f32 %v1014, %v1206
      %v1208 = vpop.f32.mrb[0].mxu0
      %v1209 = vpop.f32.mrb[0].mxu0
      %v1210 = vadd.f32 %v1017, %v1209
      %v1211 = vpop.f32.mrb[0].mxu0
      %1212 = vmatprep.mubr.bf16.mxu0 0
      %1213 = vmatmul.mubr.bf16.gmra.mrb[0].mxu0 %v1102
      %v1214 = vpop.f32.mrb[0].mxu0
      %v1215 = vadd.f32 %v1022, %v1214
      %v1216 = vpop.f32.mrb[0].mxu0
      %v1217 = vpop.f32.mrb[0].mxu0
      %v1218 = vadd.f32 %v1025, %v1217
      %v1219 = vpop.f32.mrb[0].mxu0
      %1220 = vmatprep.mubr.bf16.mxu0 0
      %1221 = vmatmul.mubr.bf16.gmra.mrb[0].mxu0 %v1103
      %v1222 = vpop.f32.mrb[0].mxu0
      %v1223 = vadd.f32 %v1030, %v1222
      %v1224 = vpop.f32.mrb[0].mxu0
      %v1225 = vpop.f32.mrb[0].mxu0
      %v1226 = vadd.f32 %v1033, %v1225
      %v1227 = vpop.f32.mrb[0].mxu0
      %1228 = vmatprep.mubr.bf16.mxu0 0
      %1229 = vmatmul.mubr.bf16.gmra.mrb[0].mxu0 %v1104
      %v1230 = vpop.f32.mrb[0].mxu0
      %v1231 = vadd.f32 %v1038, %v1230
      %v1232 = vpop.f32.mrb[0].mxu0
      %v1233 = vpop.f32.mrb[0].mxu0
      %v1234 = vadd.f32 %v1041, %v1233
      %v1235 = vpop.f32.mrb[0].mxu0
      %1236 = vmatprep.mubr.bf16.mxu0 0
      %1237 = vmatmul.mubr.bf16.gmra.mrb[0].mxu0 %v1105
      %v1238 = vpop.f32.mrb[0].mxu0
      %v1239 = vadd.f32 %v1046, %v1238
      %v1240 = vpop.f32.mrb[0].mxu0
      %v1241 = vpop.f32.mrb[0].mxu0
      %v1242 = vadd.f32 %v1049, %v1241
      %v1243 = vpop.f32.mrb[0].mxu0
      %1244 = vmatprep.mubr.bf16.mxu0 0
      %1245 = vmatmul.mubr.bf16.gmra.mrb[0].mxu0 %v1106
      %v1246 = vpop.f32.mrb[0].mxu0
      %v1247 = vadd.f32 %v1054, %v1246
      %v1248 = vpop.f32.mrb[0].mxu0
      %v1249 = vpop.f32.mrb[0].mxu0
      %v1250 = vadd.f32 %v1057, %v1249
      %v1251 = vpop.f32.mrb[0].mxu0
      %1252 = vmatprep.mubr.bf16.mxu0 0
      %1253 = vmatmul.mubr.bf16.gmra.mrb[0].mxu0 %v1107
      %v1254 = vpop.f32.mrb[0].mxu0
      %v1255 = vadd.f32 %v1062, %v1254
      %v1256 = vpop.f32.mrb[0].mxu0
      %v1257 = vpop.f32.mrb[0].mxu0
      %v1258 = vadd.f32 %v1065, %v1257
      %v1259 = vpop.f32.mrb[0].mxu0
      %1260 = vdwg.mxu0
      %v1261 = vld [vmem:[%s332] sm:$0xe]
      %v1262 = vld [vmem:[%s332 + $0x8] sm:$0xe]
      %v1263 = vld [vmem:[%s332 + $0x10] sm:$0xe]
      %v1264 = vld [vmem:[%s332 + $0x18] sm:$0xe]
      %v1265 = vld [vmem:[%s332 + $0x20] sm:$0xe]
      %v1266 = vld [vmem:[%s332 + $0x28] sm:$0xe]
      %v1267 = vld [vmem:[%s332 + $0x30] sm:$0xe]
      %v1268 = vld [vmem:[%s332 + $0x38] sm:$0xe]
      %v1269 = vld [vmem:[%s332 + $0x50] sm:$0xe]
      %v1270 = vld [vmem:[%s332 + $0x58] sm:$0xe]
      %v1271 = vld [vmem:[%s332 + $0x60] sm:$0xe]
      %v1272 = vld [vmem:[%s332 + $0x68] sm:$0xe]
      %v1273 = vld [vmem:[%s332 + $0x70] sm:$0xe]
      %v1274 = vld [vmem:[%s332 + $0x78] sm:$0xe]
      %v1275 = vld [vmem:[%s332 + $0x80] sm:$0xe]
      %v1276 = vld [vmem:[%s332 + $0x88] sm:$0xe]
      %vm1309 = vcmask 1042432
      %vm1310 = vcmask 1046532
      %vm1311 = vmor %vm1309, %vm1310
      %v1312 = vrot.slane %v1261, 5
      %v1313 = vrot.slane %v1312, 4
      %v1314 = vrot.slane %v634, 5
      %v1315 = vsel %vm1311, %v1313, %v1314
      %v1316 = vrot.slane %v1262, 5
      %v1317 = vrot.slane %v1316, 4
      %v1318 = vrot.slane %v635, 5
      %v1319 = vsel %vm1311, %v1317, %v1318
      %v1320 = vrot.slane %v1263, 5
      %v1321 = vrot.slane %v1320, 4
      %v1322 = vrot.slane %v636, 5
      %v1323 = vsel %vm1311, %v1321, %v1322
      %v1324 = vrot.slane %v1264, 5
      %v1325 = vrot.slane %v1324, 4
      %v1326 = vrot.slane %v637, 5
      %v1327 = vsel %vm1311, %v1325, %v1326
      %v1328 = vrot.slane %v1265, 5
      %v1329 = vrot.slane %v1328, 4
      %v1330 = vrot.slane %v638, 5
      %v1331 = vsel %vm1311, %v1329, %v1330
      %v1332 = vrot.slane %v1266, 5
      %v1333 = vrot.slane %v1332, 4
      %v1334 = vrot.slane %v639, 5
      %v1335 = vsel %vm1311, %v1333, %v1334
      %v1336 = vrot.slane %v1267, 5
      %v1337 = vrot.slane %v1336, 4
      %v1338 = vrot.slane %v640, 5
      %v1339 = vsel %vm1311, %v1337, %v1338
      %v1340 = vrot.slane %v1268, 5
      %v1341 = vrot.slane %v1340, 4
      %v1342 = vrot.slane %v641, 5
      %v1343 = vsel %vm1311, %v1341, %v1342
      %v1344 = vrot.slane %v1269, 5
      %v1345 = vrot.slane %v1344, 4
      %v1346 = vrot.slane %v642, 5
      %v1347 = vsel %vm1311, %v1345, %v1346
      %v1348 = vrot.slane %v1270, 5
      %v1349 = vrot.slane %v1348, 4
      %v1350 = vrot.slane %v643, 5
      %v1351 = vsel %vm1311, %v1349, %v1350
      %v1352 = vrot.slane %v1271, 5
      %v1353 = vrot.slane %v1352, 4
      %v1354 = vrot.slane %v644, 5
      %v1355 = vsel %vm1311, %v1353, %v1354
      %v1356 = vrot.slane %v1272, 5
      %v1357 = vrot.slane %v1356, 4
      %v1358 = vrot.slane %v645, 5
      %v1359 = vsel %vm1311, %v1357, %v1358
      %v1360 = vrot.slane %v1273, 5
      %v1361 = vrot.slane %v1360, 4
      %v1362 = vrot.slane %v646, 5
      %v1363 = vsel %vm1311, %v1361, %v1362
      %v1364 = vrot.slane %v1274, 5
      %v1365 = vrot.slane %v1364, 4
      %v1366 = vrot.slane %v647, 5
      %v1367 = vsel %vm1311, %v1365, %v1366
      %v1368 = vrot.slane %v1275, 5
      %v1369 = vrot.slane %v1368, 4
      %v1370 = vrot.slane %v648, 5
      %v1371 = vsel %vm1311, %v1369, %v1370
      %v1372 = vrot.slane %v1276, 5
      %v1373 = vrot.slane %v1372, 4
      %v1374 = vrot.slane %v649, 5
      %v1375 = vsel %vm1311, %v1373, %v1374
      %s1376 = scalar_lea.vmem %s1, 128
      %v1377 = vld [vmem:[%s1376] sm:$0xf]
      %v1378 = vld [vmem:[%s1376 + $0x4] sm:$0xf]
      %v1379 = vld [vmem:[%s1376 + $0x8] sm:$0xf]
      %v1380 = vld [vmem:[%s1376 + $0xc] sm:$0xf]
      %v1381 = vld [vmem:[%s1376 + $0x10] sm:$0xf]
      %v1382 = vld [vmem:[%s1376 + $0x14] sm:$0xf]
      %v1383 = vld [vmem:[%s1376 + $0x18] sm:$0xf]
      %v1384 = vld [vmem:[%s1376 + $0x1c] sm:$0xf]
      %v1385 = vld [vmem:[%s1376 + $0x20] sm:$0xf]
      %v1386 = vld [vmem:[%s1376 + $0x24] sm:$0xf]
      %v1387 = vld [vmem:[%s1376 + $0x28] sm:$0xf]
      %v1388 = vld [vmem:[%s1376 + $0x2c] sm:$0xf]
      %v1389 = vld [vmem:[%s1376 + $0x30] sm:$0xf]
      %v1390 = vld [vmem:[%s1376 + $0x34] sm:$0xf]
      %v1391 = vld [vmem:[%s1376 + $0x38] sm:$0xf]
      %v1392 = vld [vmem:[%s1376 + $0x3c] sm:$0xf]
      %v1393 = vunpack.c.l.b16 %v1315
      %v1394 = vunpack.c.l.b16 %v1319
      %v1395 = vunpack.c.l.b16 %v1323
      %v1396 = vunpack.c.l.b16 %v1327
      %v1397 = vunpack.c.l.b16 %v1331
      %v1398 = vunpack.c.l.b16 %v1335
      %v1399 = vunpack.c.l.b16 %v1339
      %v1400 = vunpack.c.l.b16 %v1343
      %v1401 = vunpack.c.l.b16 %v1347
      %v1402 = vunpack.c.l.b16 %v1351
      %v1403 = vunpack.c.l.b16 %v1355
      %v1404 = vunpack.c.l.b16 %v1359
      %v1405 = vunpack.c.l.b16 %v1363
      %v1406 = vunpack.c.l.b16 %v1367
      %v1407 = vunpack.c.l.b16 %v1371
      %v1408 = vunpack.c.l.b16 %v1375
      %v1409 = vpack.c.b16 %v1394, %v1393
      %v1410 = vpack.c.b16 %v1396, %v1395
      %v1411 = vpack.c.b16 %v1398, %v1397
      %v1412 = vpack.c.b16 %v1400, %v1399
      %v1413 = vpack.c.b16 %v1402, %v1401
      %v1414 = vpack.c.b16 %v1404, %v1403
      %v1415 = vpack.c.b16 %v1406, %v1405
      %v1416 = vpack.c.b16 %v1408, %v1407
      %v1441 = vunpack.c.l.b16 %v1377
      %v1442 = vunpack.c.l.b16 %v1378
      %v1443 = vunpack.c.l.b16 %v1379
      %v1444 = vunpack.c.l.b16 %v1380
      %v1445 = vunpack.c.l.b16 %v1381
      %v1446 = vunpack.c.l.b16 %v1382
      %v1447 = vunpack.c.l.b16 %v1383
      %v1448 = vunpack.c.l.b16 %v1384
      %v1449 = vunpack.c.l.b16 %v1385
      %v1450 = vunpack.c.l.b16 %v1386
      %v1451 = vunpack.c.l.b16 %v1387
      %v1452 = vunpack.c.l.b16 %v1388
      %v1453 = vunpack.c.l.b16 %v1389
      %v1454 = vunpack.c.l.b16 %v1390
      %v1455 = vunpack.c.l.b16 %v1391
      %v1456 = vunpack.c.l.b16 %v1392
      %v1457 = vpack.c.b16 %v1442, %v1441
      %v1458 = vpack.c.b16 %v1444, %v1443
      %v1459 = vpack.c.b16 %v1446, %v1445
      %v1460 = vpack.c.b16 %v1448, %v1447
      %v1461 = vpack.c.b16 %v1450, %v1449
      %v1462 = vpack.c.b16 %v1452, %v1451
      %v1463 = vpack.c.b16 %v1454, %v1453
      %v1464 = vpack.c.b16 %v1456, %v1455
      %1473 = vmatprep.subr.bf16.mxu0 0
      %1474 = vmatpush1.bf16.msra.mxu0 %v1457
      %1475 = vmatprep.subr.bf16.mxu0 0
      %1476 = vmatpush1.bf16.msra.mxu0 %v1458
      %1477 = vmatprep.subr.bf16.mxu0 0
      %1478 = vmatpush1.bf16.msra.mxu0 %v1459
      %1479 = vmatprep.subr.bf16.mxu0 0
      %1480 = vmatpush1.bf16.msra.mxu0 %v1460
      %1481 = vmatprep.subr.bf16.mxu0 0
      %1482 = vmatpush1.bf16.msra.mxu0 %v1461
      %1483 = vmatprep.subr.bf16.mxu0 0
      %1484 = vmatpush1.bf16.msra.mxu0 %v1462
      %1485 = vmatprep.subr.bf16.mxu0 0
      %1486 = vmatpush1.bf16.msra.mxu0 %v1463
      %1487 = vmatprep.subr.bf16.mxu0 0
      %1488 = vmatpush1.bf16.msra.mxu0 %v1464
      %1489 = vmatprep.subr.bf16.mxu0 0
      %1490 = vmatpush1.bf16.msra.mxu0 0
      %1491 = vmatprep.subr.bf16.mxu0 0
      %1492 = vmatpush1.bf16.msra.mxu0 0
      %1493 = vmatprep.subr.bf16.mxu0 0
      %1494 = vmatpush1.bf16.msra.mxu0 0
      %1495 = vmatprep.subr.bf16.mxu0 0
      %1496 = vmatpush1.bf16.msra.mxu0 0
      %1497 = vmatprep.subr.bf16.mxu0 0
      %1498 = vmatpush1.bf16.msra.mxu0 0
      %1499 = vmatprep.subr.bf16.mxu0 0
      %1500 = vmatpush1.bf16.msra.mxu0 0
      %1501 = vmatprep.subr.bf16.mxu0 0
      %1502 = vmatpush1.bf16.msra.mxu0 0
      %1503 = vmatprep.subr.bf16.mxu0 0
      %1504 = vmatpush1.bf16.msra.mxu0 0
      %1505 = vmatprep.mubr.bf16.mxu0 0
      %1506 = vmatmul.mubr.bf16.gmra.mrb[0].mxu0 %v1409
      %v1507 = vpop.f32.mrb[0].mxu0
      %v1508 = vadd.f32 0.0, %v1507
      %v1509 = vpop.f32.mrb[0].mxu0
      %v1510 = vpop.f32.mrb[0].mxu0
      %v1511 = vadd.f32 0.0, %v1510
      %v1512 = vpop.f32.mrb[0].mxu0
      %1513 = vmatprep.mubr.bf16.mxu0 0
      %1514 = vmatmul.mubr.bf16.gmra.mrb[0].mxu0 %v1410
      %v1515 = vpop.f32.mrb[0].mxu0
      %v1516 = vadd.f32 0.0, %v1515
      %v1517 = vpop.f32.mrb[0].mxu0
      %v1518 = vpop.f32.mrb[0].mxu0
      %v1519 = vadd.f32 0.0, %v1518
      %v1520 = vpop.f32.mrb[0].mxu0
      %1521 = vmatprep.mubr.bf16.mxu0 0
      %1522 = vmatmul.mubr.bf16.gmra.mrb[0].mxu0 %v1411
      %v1523 = vpop.f32.mrb[0].mxu0
      %v1524 = vadd.f32 0.0, %v1523
      %v1525 = vpop.f32.mrb[0].mxu0
      %v1526 = vpop.f32.mrb[0].mxu0
      %v1527 = vadd.f32 0.0, %v1526
      %v1528 = vpop.f32.mrb[0].mxu0
      %1529 = vmatprep.mubr.bf16.mxu0 0
      %1530 = vmatmul.mubr.bf16.gmra.mrb[0].mxu0 %v1412
      %v1531 = vpop.f32.mrb[0].mxu0
      %v1532 = vadd.f32 0.0, %v1531
      %v1533 = vpop.f32.mrb[0].mxu0
      %v1534 = vpop.f32.mrb[0].mxu0
      %v1535 = vadd.f32 0.0, %v1534
      %v1536 = vpop.f32.mrb[0].mxu0
      %1537 = vmatprep.mubr.bf16.mxu0 0
      %1538 = vmatmul.mubr.bf16.gmra.mrb[0].mxu0 %v1413
      %v1539 = vpop.f32.mrb[0].mxu0
      %v1540 = vadd.f32 0.0, %v1539
      %v1541 = vpop.f32.mrb[0].mxu0
      %v1542 = vpop.f32.mrb[0].mxu0
      %v1543 = vadd.f32 0.0, %v1542
      %v1544 = vpop.f32.mrb[0].mxu0
      %1545 = vmatprep.mubr.bf16.mxu0 0
      %1546 = vmatmul.mubr.bf16.gmra.mrb[0].mxu0 %v1414
      %v1547 = vpop.f32.mrb[0].mxu0
      %v1548 = vadd.f32 0.0, %v1547
      %v1549 = vpop.f32.mrb[0].mxu0
      %v1550 = vpop.f32.mrb[0].mxu0
      %v1551 = vadd.f32 0.0, %v1550
      %v1552 = vpop.f32.mrb[0].mxu0
      %1553 = vmatprep.mubr.bf16.mxu0 0
      %1554 = vmatmul.mubr.bf16.gmra.mrb[0].mxu0 %v1415
      %v1555 = vpop.f32.mrb[0].mxu0
      %v1556 = vadd.f32 0.0, %v1555
      %v1557 = vpop.f32.mrb[0].mxu0
      %v1558 = vpop.f32.mrb[0].mxu0
      %v1559 = vadd.f32 0.0, %v1558
      %v1560 = vpop.f32.mrb[0].mxu0
      %1561 = vmatprep.mubr.bf16.mxu0 0
      %1562 = vmatmul.mubr.bf16.gmra.mrb[0].mxu0 %v1416
      %v1563 = vpop.f32.mrb[0].mxu0
      %v1564 = vadd.f32 0.0, %v1563
      %v1565 = vpop.f32.mrb[0].mxu0
      %v1566 = vpop.f32.mrb[0].mxu0
      %v1567 = vadd.f32 0.0, %v1566
      %v1568 = vpop.f32.mrb[0].mxu0
      %1569 = vdwg.mxu0
      %v1570 = vadd.f32 %v1199, %v1508
      %v1571 = vadd.f32 %v1202, %v1511
      %v1572 = vadd.f32 %v1207, %v1516
      %v1573 = vadd.f32 %v1210, %v1519
      %v1574 = vadd.f32 %v1215, %v1524
      %v1575 = vadd.f32 %v1218, %v1527
      %v1576 = vadd.f32 %v1223, %v1532
      %v1577 = vadd.f32 %v1226, %v1535
      %v1578 = vadd.f32 %v1231, %v1540
      %v1579 = vadd.f32 %v1234, %v1543
      %v1580 = vadd.f32 %v1239, %v1548
      %v1581 = vadd.f32 %v1242, %v1551
      %v1582 = vadd.f32 %v1247, %v1556
      %v1583 = vadd.f32 %v1250, %v1559
      %v1584 = vadd.f32 %v1255, %v1564
      %v1585 = vadd.f32 %v1258, %v1567
      %v1586 = vld [vmem:[%s342] sm:$0xf]
      %v1587 = vld [vmem:[%s342 + $0x8] sm:$0xf]
      %v1588 = vld [vmem:[%s342 + $0x10] sm:$0xf]
      %v1589 = vld [vmem:[%s342 + $0x18] sm:$0xf]
      %v1590 = vld [vmem:[%s342 + $0x20] sm:$0xf]
      %v1591 = vld [vmem:[%s342 + $0x28] sm:$0xf]
      %v1592 = vld [vmem:[%s342 + $0x30] sm:$0xf]
      %v1593 = vld [vmem:[%s342 + $0x38] sm:$0xf]
      %v1594 = vld [vmem:[%s342 + $0x50] sm:$0xf]
      %v1595 = vld [vmem:[%s342 + $0x58] sm:$0xf]
      %v1596 = vld [vmem:[%s342 + $0x60] sm:$0xf]
      %v1597 = vld [vmem:[%s342 + $0x68] sm:$0xf]
      %v1598 = vld [vmem:[%s342 + $0x70] sm:$0xf]
      %v1599 = vld [vmem:[%s342 + $0x78] sm:$0xf]
      %v1600 = vld [vmem:[%s342 + $0x80] sm:$0xf]
      %v1601 = vld [vmem:[%s342 + $0x88] sm:$0xf]
      %s1602 = scalar_lea.vmem %s1, 192
      %v1603 = vld [vmem:[%s1602] sm:$0xf]
      %v1604 = vld [vmem:[%s1602 + $0x4] sm:$0xf]
      %v1605 = vld [vmem:[%s1602 + $0x8] sm:$0xf]
      %v1606 = vld [vmem:[%s1602 + $0xc] sm:$0xf]
      %v1607 = vld [vmem:[%s1602 + $0x10] sm:$0xf]
      %v1608 = vld [vmem:[%s1602 + $0x14] sm:$0xf]
      %v1609 = vld [vmem:[%s1602 + $0x18] sm:$0xf]
      %v1610 = vld [vmem:[%s1602 + $0x1c] sm:$0xf]
      %v1611 = vld [vmem:[%s1602 + $0x20] sm:$0xf]
      %v1612 = vld [vmem:[%s1602 + $0x24] sm:$0xf]
      %v1613 = vld [vmem:[%s1602 + $0x28] sm:$0xf]
      %v1614 = vld [vmem:[%s1602 + $0x2c] sm:$0xf]
      %v1615 = vld [vmem:[%s1602 + $0x30] sm:$0xf]
      %v1616 = vld [vmem:[%s1602 + $0x34] sm:$0xf]
      %v1617 = vld [vmem:[%s1602 + $0x38] sm:$0xf]
      %v1618 = vld [vmem:[%s1602 + $0x3c] sm:$0xf]
      %v1635 = vunpack.c.l.b16 %v1586
      %v1636 = vunpack.c.l.b16 %v1587
      %v1637 = vunpack.c.l.b16 %v1588
      %v1638 = vunpack.c.l.b16 %v1589
      %v1639 = vunpack.c.l.b16 %v1590
      %v1640 = vunpack.c.l.b16 %v1591
      %v1641 = vunpack.c.l.b16 %v1592
      %v1642 = vunpack.c.l.b16 %v1593
      %v1643 = vunpack.c.l.b16 %v1594
      %v1644 = vunpack.c.l.b16 %v1595
      %v1645 = vunpack.c.l.b16 %v1596
      %v1646 = vunpack.c.l.b16 %v1597
      %v1647 = vunpack.c.l.b16 %v1598
      %v1648 = vunpack.c.l.b16 %v1599
      %v1649 = vunpack.c.l.b16 %v1600
      %v1650 = vunpack.c.l.b16 %v1601
      %v1651 = vpack.c.b16 %v1636, %v1635
      %v1652 = vpack.c.b16 %v1638, %v1637
      %v1653 = vpack.c.b16 %v1640, %v1639
      %v1654 = vpack.c.b16 %v1642, %v1641
      %v1655 = vpack.c.b16 %v1644, %v1643
      %v1656 = vpack.c.b16 %v1646, %v1645
      %v1657 = vpack.c.b16 %v1648, %v1647
      %v1658 = vpack.c.b16 %v1650, %v1649
      %v1683 = vunpack.c.l.b16 %v1603
      %v1684 = vunpack.c.l.b16 %v1604
      %v1685 = vunpack.c.l.b16 %v1605
      %v1686 = vunpack.c.l.b16 %v1606
      %v1687 = vunpack.c.l.b16 %v1607
      %v1688 = vunpack.c.l.b16 %v1608
      %v1689 = vunpack.c.l.b16 %v1609
      %v1690 = vunpack.c.l.b16 %v1610
      %v1691 = vunpack.c.l.b16 %v1611
      %v1692 = vunpack.c.l.b16 %v1612
      %v1693 = vunpack.c.l.b16 %v1613
      %v1694 = vunpack.c.l.b16 %v1614
      %v1695 = vunpack.c.l.b16 %v1615
      %v1696 = vunpack.c.l.b16 %v1616
      %v1697 = vunpack.c.l.b16 %v1617
      %v1698 = vunpack.c.l.b16 %v1618
      %v1699 = vpack.c.b16 %v1684, %v1683
      %v1700 = vpack.c.b16 %v1686, %v1685
      %v1701 = vpack.c.b16 %v1688, %v1687
      %v1702 = vpack.c.b16 %v1690, %v1689
      %v1703 = vpack.c.b16 %v1692, %v1691
      %v1704 = vpack.c.b16 %v1694, %v1693
      %v1705 = vpack.c.b16 %v1696, %v1695
      %v1706 = vpack.c.b16 %v1698, %v1697
      %1715 = vmatprep.subr.bf16.mxu0 0
      %1716 = vmatpush1.bf16.msra.mxu0 %v1699
      %1717 = vmatprep.subr.bf16.mxu0 0
      %1718 = vmatpush1.bf16.msra.mxu0 %v1700
      %1719 = vmatprep.subr.bf16.mxu0 0
      %1720 = vmatpush1.bf16.msra.mxu0 %v1701
      %1721 = vmatprep.subr.bf16.mxu0 0
      %1722 = vmatpush1.bf16.msra.mxu0 %v1702
      %1723 = vmatprep.subr.bf16.mxu0 0
      %1724 = vmatpush1.bf16.msra.mxu0 %v1703
      %1725 = vmatprep.subr.bf16.mxu0 0
      %1726 = vmatpush1.bf16.msra.mxu0 %v1704
      %1727 = vmatprep.subr.bf16.mxu0 0
      %1728 = vmatpush1.bf16.msra.mxu0 %v1705
      %1729 = vmatprep.subr.bf16.mxu0 0
      %1730 = vmatpush1.bf16.msra.mxu0 %v1706
      %1731 = vmatprep.subr.bf16.mxu0 0
      %1732 = vmatpush1.bf16.msra.mxu0 0
      %1733 = vmatprep.subr.bf16.mxu0 0
      %1734 = vmatpush1.bf16.msra.mxu0 0
      %1735 = vmatprep.subr.bf16.mxu0 0
      %1736 = vmatpush1.bf16.msra.mxu0 0
      %1737 = vmatprep.subr.bf16.mxu0 0
      %1738 = vmatpush1.bf16.msra.mxu0 0
      %1739 = vmatprep.subr.bf16.mxu0 0
      %1740 = vmatpush1.bf16.msra.mxu0 0
      %1741 = vmatprep.subr.bf16.mxu0 0
      %1742 = vmatpush1.bf16.msra.mxu0 0
      %1743 = vmatprep.subr.bf16.mxu0 0
      %1744 = vmatpush1.bf16.msra.mxu0 0
      %1745 = vmatprep.subr.bf16.mxu0 0
      %1746 = vmatpush1.bf16.msra.mxu0 0
      %1747 = vmatprep.mubr.bf16.mxu0 0
      %1748 = vmatmul.mubr.bf16.gmra.mrb[0].mxu0 %v1651
      %v1749 = vpop.f32.mrb[0].mxu0
      %v1750 = vadd.f32 0.0, %v1749
      %v1751 = vpop.f32.mrb[0].mxu0
      %v1752 = vpop.f32.mrb[0].mxu0
      %v1753 = vadd.f32 0.0, %v1752
      %v1754 = vpop.f32.mrb[0].mxu0
      %1755 = vmatprep.mubr.bf16.mxu0 0
      %1756 = vmatmul.mubr.bf16.gmra.mrb[0].mxu0 %v1652
      %v1757 = vpop.f32.mrb[0].mxu0
      %v1758 = vadd.f32 0.0, %v1757
      %v1759 = vpop.f32.mrb[0].mxu0
      %v1760 = vpop.f32.mrb[0].mxu0
      %v1761 = vadd.f32 0.0, %v1760
      %v1762 = vpop.f32.mrb[0].mxu0
      %1763 = vmatprep.mubr.bf16.mxu0 0
      %1764 = vmatmul.mubr.bf16.gmra.mrb[0].mxu0 %v1653
      %v1765 = vpop.f32.mrb[0].mxu0
      %v1766 = vadd.f32 0.0, %v1765
      %v1767 = vpop.f32.mrb[0].mxu0
      %v1768 = vpop.f32.mrb[0].mxu0
      %v1769 = vadd.f32 0.0, %v1768
      %v1770 = vpop.f32.mrb[0].mxu0
      %1771 = vmatprep.mubr.bf16.mxu0 0
      %1772 = vmatmul.mubr.bf16.gmra.mrb[0].mxu0 %v1654
      %v1773 = vpop.f32.mrb[0].mxu0
      %v1774 = vadd.f32 0.0, %v1773
      %v1775 = vpop.f32.mrb[0].mxu0
      %v1776 = vpop.f32.mrb[0].mxu0
      %v1777 = vadd.f32 0.0, %v1776
      %v1778 = vpop.f32.mrb[0].mxu0
      %1779 = vmatprep.mubr.bf16.mxu0 0
      %1780 = vmatmul.mubr.bf16.gmra.mrb[0].mxu0 %v1655
      %v1781 = vpop.f32.mrb[0].mxu0
      %v1782 = vadd.f32 0.0, %v1781
      %v1783 = vpop.f32.mrb[0].mxu0
      %v1784 = vpop.f32.mrb[0].mxu0
      %v1785 = vadd.f32 0.0, %v1784
      %v1786 = vpop.f32.mrb[0].mxu0
      %1787 = vmatprep.mubr.bf16.mxu0 0
      %1788 = vmatmul.mubr.bf16.gmra.mrb[0].mxu0 %v1656
      %v1789 = vpop.f32.mrb[0].mxu0
      %v1790 = vadd.f32 0.0, %v1789
      %v1791 = vpop.f32.mrb[0].mxu0
      %v1792 = vpop.f32.mrb[0].mxu0
      %v1793 = vadd.f32 0.0, %v1792
      %v1794 = vpop.f32.mrb[0].mxu0
      %1795 = vmatprep.mubr.bf16.mxu0 0
      %1796 = vmatmul.mubr.bf16.gmra.mrb[0].mxu0 %v1657
      %v1797 = vpop.f32.mrb[0].mxu0
      %v1798 = vadd.f32 0.0, %v1797
      %v1799 = vpop.f32.mrb[0].mxu0
      %v1800 = vpop.f32.mrb[0].mxu0
      %v1801 = vadd.f32 0.0, %v1800
      %v1802 = vpop.f32.mrb[0].mxu0
      %1803 = vmatprep.mubr.bf16.mxu0 0
      %1804 = vmatmul.mubr.bf16.gmra.mrb[0].mxu0 %v1658
      %v1805 = vpop.f32.mrb[0].mxu0
      %v1806 = vadd.f32 0.0, %v1805
      %v1807 = vpop.f32.mrb[0].mxu0
      %v1808 = vpop.f32.mrb[0].mxu0
      %v1809 = vadd.f32 0.0, %v1808
      %v1810 = vpop.f32.mrb[0].mxu0
      %1811 = vdwg.mxu0
      %v1812 = vadd.f32 %v1570, %v1750
      %v1813 = vadd.f32 %v1571, %v1753
      %v1814 = vadd.f32 %v1572, %v1758
      %v1815 = vadd.f32 %v1573, %v1761
      %v1816 = vadd.f32 %v1574, %v1766
      %v1817 = vadd.f32 %v1575, %v1769
      %v1818 = vadd.f32 %v1576, %v1774
      %v1819 = vadd.f32 %v1577, %v1777
      %v1820 = vadd.f32 %v1578, %v1782
      %v1821 = vadd.f32 %v1579, %v1785
      %v1822 = vadd.f32 %v1580, %v1790
      %v1823 = vadd.f32 %v1581, %v1793
      %v1824 = vadd.f32 %v1582, %v1798
      %v1825 = vadd.f32 %v1583, %v1801
      %v1826 = vadd.f32 %v1584, %v1806
      %v1827 = vadd.f32 %v1585, %v1809
      %s1828 = scalar_lea.vmem %s1, 256
      %v1829 = vld [vmem:[%s1828] sm:$0xf]
      %v1830 = vld [vmem:[%s1828 + $0x4] sm:$0xf]
      %v1831 = vld [vmem:[%s1828 + $0x8] sm:$0xf]
      %v1832 = vld [vmem:[%s1828 + $0xc] sm:$0xf]
      %v1833 = vld [vmem:[%s1828 + $0x10] sm:$0xf]
      %v1834 = vld [vmem:[%s1828 + $0x14] sm:$0xf]
      %v1835 = vld [vmem:[%s1828 + $0x18] sm:$0xf]
      %v1836 = vld [vmem:[%s1828 + $0x1c] sm:$0xf]
      %v1837 = vld [vmem:[%s1828 + $0x20] sm:$0xf]
      %v1838 = vld [vmem:[%s1828 + $0x24] sm:$0xf]
      %v1839 = vld [vmem:[%s1828 + $0x28] sm:$0xf]
      %v1840 = vld [vmem:[%s1828 + $0x2c] sm:$0xf]
      %v1841 = vld [vmem:[%s1828 + $0x30] sm:$0xf]
      %v1842 = vld [vmem:[%s1828 + $0x34] sm:$0xf]
      %v1843 = vld [vmem:[%s1828 + $0x38] sm:$0xf]
      %v1844 = vld [vmem:[%s1828 + $0x3c] sm:$0xf]
      %v1845 = vunpack.c.l.b16 %v391
      %v1846 = vunpack.c.l.b16 %v405
      %v1847 = vunpack.c.l.b16 %v419
      %v1848 = vunpack.c.l.b16 %v433
      %v1849 = vunpack.c.l.b16 %v447
      %v1850 = vunpack.c.l.b16 %v461
      %v1851 = vunpack.c.l.b16 %v475
      %v1852 = vunpack.c.l.b16 %v489
      %v1853 = vunpack.c.l.b16 %v503
      %v1854 = vunpack.c.l.b16 %v517
      %v1855 = vunpack.c.l.b16 %v531
      %v1856 = vunpack.c.l.b16 %v545
      %v1857 = vunpack.c.l.b16 %v559
      %v1858 = vunpack.c.l.b16 %v573
      %v1859 = vunpack.c.l.b16 %v587
      %v1860 = vunpack.c.l.b16 %v601
      %v1861 = vpack.c.b16 %v1846, %v1845
      %v1862 = vpack.c.b16 %v1848, %v1847
      %v1863 = vpack.c.b16 %v1850, %v1849
      %v1864 = vpack.c.b16 %v1852, %v1851
      %v1865 = vpack.c.b16 %v1854, %v1853
      %v1866 = vpack.c.b16 %v1856, %v1855
      %v1867 = vpack.c.b16 %v1858, %v1857
      %v1868 = vpack.c.b16 %v1860, %v1859
      %v1893 = vunpack.c.l.b16 %v1829
      %v1894 = vunpack.c.l.b16 %v1830
      %v1895 = vunpack.c.l.b16 %v1831
      %v1896 = vunpack.c.l.b16 %v1832
      %v1897 = vunpack.c.l.b16 %v1833
      %v1898 = vunpack.c.l.b16 %v1834
      %v1899 = vunpack.c.l.b16 %v1835
      %v1900 = vunpack.c.l.b16 %v1836
      %v1901 = vunpack.c.l.b16 %v1837
      %v1902 = vunpack.c.l.b16 %v1838
      %v1903 = vunpack.c.l.b16 %v1839
      %v1904 = vunpack.c.l.b16 %v1840
      %v1905 = vunpack.c.l.b16 %v1841
      %v1906 = vunpack.c.l.b16 %v1842
      %v1907 = vunpack.c.l.b16 %v1843
      %v1908 = vunpack.c.l.b16 %v1844
      %v1909 = vpack.c.b16 %v1894, %v1893
      %v1910 = vpack.c.b16 %v1896, %v1895
      %v1911 = vpack.c.b16 %v1898, %v1897
      %v1912 = vpack.c.b16 %v1900, %v1899
      %v1913 = vpack.c.b16 %v1902, %v1901
      %v1914 = vpack.c.b16 %v1904, %v1903
      %v1915 = vpack.c.b16 %v1906, %v1905
      %v1916 = vpack.c.b16 %v1908, %v1907
      %1925 = vmatprep.subr.bf16.mxu0 0
      %1926 = vmatpush1.bf16.msra.mxu0 %v1909
      %1927 = vmatprep.subr.bf16.mxu0 0
      %1928 = vmatpush1.bf16.msra.mxu0 %v1910
      %1929 = vmatprep.subr.bf16.mxu0 0
      %1930 = vmatpush1.bf16.msra.mxu0 %v1911
      %1931 = vmatprep.subr.bf16.mxu0 0
      %1932 = vmatpush1.bf16.msra.mxu0 %v1912
      %1933 = vmatprep.subr.bf16.mxu0 0
      %1934 = vmatpush1.bf16.msra.mxu0 %v1913
      %1935 = vmatprep.subr.bf16.mxu0 0
      %1936 = vmatpush1.bf16.msra.mxu0 %v1914
      %1937 = vmatprep.subr.bf16.mxu0 0
      %1938 = vmatpush1.bf16.msra.mxu0 %v1915
      %1939 = vmatprep.subr.bf16.mxu0 0
      %1940 = vmatpush1.bf16.msra.mxu0 %v1916
      %1941 = vmatprep.subr.bf16.mxu0 0
      %1942 = vmatpush1.bf16.msra.mxu0 0
      %1943 = vmatprep.subr.bf16.mxu0 0
      %1944 = vmatpush1.bf16.msra.mxu0 0
      %1945 = vmatprep.subr.bf16.mxu0 0
      %1946 = vmatpush1.bf16.msra.mxu0 0
      %1947 = vmatprep.subr.bf16.mxu0 0
      %1948 = vmatpush1.bf16.msra.mxu0 0
      %1949 = vmatprep.subr.bf16.mxu0 0
      %1950 = vmatpush1.bf16.msra.mxu0 0
      %1951 = vmatprep.subr.bf16.mxu0 0
      %1952 = vmatpush1.bf16.msra.mxu0 0
      %1953 = vmatprep.subr.bf16.mxu0 0
      %1954 = vmatpush1.bf16.msra.mxu0 0
      %1955 = vmatprep.subr.bf16.mxu0 0
      %1956 = vmatpush1.bf16.msra.mxu0 0
      %1957 = vmatprep.mubr.bf16.mxu0 0
      %1958 = vmatmul.mubr.bf16.gmra.mrb[0].mxu0 %v1861
      %v1959 = vpop.f32.mrb[0].mxu0
      %v1960 = vadd.f32 0.0, %v1959
      %v1961 = vpop.f32.mrb[0].mxu0
      %v1962 = vpop.f32.mrb[0].mxu0
      %v1963 = vadd.f32 0.0, %v1962
      %v1964 = vpop.f32.mrb[0].mxu0
      %1965 = vmatprep.mubr.bf16.mxu0 0
      %1966 = vmatmul.mubr.bf16.gmra.mrb[0].mxu0 %v1862
      %v1967 = vpop.f32.mrb[0].mxu0
      %v1968 = vadd.f32 0.0, %v1967
      %v1969 = vpop.f32.mrb[0].mxu0
      %v1970 = vpop.f32.mrb[0].mxu0
      %v1971 = vadd.f32 0.0, %v1970
      %v1972 = vpop.f32.mrb[0].mxu0
      %1973 = vmatprep.mubr.bf16.mxu0 0
      %1974 = vmatmul.mubr.bf16.gmra.mrb[0].mxu0 %v1863
      %v1975 = vpop.f32.mrb[0].mxu0
      %v1976 = vadd.f32 0.0, %v1975
      %v1977 = vpop.f32.mrb[0].mxu0
      %v1978 = vpop.f32.mrb[0].mxu0
      %v1979 = vadd.f32 0.0, %v1978
      %v1980 = vpop.f32.mrb[0].mxu0
      %1981 = vmatprep.mubr.bf16.mxu0 0
      %1982 = vmatmul.mubr.bf16.gmra.mrb[0].mxu0 %v1864
      %v1983 = vpop.f32.mrb[0].mxu0
      %v1984 = vadd.f32 0.0, %v1983
      %v1985 = vpop.f32.mrb[0].mxu0
      %v1986 = vpop.f32.mrb[0].mxu0
      %v1987 = vadd.f32 0.0, %v1986
      %v1988 = vpop.f32.mrb[0].mxu0
      %1989 = vmatprep.mubr.bf16.mxu0 0
      %1990 = vmatmul.mubr.bf16.gmra.mrb[0].mxu0 %v1865
      %v1991 = vpop.f32.mrb[0].mxu0
      %v1992 = vadd.f32 0.0, %v1991
      %v1993 = vpop.f32.mrb[0].mxu0
      %v1994 = vpop.f32.mrb[0].mxu0
      %v1995 = vadd.f32 0.0, %v1994
      %v1996 = vpop.f32.mrb[0].mxu0
      %1997 = vmatprep.mubr.bf16.mxu0 0
      %1998 = vmatmul.mubr.bf16.gmra.mrb[0].mxu0 %v1866
      %v1999 = vpop.f32.mrb[0].mxu0
      %v2000 = vadd.f32 0.0, %v1999
      %v2001 = vpop.f32.mrb[0].mxu0
      %v2002 = vpop.f32.mrb[0].mxu0
      %v2003 = vadd.f32 0.0, %v2002
      %v2004 = vpop.f32.mrb[0].mxu0
      %2005 = vmatprep.mubr.bf16.mxu0 0
      %2006 = vmatmul.mubr.bf16.gmra.mrb[0].mxu0 %v1867
      %v2007 = vpop.f32.mrb[0].mxu0
      %v2008 = vadd.f32 0.0, %v2007
      %v2009 = vpop.f32.mrb[0].mxu0
      %v2010 = vpop.f32.mrb[0].mxu0
      %v2011 = vadd.f32 0.0, %v2010
      %v2012 = vpop.f32.mrb[0].mxu0
      %2013 = vmatprep.mubr.bf16.mxu0 0
      %2014 = vmatmul.mubr.bf16.gmra.mrb[0].mxu0 %v1868
      %v2015 = vpop.f32.mrb[0].mxu0
      %v2016 = vadd.f32 0.0, %v2015
      %v2017 = vpop.f32.mrb[0].mxu0
      %v2018 = vpop.f32.mrb[0].mxu0
      %v2019 = vadd.f32 0.0, %v2018
      %v2020 = vpop.f32.mrb[0].mxu0
      %2021 = vdwg.mxu0
      %v2022 = vadd.f32 %v1812, %v1960
      %v2023 = vadd.f32 %v1813, %v1963
      %v2024 = vadd.f32 %v1814, %v1968
      %v2025 = vadd.f32 %v1815, %v1971
      %v2026 = vadd.f32 %v1816, %v1976
      %v2027 = vadd.f32 %v1817, %v1979
      %v2028 = vadd.f32 %v1818, %v1984
      %v2029 = vadd.f32 %v1819, %v1987
      %v2030 = vadd.f32 %v1820, %v1992
      %v2031 = vadd.f32 %v1821, %v1995
      %v2032 = vadd.f32 %v1822, %v2000
      %v2033 = vadd.f32 %v1823, %v2003
      %v2034 = vadd.f32 %v1824, %v2008
      %v2035 = vadd.f32 %v1825, %v2011
      %v2036 = vadd.f32 %v1826, %v2016
      %v2037 = vadd.f32 %v1827, %v2019
      %v2038 = vld [vmem:[%s342] sm:$0xe]
      %v2039 = vld [vmem:[%s342 + $0x8] sm:$0xe]
      %v2040 = vld [vmem:[%s342 + $0x10] sm:$0xe]
      %v2041 = vld [vmem:[%s342 + $0x18] sm:$0xe]
      %v2042 = vld [vmem:[%s342 + $0x20] sm:$0xe]
      %v2043 = vld [vmem:[%s342 + $0x28] sm:$0xe]
      %v2044 = vld [vmem:[%s342 + $0x30] sm:$0xe]
      %v2045 = vld [vmem:[%s342 + $0x38] sm:$0xe]
      %v2046 = vld [vmem:[%s342 + $0x50] sm:$0xe]
      %v2047 = vld [vmem:[%s342 + $0x58] sm:$0xe]
      %v2048 = vld [vmem:[%s342 + $0x60] sm:$0xe]
      %v2049 = vld [vmem:[%s342 + $0x68] sm:$0xe]
      %v2050 = vld [vmem:[%s342 + $0x70] sm:$0xe]
      %v2051 = vld [vmem:[%s342 + $0x78] sm:$0xe]
      %v2052 = vld [vmem:[%s342 + $0x80] sm:$0xe]
      %v2053 = vld [vmem:[%s342 + $0x88] sm:$0xe]
      %v2086 = vrot.slane %v2038, 5
      %v2087 = vrot.slane %v2086, 4
      %v2088 = vrot.slane %v344, 5
      %v2089 = vsel %vm1311, %v2087, %v2088
      %v2090 = vrot.slane %v2039, 5
      %v2091 = vrot.slane %v2090, 4
      %v2092 = vrot.slane %v346, 5
      %v2093 = vsel %vm1311, %v2091, %v2092
      %v2094 = vrot.slane %v2040, 5
      %v2095 = vrot.slane %v2094, 4
      %v2096 = vrot.slane %v348, 5
      %v2097 = vsel %vm1311, %v2095, %v2096
      %v2098 = vrot.slane %v2041, 5
      %v2099 = vrot.slane %v2098, 4
      %v2100 = vrot.slane %v350, 5
      %v2101 = vsel %vm1311, %v2099, %v2100
      %v2102 = vrot.slane %v2042, 5
      %v2103 = vrot.slane %v2102, 4
      %v2104 = vrot.slane %v352, 5
      %v2105 = vsel %vm1311, %v2103, %v2104
      %v2106 = vrot.slane %v2043, 5
      %v2107 = vrot.slane %v2106, 4
      %v2108 = vrot.slane %v354, 5
      %v2109 = vsel %vm1311, %v2107, %v2108
      %v2110 = vrot.slane %v2044, 5
      %v2111 = vrot.slane %v2110, 4
      %v2112 = vrot.slane %v356, 5
      %v2113 = vsel %vm1311, %v2111, %v2112
      %v2114 = vrot.slane %v2045, 5
      %v2115 = vrot.slane %v2114, 4
      %v2116 = vrot.slane %v358, 5
      %v2117 = vsel %vm1311, %v2115, %v2116
      %v2118 = vrot.slane %v2046, 5
      %v2119 = vrot.slane %v2118, 4
      %v2120 = vrot.slane %v360, 5
      %v2121 = vsel %vm1311, %v2119, %v2120
      %v2122 = vrot.slane %v2047, 5
      %v2123 = vrot.slane %v2122, 4
      %v2124 = vrot.slane %v362, 5
      %v2125 = vsel %vm1311, %v2123, %v2124
      %v2126 = vrot.slane %v2048, 5
      %v2127 = vrot.slane %v2126, 4
      %v2128 = vrot.slane %v364, 5
      %v2129 = vsel %vm1311, %v2127, %v2128
      %v2130 = vrot.slane %v2049, 5
      %v2131 = vrot.slane %v2130, 4
      %v2132 = vrot.slane %v366, 5
      %v2133 = vsel %vm1311, %v2131, %v2132
      %v2134 = vrot.slane %v2050, 5
      %v2135 = vrot.slane %v2134, 4
      %v2136 = vrot.slane %v368, 5
      %v2137 = vsel %vm1311, %v2135, %v2136
      %v2138 = vrot.slane %v2051, 5
      %v2139 = vrot.slane %v2138, 4
      %v2140 = vrot.slane %v370, 5
      %v2141 = vsel %vm1311, %v2139, %v2140
      %v2142 = vrot.slane %v2052, 5
      %v2143 = vrot.slane %v2142, 4
      %v2144 = vrot.slane %v372, 5
      %v2145 = vsel %vm1311, %v2143, %v2144
      %v2146 = vrot.slane %v2053, 5
      %v2147 = vrot.slane %v2146, 4
      %v2148 = vrot.slane %v374, 5
      %v2149 = vsel %vm1311, %v2147, %v2148
      %s2150 = scalar_lea.vmem %s1, 320
      %v2151 = vld [vmem:[%s2150] sm:$0xf]
      %v2152 = vld [vmem:[%s2150 + $0x4] sm:$0xf]
      %v2153 = vld [vmem:[%s2150 + $0x8] sm:$0xf]
      %v2154 = vld [vmem:[%s2150 + $0xc] sm:$0xf]
      %v2155 = vld [vmem:[%s2150 + $0x10] sm:$0xf]
      %v2156 = vld [vmem:[%s2150 + $0x14] sm:$0xf]
      %v2157 = vld [vmem:[%s2150 + $0x18] sm:$0xf]
      %v2158 = vld [vmem:[%s2150 + $0x1c] sm:$0xf]
      %v2159 = vld [vmem:[%s2150 + $0x20] sm:$0xf]
      %v2160 = vld [vmem:[%s2150 + $0x24] sm:$0xf]
      %v2161 = vld [vmem:[%s2150 + $0x28] sm:$0xf]
      %v2162 = vld [vmem:[%s2150 + $0x2c] sm:$0xf]
      %v2163 = vld [vmem:[%s2150 + $0x30] sm:$0xf]
      %v2164 = vld [vmem:[%s2150 + $0x34] sm:$0xf]
      %v2165 = vld [vmem:[%s2150 + $0x38] sm:$0xf]
      %v2166 = vld [vmem:[%s2150 + $0x3c] sm:$0xf]
      %v2167 = vunpack.c.l.b16 %v2089
      %v2168 = vunpack.c.l.b16 %v2093
      %v2169 = vunpack.c.l.b16 %v2097
      %v2170 = vunpack.c.l.b16 %v2101
      %v2171 = vunpack.c.l.b16 %v2105
      %v2172 = vunpack.c.l.b16 %v2109
      %v2173 = vunpack.c.l.b16 %v2113
      %v2174 = vunpack.c.l.b16 %v2117
      %v2175 = vunpack.c.l.b16 %v2121
      %v2176 = vunpack.c.l.b16 %v2125
      %v2177 = vunpack.c.l.b16 %v2129
      %v2178 = vunpack.c.l.b16 %v2133
      %v2179 = vunpack.c.l.b16 %v2137
      %v2180 = vunpack.c.l.b16 %v2141
      %v2181 = vunpack.c.l.b16 %v2145
      %v2182 = vunpack.c.l.b16 %v2149
      %v2183 = vpack.c.b16 %v2168, %v2167
      %v2184 = vpack.c.b16 %v2170, %v2169
      %v2185 = vpack.c.b16 %v2172, %v2171
      %v2186 = vpack.c.b16 %v2174, %v2173
      %v2187 = vpack.c.b16 %v2176, %v2175
      %v2188 = vpack.c.b16 %v2178, %v2177
      %v2189 = vpack.c.b16 %v2180, %v2179
      %v2190 = vpack.c.b16 %v2182, %v2181
      %v2215 = vunpack.c.l.b16 %v2151
      %v2216 = vunpack.c.l.b16 %v2152
      %v2217 = vunpack.c.l.b16 %v2153
      %v2218 = vunpack.c.l.b16 %v2154
      %v2219 = vunpack.c.l.b16 %v2155
      %v2220 = vunpack.c.l.b16 %v2156
      %v2221 = vunpack.c.l.b16 %v2157
      %v2222 = vunpack.c.l.b16 %v2158
      %v2223 = vunpack.c.l.b16 %v2159
      %v2224 = vunpack.c.l.b16 %v2160
      %v2225 = vunpack.c.l.b16 %v2161
      %v2226 = vunpack.c.l.b16 %v2162
      %v2227 = vunpack.c.l.b16 %v2163
      %v2228 = vunpack.c.l.b16 %v2164
      %v2229 = vunpack.c.l.b16 %v2165
      %v2230 = vunpack.c.l.b16 %v2166
      %v2231 = vpack.c.b16 %v2216, %v2215
      %v2232 = vpack.c.b16 %v2218, %v2217
      %v2233 = vpack.c.b16 %v2220, %v2219
      %v2234 = vpack.c.b16 %v2222, %v2221
      %v2235 = vpack.c.b16 %v2224, %v2223
      %v2236 = vpack.c.b16 %v2226, %v2225
      %v2237 = vpack.c.b16 %v2228, %v2227
      %v2238 = vpack.c.b16 %v2230, %v2229
      %2247 = vmatprep.subr.bf16.mxu0 0
      %2248 = vmatpush1.bf16.msra.mxu0 %v2231
      %2249 = vmatprep.subr.bf16.mxu0 0
      %2250 = vmatpush1.bf16.msra.mxu0 %v2232
      %2251 = vmatprep.subr.bf16.mxu0 0
      %2252 = vmatpush1.bf16.msra.mxu0 %v2233
      %2253 = vmatprep.subr.bf16.mxu0 0
      %2254 = vmatpush1.bf16.msra.mxu0 %v2234
      %2255 = vmatprep.subr.bf16.mxu0 0
      %2256 = vmatpush1.bf16.msra.mxu0 %v2235
      %2257 = vmatprep.subr.bf16.mxu0 0
      %2258 = vmatpush1.bf16.msra.mxu0 %v2236
      %2259 = vmatprep.subr.bf16.mxu0 0
      %2260 = vmatpush1.bf16.msra.mxu0 %v2237
      %2261 = vmatprep.subr.bf16.mxu0 0
      %2262 = vmatpush1.bf16.msra.mxu0 %v2238
      %2263 = vmatprep.subr.bf16.mxu0 0
      %2264 = vmatpush1.bf16.msra.mxu0 0
      %2265 = vmatprep.subr.bf16.mxu0 0
      %2266 = vmatpush1.bf16.msra.mxu0 0
      %2267 = vmatprep.subr.bf16.mxu0 0
      %2268 = vmatpush1.bf16.msra.mxu0 0
      %2269 = vmatprep.subr.bf16.mxu0 0
      %2270 = vmatpush1.bf16.msra.mxu0 0
      %2271 = vmatprep.subr.bf16.mxu0 0
      %2272 = vmatpush1.bf16.msra.mxu0 0
      %2273 = vmatprep.subr.bf16.mxu0 0
      %2274 = vmatpush1.bf16.msra.mxu0 0
      %2275 = vmatprep.subr.bf16.mxu0 0
      %2276 = vmatpush1.bf16.msra.mxu0 0
      %2277 = vmatprep.subr.bf16.mxu0 0
      %2278 = vmatpush1.bf16.msra.mxu0 0
      %2279 = vmatprep.mubr.bf16.mxu0 0
      %2280 = vmatmul.mubr.bf16.gmra.mrb[0].mxu0 %v2183
      %v2281 = vpop.f32.mrb[0].mxu0
      %v2282 = vadd.f32 0.0, %v2281
      %v2283 = vpop.f32.mrb[0].mxu0
      %v2284 = vpop.f32.mrb[0].mxu0
      %v2285 = vadd.f32 0.0, %v2284
      %v2286 = vpop.f32.mrb[0].mxu0
      %2287 = vmatprep.mubr.bf16.mxu0 0
      %2288 = vmatmul.mubr.bf16.gmra.mrb[0].mxu0 %v2184
      %v2289 = vpop.f32.mrb[0].mxu0
      %v2290 = vadd.f32 0.0, %v2289
      %v2291 = vpop.f32.mrb[0].mxu0
      %v2292 = vpop.f32.mrb[0].mxu0
      %v2293 = vadd.f32 0.0, %v2292
      %v2294 = vpop.f32.mrb[0].mxu0
      %2295 = vmatprep.mubr.bf16.mxu0 0
      %2296 = vmatmul.mubr.bf16.gmra.mrb[0].mxu0 %v2185
      %v2297 = vpop.f32.mrb[0].mxu0
      %v2298 = vadd.f32 0.0, %v2297
      %v2299 = vpop.f32.mrb[0].mxu0
      %v2300 = vpop.f32.mrb[0].mxu0
      %v2301 = vadd.f32 0.0, %v2300
      %v2302 = vpop.f32.mrb[0].mxu0
      %2303 = vmatprep.mubr.bf16.mxu0 0
      %2304 = vmatmul.mubr.bf16.gmra.mrb[0].mxu0 %v2186
      %v2305 = vpop.f32.mrb[0].mxu0
      %v2306 = vadd.f32 0.0, %v2305
      %v2307 = vpop.f32.mrb[0].mxu0
      %v2308 = vpop.f32.mrb[0].mxu0
      %v2309 = vadd.f32 0.0, %v2308
      %v2310 = vpop.f32.mrb[0].mxu0
      %2311 = vmatprep.mubr.bf16.mxu0 0
      %2312 = vmatmul.mubr.bf16.gmra.mrb[0].mxu0 %v2187
      %v2313 = vpop.f32.mrb[0].mxu0
      %v2314 = vadd.f32 0.0, %v2313
      %v2315 = vpop.f32.mrb[0].mxu0
      %v2316 = vpop.f32.mrb[0].mxu0
      %v2317 = vadd.f32 0.0, %v2316
      %v2318 = vpop.f32.mrb[0].mxu0
      %2319 = vmatprep.mubr.bf16.mxu0 0
      %2320 = vmatmul.mubr.bf16.gmra.mrb[0].mxu0 %v2188
      %v2321 = vpop.f32.mrb[0].mxu0
      %v2322 = vadd.f32 0.0, %v2321
      %v2323 = vpop.f32.mrb[0].mxu0
      %v2324 = vpop.f32.mrb[0].mxu0
      %v2325 = vadd.f32 0.0, %v2324
      %v2326 = vpop.f32.mrb[0].mxu0
      %2327 = vmatprep.mubr.bf16.mxu0 0
      %2328 = vmatmul.mubr.bf16.gmra.mrb[0].mxu0 %v2189
      %v2329 = vpop.f32.mrb[0].mxu0
      %v2330 = vadd.f32 0.0, %v2329
      %v2331 = vpop.f32.mrb[0].mxu0
      %v2332 = vpop.f32.mrb[0].mxu0
      %v2333 = vadd.f32 0.0, %v2332
      %v2334 = vpop.f32.mrb[0].mxu0
      %2335 = vmatprep.mubr.bf16.mxu0 0
      %2336 = vmatmul.mubr.bf16.gmra.mrb[0].mxu0 %v2190
      %v2337 = vpop.f32.mrb[0].mxu0
      %v2338 = vadd.f32 0.0, %v2337
      %v2339 = vpop.f32.mrb[0].mxu0
      %v2340 = vpop.f32.mrb[0].mxu0
      %v2341 = vadd.f32 0.0, %v2340
      %v2342 = vpop.f32.mrb[0].mxu0
      %2343 = vdwg.mxu0
      %v2344 = vadd.f32 %v2022, %v2282
      %v2345 = vadd.f32 %v2023, %v2285
      %v2346 = vadd.f32 %v2024, %v2290
      %v2347 = vadd.f32 %v2025, %v2293
      %v2348 = vadd.f32 %v2026, %v2298
      %v2349 = vadd.f32 %v2027, %v2301
      %v2350 = vadd.f32 %v2028, %v2306
      %v2351 = vadd.f32 %v2029, %v2309
      %v2352 = vadd.f32 %v2030, %v2314
      %v2353 = vadd.f32 %v2031, %v2317
      %v2354 = vadd.f32 %v2032, %v2322
      %v2355 = vadd.f32 %v2033, %v2325
      %v2356 = vadd.f32 %v2034, %v2330
      %v2357 = vadd.f32 %v2035, %v2333
      %v2358 = vadd.f32 %v2036, %v2338
      %v2359 = vadd.f32 %v2037, %v2341
      %s2360 = scalar_lea.vmem %s332, 16
      %v2361 = vld [vmem:[%s2360] sm:$0xf]
      %v2362 = vld [vmem:[%s2360 + $0x8] sm:$0xf]
      %v2363 = vld [vmem:[%s2360 + $0x10] sm:$0xf]
      %v2364 = vld [vmem:[%s2360 + $0x18] sm:$0xf]
      %v2365 = vld [vmem:[%s2360 + $0x20] sm:$0xf]
      %v2366 = vld [vmem:[%s2360 + $0x28] sm:$0xf]
      %v2367 = vld [vmem:[%s2360 + $0x30] sm:$0xf]
      %v2368 = vld [vmem:[%s2360 + $0x38] sm:$0xf]
      %v2369 = vld [vmem:[%s2360 + $0x50] sm:$0xf]
      %v2370 = vld [vmem:[%s2360 + $0x58] sm:$0xf]
      %v2371 = vld [vmem:[%s2360 + $0x60] sm:$0xf]
      %v2372 = vld [vmem:[%s2360 + $0x68] sm:$0xf]
      %v2373 = vld [vmem:[%s2360 + $0x70] sm:$0xf]
      %v2374 = vld [vmem:[%s2360 + $0x78] sm:$0xf]
      %v2375 = vld [vmem:[%s2360 + $0x80] sm:$0xf]
      %v2376 = vld [vmem:[%s2360 + $0x88] sm:$0xf]
      %s2377 = scalar_lea.vmem %s1, 384
      %v2378 = vld [vmem:[%s2377] sm:$0xf]
      %v2379 = vld [vmem:[%s2377 + $0x4] sm:$0xf]
      %v2380 = vld [vmem:[%s2377 + $0x8] sm:$0xf]
      %v2381 = vld [vmem:[%s2377 + $0xc] sm:$0xf]
      %v2382 = vld [vmem:[%s2377 + $0x10] sm:$0xf]
      %v2383 = vld [vmem:[%s2377 + $0x14] sm:$0xf]
      %v2384 = vld [vmem:[%s2377 + $0x18] sm:$0xf]
      %v2385 = vld [vmem:[%s2377 + $0x1c] sm:$0xf]
      %v2386 = vld [vmem:[%s2377 + $0x20] sm:$0xf]
      %v2387 = vld [vmem:[%s2377 + $0x24] sm:$0xf]
      %v2388 = vld [vmem:[%s2377 + $0x28] sm:$0xf]
      %v2389 = vld [vmem:[%s2377 + $0x2c] sm:$0xf]
      %v2390 = vld [vmem:[%s2377 + $0x30] sm:$0xf]
      %v2391 = vld [vmem:[%s2377 + $0x34] sm:$0xf]
      %v2392 = vld [vmem:[%s2377 + $0x38] sm:$0xf]
      %v2393 = vld [vmem:[%s2377 + $0x3c] sm:$0xf]
      %v2410 = vunpack.c.l.b16 %v2361
      %v2411 = vunpack.c.l.b16 %v2362
      %v2412 = vunpack.c.l.b16 %v2363
      %v2413 = vunpack.c.l.b16 %v2364
      %v2414 = vunpack.c.l.b16 %v2365
      %v2415 = vunpack.c.l.b16 %v2366
      %v2416 = vunpack.c.l.b16 %v2367
      %v2417 = vunpack.c.l.b16 %v2368
      %v2418 = vunpack.c.l.b16 %v2369
      %v2419 = vunpack.c.l.b16 %v2370
      %v2420 = vunpack.c.l.b16 %v2371
      %v2421 = vunpack.c.l.b16 %v2372
      %v2422 = vunpack.c.l.b16 %v2373
      %v2423 = vunpack.c.l.b16 %v2374
      %v2424 = vunpack.c.l.b16 %v2375
      %v2425 = vunpack.c.l.b16 %v2376
      %v2426 = vpack.c.b16 %v2411, %v2410
      %v2427 = vpack.c.b16 %v2413, %v2412
      %v2428 = vpack.c.b16 %v2415, %v2414
      %v2429 = vpack.c.b16 %v2417, %v2416
      %v2430 = vpack.c.b16 %v2419, %v2418
      %v2431 = vpack.c.b16 %v2421, %v2420
      %v2432 = vpack.c.b16 %v2423, %v2422
      %v2433 = vpack.c.b16 %v2425, %v2424
      %v2458 = vunpack.c.l.b16 %v2378
      %v2459 = vunpack.c.l.b16 %v2379
      %v2460 = vunpack.c.l.b16 %v2380
      %v2461 = vunpack.c.l.b16 %v2381
      %v2462 = vunpack.c.l.b16 %v2382
      %v2463 = vunpack.c.l.b16 %v2383
      %v2464 = vunpack.c.l.b16 %v2384
      %v2465 = vunpack.c.l.b16 %v2385
      %v2466 = vunpack.c.l.b16 %v2386
      %v2467 = vunpack.c.l.b16 %v2387
      %v2468 = vunpack.c.l.b16 %v2388
      %v2469 = vunpack.c.l.b16 %v2389
      %v2470 = vunpack.c.l.b16 %v2390
      %v2471 = vunpack.c.l.b16 %v2391
      %v2472 = vunpack.c.l.b16 %v2392
      %v2473 = vunpack.c.l.b16 %v2393
      %v2474 = vpack.c.b16 %v2459, %v2458
      %v2475 = vpack.c.b16 %v2461, %v2460
      %v2476 = vpack.c.b16 %v2463, %v2462
      %v2477 = vpack.c.b16 %v2465, %v2464
      %v2478 = vpack.c.b16 %v2467, %v2466
      %v2479 = vpack.c.b16 %v2469, %v2468
      %v2480 = vpack.c.b16 %v2471, %v2470
      %v2481 = vpack.c.b16 %v2473, %v2472
      %2490 = vmatprep.subr.bf16.mxu0 0
      %2491 = vmatpush1.bf16.msra.mxu0 %v2474
      %2492 = vmatprep.subr.bf16.mxu0 0
      %2493 = vmatpush1.bf16.msra.mxu0 %v2475
      %2494 = vmatprep.subr.bf16.mxu0 0
      %2495 = vmatpush1.bf16.msra.mxu0 %v2476
      %2496 = vmatprep.subr.bf16.mxu0 0
      %2497 = vmatpush1.bf16.msra.mxu0 %v2477
      %2498 = vmatprep.subr.bf16.mxu0 0
      %2499 = vmatpush1.bf16.msra.mxu0 %v2478
      %2500 = vmatprep.subr.bf16.mxu0 0
      %2501 = vmatpush1.bf16.msra.mxu0 %v2479
      %2502 = vmatprep.subr.bf16.mxu0 0
      %2503 = vmatpush1.bf16.msra.mxu0 %v2480
      %2504 = vmatprep.subr.bf16.mxu0 0
      %2505 = vmatpush1.bf16.msra.mxu0 %v2481
      %2506 = vmatprep.subr.bf16.mxu0 0
      %2507 = vmatpush1.bf16.msra.mxu0 0
      %2508 = vmatprep.subr.bf16.mxu0 0
      %2509 = vmatpush1.bf16.msra.mxu0 0
      %2510 = vmatprep.subr.bf16.mxu0 0
      %2511 = vmatpush1.bf16.msra.mxu0 0
      %2512 = vmatprep.subr.bf16.mxu0 0
      %2513 = vmatpush1.bf16.msra.mxu0 0
      %2514 = vmatprep.subr.bf16.mxu0 0
      %2515 = vmatpush1.bf16.msra.mxu0 0
      %2516 = vmatprep.subr.bf16.mxu0 0
      %2517 = vmatpush1.bf16.msra.mxu0 0
      %2518 = vmatprep.subr.bf16.mxu0 0
      %2519 = vmatpush1.bf16.msra.mxu0 0
      %2520 = vmatprep.subr.bf16.mxu0 0
      %2521 = vmatpush1.bf16.msra.mxu0 0
      %2522 = vmatprep.mubr.bf16.mxu0 0
      %2523 = vmatmul.mubr.bf16.gmra.mrb[0].mxu0 %v2426
      %v2524 = vpop.f32.mrb[0].mxu0
      %v2525 = vadd.f32 0.0, %v2524
      %v2526 = vpop.f32.mrb[0].mxu0
      %v2527 = vpop.f32.mrb[0].mxu0
      %v2528 = vadd.f32 0.0, %v2527
      %v2529 = vpop.f32.mrb[0].mxu0
      %2530 = vmatprep.mubr.bf16.mxu0 0
      %2531 = vmatmul.mubr.bf16.gmra.mrb[0].mxu0 %v2427
      %v2532 = vpop.f32.mrb[0].mxu0
      %v2533 = vadd.f32 0.0, %v2532
      %v2534 = vpop.f32.mrb[0].mxu0
      %v2535 = vpop.f32.mrb[0].mxu0
      %v2536 = vadd.f32 0.0, %v2535
      %v2537 = vpop.f32.mrb[0].mxu0
      %2538 = vmatprep.mubr.bf16.mxu0 0
      %2539 = vmatmul.mubr.bf16.gmra.mrb[0].mxu0 %v2428
      %v2540 = vpop.f32.mrb[0].mxu0
      %v2541 = vadd.f32 0.0, %v2540
      %v2542 = vpop.f32.mrb[0].mxu0
      %v2543 = vpop.f32.mrb[0].mxu0
      %v2544 = vadd.f32 0.0, %v2543
      %v2545 = vpop.f32.mrb[0].mxu0
      %2546 = vmatprep.mubr.bf16.mxu0 0
      %2547 = vmatmul.mubr.bf16.gmra.mrb[0].mxu0 %v2429
      %v2548 = vpop.f32.mrb[0].mxu0
      %v2549 = vadd.f32 0.0, %v2548
      %v2550 = vpop.f32.mrb[0].mxu0
      %v2551 = vpop.f32.mrb[0].mxu0
      %v2552 = vadd.f32 0.0, %v2551
      %v2553 = vpop.f32.mrb[0].mxu0
      %2554 = vmatprep.mubr.bf16.mxu0 0
      %2555 = vmatmul.mubr.bf16.gmra.mrb[0].mxu0 %v2430
      %v2556 = vpop.f32.mrb[0].mxu0
      %v2557 = vadd.f32 0.0, %v2556
      %v2558 = vpop.f32.mrb[0].mxu0
      %v2559 = vpop.f32.mrb[0].mxu0
      %v2560 = vadd.f32 0.0, %v2559
      %v2561 = vpop.f32.mrb[0].mxu0
      %2562 = vmatprep.mubr.bf16.mxu0 0
      %2563 = vmatmul.mubr.bf16.gmra.mrb[0].mxu0 %v2431
      %v2564 = vpop.f32.mrb[0].mxu0
      %v2565 = vadd.f32 0.0, %v2564
      %v2566 = vpop.f32.mrb[0].mxu0
      %v2567 = vpop.f32.mrb[0].mxu0
      %v2568 = vadd.f32 0.0, %v2567
      %v2569 = vpop.f32.mrb[0].mxu0
      %2570 = vmatprep.mubr.bf16.mxu0 0
      %2571 = vmatmul.mubr.bf16.gmra.mrb[0].mxu0 %v2432
      %v2572 = vpop.f32.mrb[0].mxu0
      %v2573 = vadd.f32 0.0, %v2572
      %v2574 = vpop.f32.mrb[0].mxu0
      %v2575 = vpop.f32.mrb[0].mxu0
      %v2576 = vadd.f32 0.0, %v2575
      %v2577 = vpop.f32.mrb[0].mxu0
      %2578 = vmatprep.mubr.bf16.mxu0 0
      %2579 = vmatmul.mubr.bf16.gmra.mrb[0].mxu0 %v2433
      %v2580 = vpop.f32.mrb[0].mxu0
      %v2581 = vadd.f32 0.0, %v2580
      %v2582 = vpop.f32.mrb[0].mxu0
      %v2583 = vpop.f32.mrb[0].mxu0
      %v2584 = vadd.f32 0.0, %v2583
      %v2585 = vpop.f32.mrb[0].mxu0
      %2586 = vdwg.mxu0
      %v2587 = vadd.f32 %v2344, %v2525
      %v2588 = vadd.f32 %v2345, %v2528
      %v2589 = vadd.f32 %v2346, %v2533
      %v2590 = vadd.f32 %v2347, %v2536
      %v2591 = vadd.f32 %v2348, %v2541
      %v2592 = vadd.f32 %v2349, %v2544
      %v2593 = vadd.f32 %v2350, %v2549
      %v2594 = vadd.f32 %v2351, %v2552
      %v2595 = vadd.f32 %v2352, %v2557
      %v2596 = vadd.f32 %v2353, %v2560
      %v2597 = vadd.f32 %v2354, %v2565
      %v2598 = vadd.f32 %v2355, %v2568
      %v2599 = vadd.f32 %v2356, %v2573
      %v2600 = vadd.f32 %v2357, %v2576
      %v2601 = vadd.f32 %v2358, %v2581
      %v2602 = vadd.f32 %v2359, %v2584
      %v2603 = vld [vmem:[%s2360] sm:$0xf]
      %v2604 = vld [vmem:[%s2360 + $0x4] sm:$0x1]
      %v2605 = vld [vmem:[%s2360 + $0x8] sm:$0xf]
      %v2606 = vld [vmem:[%s2360 + $0xc] sm:$0x1]
      %v2607 = vld [vmem:[%s2360 + $0x10] sm:$0xf]
      %v2608 = vld [vmem:[%s2360 + $0x14] sm:$0x1]
      %v2609 = vld [vmem:[%s2360 + $0x18] sm:$0xf]
      %v2610 = vld [vmem:[%s2360 + $0x1c] sm:$0x1]
      %v2611 = vld [vmem:[%s2360 + $0x20] sm:$0xf]
      %v2612 = vld [vmem:[%s2360 + $0x24] sm:$0x1]
      %v2613 = vld [vmem:[%s2360 + $0x28] sm:$0xf]
      %v2614 = vld [vmem:[%s2360 + $0x2c] sm:$0x1]
      %v2615 = vld [vmem:[%s2360 + $0x30] sm:$0xf]
      %v2616 = vld [vmem:[%s2360 + $0x34] sm:$0x1]
      %v2617 = vld [vmem:[%s2360 + $0x38] sm:$0xf]
      %v2618 = vld [vmem:[%s2360 + $0x3c] sm:$0x1]
      %v2619 = vld [vmem:[%s2360 + $0x50] sm:$0xf]
      %v2620 = vld [vmem:[%s2360 + $0x54] sm:$0x1]
      %v2621 = vld [vmem:[%s2360 + $0x58] sm:$0xf]
      %v2622 = vld [vmem:[%s2360 + $0x5c] sm:$0x1]
      %v2623 = vld [vmem:[%s2360 + $0x60] sm:$0xf]
      %v2624 = vld [vmem:[%s2360 + $0x64] sm:$0x1]
      %v2625 = vld [vmem:[%s2360 + $0x68] sm:$0xf]
      %v2626 = vld [vmem:[%s2360 + $0x6c] sm:$0x1]
      %v2627 = vld [vmem:[%s2360 + $0x70] sm:$0xf]
      %v2628 = vld [vmem:[%s2360 + $0x74] sm:$0x1]
      %v2629 = vld [vmem:[%s2360 + $0x78] sm:$0xf]
      %v2630 = vld [vmem:[%s2360 + $0x7c] sm:$0x1]
      %v2631 = vld [vmem:[%s2360 + $0x80] sm:$0xf]
      %v2632 = vld [vmem:[%s2360 + $0x84] sm:$0x1]
      %v2633 = vld [vmem:[%s2360 + $0x88] sm:$0xf]
      %v2634 = vld [vmem:[%s2360 + $0x8c] sm:$0x1]
      %v2636 = vshrl.u32 %v2603, 16
      %v2638 = vrot.slane %v2636, 4
      %v2639 = vshll.u32 %v2603, 16
      %v2641 = vrot.slane %v2639, 5
      %v2642 = vor.u32 %v2638, %v2641
      %v2643 = vrot.slane %v2642, 4
      %v2645 = vshll.u32 %v2604, 16
      %v2647 = vrot.slane %v2645, 5
      %v2648 = vsel %vm377, %v2643, %v2647
      %v2650 = vshrl.u32 %v2605, 16
      %v2652 = vrot.slane %v2650, 4
      %v2653 = vshll.u32 %v2605, 16
      %v2655 = vrot.slane %v2653, 5
      %v2656 = vor.u32 %v2652, %v2655
      %v2657 = vrot.slane %v2656, 4
      %v2659 = vshll.u32 %v2606, 16
      %v2661 = vrot.slane %v2659, 5
      %v2662 = vsel %vm377, %v2657, %v2661
      %v2664 = vshrl.u32 %v2607, 16
      %v2666 = vrot.slane %v2664, 4
      %v2667 = vshll.u32 %v2607, 16
      %v2669 = vrot.slane %v2667, 5
      %v2670 = vor.u32 %v2666, %v2669
      %v2671 = vrot.slane %v2670, 4
      %v2673 = vshll.u32 %v2608, 16
      %v2675 = vrot.slane %v2673, 5
      %v2676 = vsel %vm377, %v2671, %v2675
      %v2678 = vshrl.u32 %v2609, 16
      %v2680 = vrot.slane %v2678, 4
      %v2681 = vshll.u32 %v2609, 16
      %v2683 = vrot.slane %v2681, 5
      %v2684 = vor.u32 %v2680, %v2683
      %v2685 = vrot.slane %v2684, 4
      %v2687 = vshll.u32 %v2610, 16
      %v2689 = vrot.slane %v2687, 5
      %v2690 = vsel %vm377, %v2685, %v2689
      %v2692 = vshrl.u32 %v2611, 16
      %v2694 = vrot.slane %v2692, 4
      %v2695 = vshll.u32 %v2611, 16
      %v2697 = vrot.slane %v2695, 5
      %v2698 = vor.u32 %v2694, %v2697
      %v2699 = vrot.slane %v2698, 4
      %v2701 = vshll.u32 %v2612, 16
      %v2703 = vrot.slane %v2701, 5
      %v2704 = vsel %vm377, %v2699, %v2703
      %v2706 = vshrl.u32 %v2613, 16
      %v2708 = vrot.slane %v2706, 4
      %v2709 = vshll.u32 %v2613, 16
      %v2711 = vrot.slane %v2709, 5
      %v2712 = vor.u32 %v2708, %v2711
      %v2713 = vrot.slane %v2712, 4
      %v2715 = vshll.u32 %v2614, 16
      %v2717 = vrot.slane %v2715, 5
      %v2718 = vsel %vm377, %v2713, %v2717
      %v2720 = vshrl.u32 %v2615, 16
      %v2722 = vrot.slane %v2720, 4
      %v2723 = vshll.u32 %v2615, 16
      %v2725 = vrot.slane %v2723, 5
      %v2726 = vor.u32 %v2722, %v2725
      %v2727 = vrot.slane %v2726, 4
      %v2729 = vshll.u32 %v2616, 16
      %v2731 = vrot.slane %v2729, 5
      %v2732 = vsel %vm377, %v2727, %v2731
      %v2734 = vshrl.u32 %v2617, 16
      %v2736 = vrot.slane %v2734, 4
      %v2737 = vshll.u32 %v2617, 16
      %v2739 = vrot.slane %v2737, 5
      %v2740 = vor.u32 %v2736, %v2739
      %v2741 = vrot.slane %v2740, 4
      %v2743 = vshll.u32 %v2618, 16
      %v2745 = vrot.slane %v2743, 5
      %v2746 = vsel %vm377, %v2741, %v2745
      %v2748 = vshrl.u32 %v2619, 16
      %v2750 = vrot.slane %v2748, 4
      %v2751 = vshll.u32 %v2619, 16
      %v2753 = vrot.slane %v2751, 5
      %v2754 = vor.u32 %v2750, %v2753
      %v2755 = vrot.slane %v2754, 4
      %v2757 = vshll.u32 %v2620, 16
      %v2759 = vrot.slane %v2757, 5
      %v2760 = vsel %vm377, %v2755, %v2759
      %v2762 = vshrl.u32 %v2621, 16
      %v2764 = vrot.slane %v2762, 4
      %v2765 = vshll.u32 %v2621, 16
      %v2767 = vrot.slane %v2765, 5
      %v2768 = vor.u32 %v2764, %v2767
      %v2769 = vrot.slane %v2768, 4
      %v2771 = vshll.u32 %v2622, 16
      %v2773 = vrot.slane %v2771, 5
      %v2774 = vsel %vm377, %v2769, %v2773
      %v2776 = vshrl.u32 %v2623, 16
      %v2778 = vrot.slane %v2776, 4
      %v2779 = vshll.u32 %v2623, 16
      %v2781 = vrot.slane %v2779, 5
      %v2782 = vor.u32 %v2778, %v2781
      %v2783 = vrot.slane %v2782, 4
      %v2785 = vshll.u32 %v2624, 16
      %v2787 = vrot.slane %v2785, 5
      %v2788 = vsel %vm377, %v2783, %v2787
      %v2790 = vshrl.u32 %v2625, 16
      %v2792 = vrot.slane %v2790, 4
      %v2793 = vshll.u32 %v2625, 16
      %v2795 = vrot.slane %v2793, 5
      %v2796 = vor.u32 %v2792, %v2795
      %v2797 = vrot.slane %v2796, 4
      %v2799 = vshll.u32 %v2626, 16
      %v2801 = vrot.slane %v2799, 5
      %v2802 = vsel %vm377, %v2797, %v2801
      %v2804 = vshrl.u32 %v2627, 16
      %v2806 = vrot.slane %v2804, 4
      %v2807 = vshll.u32 %v2627, 16
      %v2809 = vrot.slane %v2807, 5
      %v2810 = vor.u32 %v2806, %v2809
      %v2811 = vrot.slane %v2810, 4
      %v2813 = vshll.u32 %v2628, 16
      %v2815 = vrot.slane %v2813, 5
      %v2816 = vsel %vm377, %v2811, %v2815
      %v2818 = vshrl.u32 %v2629, 16
      %v2820 = vrot.slane %v2818, 4
      %v2821 = vshll.u32 %v2629, 16
      %v2823 = vrot.slane %v2821, 5
      %v2824 = vor.u32 %v2820, %v2823
      %v2825 = vrot.slane %v2824, 4
      %v2827 = vshll.u32 %v2630, 16
      %v2829 = vrot.slane %v2827, 5
      %v2830 = vsel %vm377, %v2825, %v2829
      %v2832 = vshrl.u32 %v2631, 16
      %v2834 = vrot.slane %v2832, 4
      %v2835 = vshll.u32 %v2631, 16
      %v2837 = vrot.slane %v2835, 5
      %v2838 = vor.u32 %v2834, %v2837
      %v2839 = vrot.slane %v2838, 4
      %v2841 = vshll.u32 %v2632, 16
      %v2843 = vrot.slane %v2841, 5
      %v2844 = vsel %vm377, %v2839, %v2843
      %v2846 = vshrl.u32 %v2633, 16
      %v2848 = vrot.slane %v2846, 4
      %v2849 = vshll.u32 %v2633, 16
      %v2851 = vrot.slane %v2849, 5
      %v2852 = vor.u32 %v2848, %v2851
      %v2853 = vrot.slane %v2852, 4
      %v2855 = vshll.u32 %v2634, 16
      %v2857 = vrot.slane %v2855, 5
      %v2858 = vsel %vm377, %v2853, %v2857
      %s2859 = scalar_lea.vmem %s1, 448
      %v2860 = vld [vmem:[%s2859] sm:$0xf]
      %v2861 = vld [vmem:[%s2859 + $0x4] sm:$0xf]
      %v2862 = vld [vmem:[%s2859 + $0x8] sm:$0xf]
      %v2863 = vld [vmem:[%s2859 + $0xc] sm:$0xf]
      %v2864 = vld [vmem:[%s2859 + $0x10] sm:$0xf]
      %v2865 = vld [vmem:[%s2859 + $0x14] sm:$0xf]
      %v2866 = vld [vmem:[%s2859 + $0x18] sm:$0xf]
      %v2867 = vld [vmem:[%s2859 + $0x1c] sm:$0xf]
      %v2868 = vld [vmem:[%s2859 + $0x20] sm:$0xf]
      %v2869 = vld [vmem:[%s2859 + $0x24] sm:$0xf]
      %v2870 = vld [vmem:[%s2859 + $0x28] sm:$0xf]
      %v2871 = vld [vmem:[%s2859 + $0x2c] sm:$0xf]
      %v2872 = vld [vmem:[%s2859 + $0x30] sm:$0xf]
      %v2873 = vld [vmem:[%s2859 + $0x34] sm:$0xf]
      %v2874 = vld [vmem:[%s2859 + $0x38] sm:$0xf]
      %v2875 = vld [vmem:[%s2859 + $0x3c] sm:$0xf]
      %v2876 = vunpack.c.l.b16 %v2648
      %v2877 = vunpack.c.l.b16 %v2662
      %v2878 = vunpack.c.l.b16 %v2676
      %v2879 = vunpack.c.l.b16 %v2690
      %v2880 = vunpack.c.l.b16 %v2704
      %v2881 = vunpack.c.l.b16 %v2718
      %v2882 = vunpack.c.l.b16 %v2732
      %v2883 = vunpack.c.l.b16 %v2746
      %v2884 = vunpack.c.l.b16 %v2760
      %v2885 = vunpack.c.l.b16 %v2774
      %v2886 = vunpack.c.l.b16 %v2788
      %v2887 = vunpack.c.l.b16 %v2802
      %v2888 = vunpack.c.l.b16 %v2816
      %v2889 = vunpack.c.l.b16 %v2830
      %v2890 = vunpack.c.l.b16 %v2844
      %v2891 = vunpack.c.l.b16 %v2858
      %v2892 = vpack.c.b16 %v2877, %v2876
      %v2893 = vpack.c.b16 %v2879, %v2878
      %v2894 = vpack.c.b16 %v2881, %v2880
      %v2895 = vpack.c.b16 %v2883, %v2882
      %v2896 = vpack.c.b16 %v2885, %v2884
      %v2897 = vpack.c.b16 %v2887, %v2886
      %v2898 = vpack.c.b16 %v2889, %v2888
      %v2899 = vpack.c.b16 %v2891, %v2890
      %v2924 = vunpack.c.l.b16 %v2860
      %v2925 = vunpack.c.l.b16 %v2861
      %v2926 = vunpack.c.l.b16 %v2862
      %v2927 = vunpack.c.l.b16 %v2863
      %v2928 = vunpack.c.l.b16 %v2864
      %v2929 = vunpack.c.l.b16 %v2865
      %v2930 = vunpack.c.l.b16 %v2866
      %v2931 = vunpack.c.l.b16 %v2867
      %v2932 = vunpack.c.l.b16 %v2868
      %v2933 = vunpack.c.l.b16 %v2869
      %v2934 = vunpack.c.l.b16 %v2870
      %v2935 = vunpack.c.l.b16 %v2871
      %v2936 = vunpack.c.l.b16 %v2872
      %v2937 = vunpack.c.l.b16 %v2873
      %v2938 = vunpack.c.l.b16 %v2874
      %v2939 = vunpack.c.l.b16 %v2875
      %v2940 = vpack.c.b16 %v2925, %v2924
      %v2941 = vpack.c.b16 %v2927, %v2926
      %v2942 = vpack.c.b16 %v2929, %v2928
      %v2943 = vpack.c.b16 %v2931, %v2930
      %v2944 = vpack.c.b16 %v2933, %v2932
      %v2945 = vpack.c.b16 %v2935, %v2934
      %v2946 = vpack.c.b16 %v2937, %v2936
      %v2947 = vpack.c.b16 %v2939, %v2938
      %2956 = vmatprep.subr.bf16.mxu0 0
      %2957 = vmatpush1.bf16.msra.mxu0 %v2940
      %2958 = vmatprep.subr.bf16.mxu0 0
      %2959 = vmatpush1.bf16.msra.mxu0 %v2941
      %2960 = vmatprep.subr.bf16.mxu0 0
      %2961 = vmatpush1.bf16.msra.mxu0 %v2942
      %2962 = vmatprep.subr.bf16.mxu0 0
      %2963 = vmatpush1.bf16.msra.mxu0 %v2943
      %2964 = vmatprep.subr.bf16.mxu0 0
      %2965 = vmatpush1.bf16.msra.mxu0 %v2944
      %2966 = vmatprep.subr.bf16.mxu0 0
      %2967 = vmatpush1.bf16.msra.mxu0 %v2945
      %2968 = vmatprep.subr.bf16.mxu0 0
      %2969 = vmatpush1.bf16.msra.mxu0 %v2946
      %2970 = vmatprep.subr.bf16.mxu0 0
      %2971 = vmatpush1.bf16.msra.mxu0 %v2947
      %2972 = vmatprep.subr.bf16.mxu0 0
      %2973 = vmatpush1.bf16.msra.mxu0 0
      %2974 = vmatprep.subr.bf16.mxu0 0
      %2975 = vmatpush1.bf16.msra.mxu0 0
      %2976 = vmatprep.subr.bf16.mxu0 0
      %2977 = vmatpush1.bf16.msra.mxu0 0
      %2978 = vmatprep.subr.bf16.mxu0 0
      %2979 = vmatpush1.bf16.msra.mxu0 0
      %2980 = vmatprep.subr.bf16.mxu0 0
      %2981 = vmatpush1.bf16.msra.mxu0 0
      %2982 = vmatprep.subr.bf16.mxu0 0
      %2983 = vmatpush1.bf16.msra.mxu0 0
      %2984 = vmatprep.subr.bf16.mxu0 0
      %2985 = vmatpush1.bf16.msra.mxu0 0
      %2986 = vmatprep.subr.bf16.mxu0 0
      %2987 = vmatpush1.bf16.msra.mxu0 0
      %2988 = vmatprep.mubr.bf16.mxu0 0
      %2989 = vmatmul.mubr.bf16.gmra.mrb[0].mxu0 %v2892
      %v2990 = vpop.f32.mrb[0].mxu0
      %v2991 = vadd.f32 0.0, %v2990
      %v2992 = vpop.f32.mrb[0].mxu0
      %v2993 = vpop.f32.mrb[0].mxu0
      %v2994 = vadd.f32 0.0, %v2993
      %v2995 = vpop.f32.mrb[0].mxu0
      %2996 = vmatprep.mubr.bf16.mxu0 0
      %2997 = vmatmul.mubr.bf16.gmra.mrb[0].mxu0 %v2893
      %v2998 = vpop.f32.mrb[0].mxu0
      %v2999 = vadd.f32 0.0, %v2998
      %v3000 = vpop.f32.mrb[0].mxu0
      %v3001 = vpop.f32.mrb[0].mxu0
      %v3002 = vadd.f32 0.0, %v3001
      %v3003 = vpop.f32.mrb[0].mxu0
      %3004 = vmatprep.mubr.bf16.mxu0 0
      %3005 = vmatmul.mubr.bf16.gmra.mrb[0].mxu0 %v2894
      %v3006 = vpop.f32.mrb[0].mxu0
      %v3007 = vadd.f32 0.0, %v3006
      %v3008 = vpop.f32.mrb[0].mxu0
      %v3009 = vpop.f32.mrb[0].mxu0
      %v3010 = vadd.f32 0.0, %v3009
      %v3011 = vpop.f32.mrb[0].mxu0
      %3012 = vmatprep.mubr.bf16.mxu0 0
      %3013 = vmatmul.mubr.bf16.gmra.mrb[0].mxu0 %v2895
      %v3014 = vpop.f32.mrb[0].mxu0
      %v3015 = vadd.f32 0.0, %v3014
      %v3016 = vpop.f32.mrb[0].mxu0
      %v3017 = vpop.f32.mrb[0].mxu0
      %v3018 = vadd.f32 0.0, %v3017
      %v3019 = vpop.f32.mrb[0].mxu0
      %3020 = vmatprep.mubr.bf16.mxu0 0
      %3021 = vmatmul.mubr.bf16.gmra.mrb[0].mxu0 %v2896
      %v3022 = vpop.f32.mrb[0].mxu0
      %v3023 = vadd.f32 0.0, %v3022
      %v3024 = vpop.f32.mrb[0].mxu0
      %v3025 = vpop.f32.mrb[0].mxu0
      %v3026 = vadd.f32 0.0, %v3025
      %v3027 = vpop.f32.mrb[0].mxu0
      %3028 = vmatprep.mubr.bf16.mxu0 0
      %3029 = vmatmul.mubr.bf16.gmra.mrb[0].mxu0 %v2897
      %v3030 = vpop.f32.mrb[0].mxu0
      %v3031 = vadd.f32 0.0, %v3030
      %v3032 = vpop.f32.mrb[0].mxu0
      %v3033 = vpop.f32.mrb[0].mxu0
      %v3034 = vadd.f32 0.0, %v3033
      %v3035 = vpop.f32.mrb[0].mxu0
      %3036 = vmatprep.mubr.bf16.mxu0 0
      %3037 = vmatmul.mubr.bf16.gmra.mrb[0].mxu0 %v2898
      %v3038 = vpop.f32.mrb[0].mxu0
      %v3039 = vadd.f32 0.0, %v3038
      %v3040 = vpop.f32.mrb[0].mxu0
      %v3041 = vpop.f32.mrb[0].mxu0
      %v3042 = vadd.f32 0.0, %v3041
      %v3043 = vpop.f32.mrb[0].mxu0
      %3044 = vmatprep.mubr.bf16.mxu0 0
      %3045 = vmatmul.mubr.bf16.gmra.mrb[0].mxu0 %v2899
      %v3046 = vpop.f32.mrb[0].mxu0
      %v3047 = vadd.f32 0.0, %v3046
      %v3048 = vpop.f32.mrb[0].mxu0
      %v3049 = vpop.f32.mrb[0].mxu0
      %v3050 = vadd.f32 0.0, %v3049
      %v3051 = vpop.f32.mrb[0].mxu0
      %3052 = vdwg.mxu0
      %v3053 = vadd.f32 %v2587, %v2991
      %v3054 = vadd.f32 %v2588, %v2994
      %v3055 = vadd.f32 %v2589, %v2999
      %v3056 = vadd.f32 %v2590, %v3002
      %v3057 = vadd.f32 %v2591, %v3007
      %v3058 = vadd.f32 %v2592, %v3010
      %v3059 = vadd.f32 %v2593, %v3015
      %v3060 = vadd.f32 %v2594, %v3018
      %v3061 = vadd.f32 %v2595, %v3023
      %v3062 = vadd.f32 %v2596, %v3026
      %v3063 = vadd.f32 %v2597, %v3031
      %v3064 = vadd.f32 %v2598, %v3034
      %v3065 = vadd.f32 %v2599, %v3039
      %v3066 = vadd.f32 %v2600, %v3042
      %v3067 = vadd.f32 %v2601, %v3047
      %v3068 = vadd.f32 %v2602, %v3050
      %v3069 = vld [vmem:[%s2360] sm:$0xe]
      %v3070 = vld [vmem:[%s2360 + $0x8] sm:$0xe]
      %v3071 = vld [vmem:[%s2360 + $0x10] sm:$0xe]
      %v3072 = vld [vmem:[%s2360 + $0x18] sm:$0xe]
      %v3073 = vld [vmem:[%s2360 + $0x20] sm:$0xe]
      %v3074 = vld [vmem:[%s2360 + $0x28] sm:$0xe]
      %v3075 = vld [vmem:[%s2360 + $0x30] sm:$0xe]
      %v3076 = vld [vmem:[%s2360 + $0x38] sm:$0xe]
      %v3077 = vld [vmem:[%s2360 + $0x50] sm:$0xe]
      %v3078 = vld [vmem:[%s2360 + $0x58] sm:$0xe]
      %v3079 = vld [vmem:[%s2360 + $0x60] sm:$0xe]
      %v3080 = vld [vmem:[%s2360 + $0x68] sm:$0xe]
      %v3081 = vld [vmem:[%s2360 + $0x70] sm:$0xe]
      %v3082 = vld [vmem:[%s2360 + $0x78] sm:$0xe]
      %v3083 = vld [vmem:[%s2360 + $0x80] sm:$0xe]
      %v3084 = vld [vmem:[%s2360 + $0x88] sm:$0xe]
      %v3117 = vrot.slane %v3069, 5
      %v3118 = vrot.slane %v3117, 4
      %v3119 = vrot.slane %v2604, 5
      %v3120 = vsel %vm1311, %v3118, %v3119
      %v3121 = vrot.slane %v3070, 5
      %v3122 = vrot.slane %v3121, 4
      %v3123 = vrot.slane %v2606, 5
      %v3124 = vsel %vm1311, %v3122, %v3123
      %v3125 = vrot.slane %v3071, 5
      %v3126 = vrot.slane %v3125, 4
      %v3127 = vrot.slane %v2608, 5
      %v3128 = vsel %vm1311, %v3126, %v3127
      %v3129 = vrot.slane %v3072, 5
      %v3130 = vrot.slane %v3129, 4
      %v3131 = vrot.slane %v2610, 5
      %v3132 = vsel %vm1311, %v3130, %v3131
      %v3133 = vrot.slane %v3073, 5
      %v3134 = vrot.slane %v3133, 4
      %v3135 = vrot.slane %v2612, 5
      %v3136 = vsel %vm1311, %v3134, %v3135
      %v3137 = vrot.slane %v3074, 5
      %v3138 = vrot.slane %v3137, 4
      %v3139 = vrot.slane %v2614, 5
      %v3140 = vsel %vm1311, %v3138, %v3139
      %v3141 = vrot.slane %v3075, 5
      %v3142 = vrot.slane %v3141, 4
      %v3143 = vrot.slane %v2616, 5
      %v3144 = vsel %vm1311, %v3142, %v3143
      %v3145 = vrot.slane %v3076, 5
      %v3146 = vrot.slane %v3145, 4
      %v3147 = vrot.slane %v2618, 5
      %v3148 = vsel %vm1311, %v3146, %v3147
      %v3149 = vrot.slane %v3077, 5
      %v3150 = vrot.slane %v3149, 4
      %v3151 = vrot.slane %v2620, 5
      %v3152 = vsel %vm1311, %v3150, %v3151
      %v3153 = vrot.slane %v3078, 5
      %v3154 = vrot.slane %v3153, 4
      %v3155 = vrot.slane %v2622, 5
      %v3156 = vsel %vm1311, %v3154, %v3155
      %v3157 = vrot.slane %v3079, 5
      %v3158 = vrot.slane %v3157, 4
      %v3159 = vrot.slane %v2624, 5
      %v3160 = vsel %vm1311, %v3158, %v3159
      %v3161 = vrot.slane %v3080, 5
      %v3162 = vrot.slane %v3161, 4
      %v3163 = vrot.slane %v2626, 5
      %v3164 = vsel %vm1311, %v3162, %v3163
      %v3165 = vrot.slane %v3081, 5
      %v3166 = vrot.slane %v3165, 4
      %v3167 = vrot.slane %v2628, 5
      %v3168 = vsel %vm1311, %v3166, %v3167
      %v3169 = vrot.slane %v3082, 5
      %v3170 = vrot.slane %v3169, 4
      %v3171 = vrot.slane %v2630, 5
      %v3172 = vsel %vm1311, %v3170, %v3171
      %v3173 = vrot.slane %v3083, 5
      %v3174 = vrot.slane %v3173, 4
      %v3175 = vrot.slane %v2632, 5
      %v3176 = vsel %vm1311, %v3174, %v3175
      %v3177 = vrot.slane %v3084, 5
      %v3178 = vrot.slane %v3177, 4
      %v3179 = vrot.slane %v2634, 5
      %v3180 = vsel %vm1311, %v3178, %v3179
      %s3181 = scalar_lea.vmem %s1, 512
      %v3182 = vld [vmem:[%s3181] sm:$0xf]
      %v3183 = vld [vmem:[%s3181 + $0x4] sm:$0xf]
      %v3184 = vld [vmem:[%s3181 + $0x8] sm:$0xf]
      %v3185 = vld [vmem:[%s3181 + $0xc] sm:$0xf]
      %v3186 = vld [vmem:[%s3181 + $0x10] sm:$0xf]
      %v3187 = vld [vmem:[%s3181 + $0x14] sm:$0xf]
      %v3188 = vld [vmem:[%s3181 + $0x18] sm:$0xf]
      %v3189 = vld [vmem:[%s3181 + $0x1c] sm:$0xf]
      %v3190 = vld [vmem:[%s3181 + $0x20] sm:$0xf]
      %v3191 = vld [vmem:[%s3181 + $0x24] sm:$0xf]
      %v3192 = vld [vmem:[%s3181 + $0x28] sm:$0xf]
      %v3193 = vld [vmem:[%s3181 + $0x2c] sm:$0xf]
      %v3194 = vld [vmem:[%s3181 + $0x30] sm:$0xf]
      %v3195 = vld [vmem:[%s3181 + $0x34] sm:$0xf]
      %v3196 = vld [vmem:[%s3181 + $0x38] sm:$0xf]
      %v3197 = vld [vmem:[%s3181 + $0x3c] sm:$0xf]
      %v3198 = vunpack.c.l.b16 %v3120
      %v3199 = vunpack.c.l.b16 %v3124
      %v3200 = vunpack.c.l.b16 %v3128
      %v3201 = vunpack.c.l.b16 %v3132
      %v3202 = vunpack.c.l.b16 %v3136
      %v3203 = vunpack.c.l.b16 %v3140
      %v3204 = vunpack.c.l.b16 %v3144
      %v3205 = vunpack.c.l.b16 %v3148
      %v3206 = vunpack.c.l.b16 %v3152
      %v3207 = vunpack.c.l.b16 %v3156
      %v3208 = vunpack.c.l.b16 %v3160
      %v3209 = vunpack.c.l.b16 %v3164
      %v3210 = vunpack.c.l.b16 %v3168
      %v3211 = vunpack.c.l.b16 %v3172
      %v3212 = vunpack.c.l.b16 %v3176
      %v3213 = vunpack.c.l.b16 %v3180
      %v3214 = vpack.c.b16 %v3199, %v3198
      %v3215 = vpack.c.b16 %v3201, %v3200
      %v3216 = vpack.c.b16 %v3203, %v3202
      %v3217 = vpack.c.b16 %v3205, %v3204
      %v3218 = vpack.c.b16 %v3207, %v3206
      %v3219 = vpack.c.b16 %v3209, %v3208
      %v3220 = vpack.c.b16 %v3211, %v3210
      %v3221 = vpack.c.b16 %v3213, %v3212
      %v3246 = vunpack.c.l.b16 %v3182
      %v3247 = vunpack.c.l.b16 %v3183
      %v3248 = vunpack.c.l.b16 %v3184
      %v3249 = vunpack.c.l.b16 %v3185
      %v3250 = vunpack.c.l.b16 %v3186
      %v3251 = vunpack.c.l.b16 %v3187
      %v3252 = vunpack.c.l.b16 %v3188
      %v3253 = vunpack.c.l.b16 %v3189
      %v3254 = vunpack.c.l.b16 %v3190
      %v3255 = vunpack.c.l.b16 %v3191
      %v3256 = vunpack.c.l.b16 %v3192
      %v3257 = vunpack.c.l.b16 %v3193
      %v3258 = vunpack.c.l.b16 %v3194
      %v3259 = vunpack.c.l.b16 %v3195
      %v3260 = vunpack.c.l.b16 %v3196
      %v3261 = vunpack.c.l.b16 %v3197
      %v3262 = vpack.c.b16 %v3247, %v3246
      %v3263 = vpack.c.b16 %v3249, %v3248
      %v3264 = vpack.c.b16 %v3251, %v3250
      %v3265 = vpack.c.b16 %v3253, %v3252
      %v3266 = vpack.c.b16 %v3255, %v3254
      %v3267 = vpack.c.b16 %v3257, %v3256
      %v3268 = vpack.c.b16 %v3259, %v3258
      %v3269 = vpack.c.b16 %v3261, %v3260
      %3278 = vmatprep.subr.bf16.mxu0 0
      %3279 = vmatpush1.bf16.msra.mxu0 %v3262
      %3280 = vmatprep.subr.bf16.mxu0 0
      %3281 = vmatpush1.bf16.msra.mxu0 %v3263
      %3282 = vmatprep.subr.bf16.mxu0 0
      %3283 = vmatpush1.bf16.msra.mxu0 %v3264
      %3284 = vmatprep.subr.bf16.mxu0 0
      %3285 = vmatpush1.bf16.msra.mxu0 %v3265
      %3286 = vmatprep.subr.bf16.mxu0 0
      %3287 = vmatpush1.bf16.msra.mxu0 %v3266
      %3288 = vmatprep.subr.bf16.mxu0 0
      %3289 = vmatpush1.bf16.msra.mxu0 %v3267
      %3290 = vmatprep.subr.bf16.mxu0 0
      %3291 = vmatpush1.bf16.msra.mxu0 %v3268
      %3292 = vmatprep.subr.bf16.mxu0 0
      %3293 = vmatpush1.bf16.msra.mxu0 %v3269
      %3294 = vmatprep.subr.bf16.mxu0 0
      %3295 = vmatpush1.bf16.msra.mxu0 0
      %3296 = vmatprep.subr.bf16.mxu0 0
      %3297 = vmatpush1.bf16.msra.mxu0 0
      %3298 = vmatprep.subr.bf16.mxu0 0
      %3299 = vmatpush1.bf16.msra.mxu0 0
      %3300 = vmatprep.subr.bf16.mxu0 0
      %3301 = vmatpush1.bf16.msra.mxu0 0
      %3302 = vmatprep.subr.bf16.mxu0 0
      %3303 = vmatpush1.bf16.msra.mxu0 0
      %3304 = vmatprep.subr.bf16.mxu0 0
      %3305 = vmatpush1.bf16.msra.mxu0 0
      %3306 = vmatprep.subr.bf16.mxu0 0
      %3307 = vmatpush1.bf16.msra.mxu0 0
      %3308 = vmatprep.subr.bf16.mxu0 0
      %3309 = vmatpush1.bf16.msra.mxu0 0
      %3310 = vmatprep.mubr.bf16.mxu0 0
      %3311 = vmatmul.mubr.bf16.gmra.mrb[0].mxu0 %v3214
      %v3312 = vpop.f32.mrb[0].mxu0
      %v3313 = vadd.f32 0.0, %v3312
      %v3314 = vpop.f32.mrb[0].mxu0
      %v3315 = vpop.f32.mrb[0].mxu0
      %v3316 = vadd.f32 0.0, %v3315
      %v3317 = vpop.f32.mrb[0].mxu0
      %3318 = vmatprep.mubr.bf16.mxu0 0
      %3319 = vmatmul.mubr.bf16.gmra.mrb[0].mxu0 %v3215
      %v3320 = vpop.f32.mrb[0].mxu0
      %v3321 = vadd.f32 0.0, %v3320
      %v3322 = vpop.f32.mrb[0].mxu0
      %v3323 = vpop.f32.mrb[0].mxu0
      %v3324 = vadd.f32 0.0, %v3323
      %v3325 = vpop.f32.mrb[0].mxu0
      %3326 = vmatprep.mubr.bf16.mxu0 0
      %3327 = vmatmul.mubr.bf16.gmra.mrb[0].mxu0 %v3216
      %v3328 = vpop.f32.mrb[0].mxu0
      %v3329 = vadd.f32 0.0, %v3328
      %v3330 = vpop.f32.mrb[0].mxu0
      %v3331 = vpop.f32.mrb[0].mxu0
      %v3332 = vadd.f32 0.0, %v3331
      %v3333 = vpop.f32.mrb[0].mxu0
      %3334 = vmatprep.mubr.bf16.mxu0 0
      %3335 = vmatmul.mubr.bf16.gmra.mrb[0].mxu0 %v3217
      %v3336 = vpop.f32.mrb[0].mxu0
      %v3337 = vadd.f32 0.0, %v3336
      %v3338 = vpop.f32.mrb[0].mxu0
      %v3339 = vpop.f32.mrb[0].mxu0
      %v3340 = vadd.f32 0.0, %v3339
      %v3341 = vpop.f32.mrb[0].mxu0
      %3342 = vmatprep.mubr.bf16.mxu0 0
      %3343 = vmatmul.mubr.bf16.gmra.mrb[0].mxu0 %v3218
      %v3344 = vpop.f32.mrb[0].mxu0
      %v3345 = vadd.f32 0.0, %v3344
      %v3346 = vpop.f32.mrb[0].mxu0
      %v3347 = vpop.f32.mrb[0].mxu0
      %v3348 = vadd.f32 0.0, %v3347
      %v3349 = vpop.f32.mrb[0].mxu0
      %3350 = vmatprep.mubr.bf16.mxu0 0
      %3351 = vmatmul.mubr.bf16.gmra.mrb[0].mxu0 %v3219
      %v3352 = vpop.f32.mrb[0].mxu0
      %v3353 = vadd.f32 0.0, %v3352
      %v3354 = vpop.f32.mrb[0].mxu0
      %v3355 = vpop.f32.mrb[0].mxu0
      %v3356 = vadd.f32 0.0, %v3355
      %v3357 = vpop.f32.mrb[0].mxu0
      %3358 = vmatprep.mubr.bf16.mxu0 0
      %3359 = vmatmul.mubr.bf16.gmra.mrb[0].mxu0 %v3220
      %v3360 = vpop.f32.mrb[0].mxu0
      %v3361 = vadd.f32 0.0, %v3360
      %v3362 = vpop.f32.mrb[0].mxu0
      %v3363 = vpop.f32.mrb[0].mxu0
      %v3364 = vadd.f32 0.0, %v3363
      %v3365 = vpop.f32.mrb[0].mxu0
      %3366 = vmatprep.mubr.bf16.mxu0 0
      %3367 = vmatmul.mubr.bf16.gmra.mrb[0].mxu0 %v3221
      %v3368 = vpop.f32.mrb[0].mxu0
      %v3369 = vadd.f32 0.0, %v3368
      %v3370 = vpop.f32.mrb[0].mxu0
      %v3371 = vpop.f32.mrb[0].mxu0
      %v3372 = vadd.f32 0.0, %v3371
      %v3373 = vpop.f32.mrb[0].mxu0
      %3374 = vdwg.mxu0
      %v3375 = vadd.f32 %v3053, %v3313
      %v3376 = vadd.f32 %v3054, %v3316
      %v3377 = vadd.f32 %v3055, %v3321
      %v3378 = vadd.f32 %v3056, %v3324
      %v3379 = vadd.f32 %v3057, %v3329
      %v3380 = vadd.f32 %v3058, %v3332
      %v3381 = vadd.f32 %v3059, %v3337
      %v3382 = vadd.f32 %v3060, %v3340
      %v3383 = vadd.f32 %v3061, %v3345
      %v3384 = vadd.f32 %v3062, %v3348
      %v3385 = vadd.f32 %v3063, %v3353
      %v3386 = vadd.f32 %v3064, %v3356
      %v3387 = vadd.f32 %v3065, %v3361
      %v3388 = vadd.f32 %v3066, %v3364
      %v3389 = vadd.f32 %v3067, %v3369
      %v3390 = vadd.f32 %v3068, %v3372
      %v3391 = vld [vmem:[%s2] sm:$0x1]
      %v3393 = vlaneseq
      %v3394 = vshrl.u32 %v3393, 7
      %v3395 = vsub.s32 0, %v3394
      %v3396 = vrot.slane %v3391, %v3395
      %v3398 = vadd.f32 %v3375, %v3396
      %v3399 = vadd.f32 %v3376, %v3396
      %v3400 = vadd.f32 %v3377, %v3396
      %v3401 = vadd.f32 %v3378, %v3396
      %v3402 = vadd.f32 %v3379, %v3396
      %v3403 = vadd.f32 %v3380, %v3396
      %v3404 = vadd.f32 %v3381, %v3396
      %v3405 = vadd.f32 %v3382, %v3396
      %v3406 = vadd.f32 %v3383, %v3396
      %v3407 = vadd.f32 %v3384, %v3396
      %v3408 = vadd.f32 %v3385, %v3396
      %v3409 = vadd.f32 %v3386, %v3396
      %v3410 = vadd.f32 %v3387, %v3396
      %v3411 = vadd.f32 %v3388, %v3396
      %v3412 = vadd.f32 %v3389, %v3396
      %v3413 = vadd.f32 %v3390, %v3396
      %v3414 = vmax.f32 %v3398, 0.0
      %v3415 = vmax.f32 %v3399, 0.0
      %v3416 = vmax.f32 %v3400, 0.0
      %v3417 = vmax.f32 %v3401, 0.0
      %v3418 = vmax.f32 %v3402, 0.0
      %v3419 = vmax.f32 %v3403, 0.0
      %v3420 = vmax.f32 %v3404, 0.0
      %v3421 = vmax.f32 %v3405, 0.0
      %v3422 = vmax.f32 %v3406, 0.0
      %v3423 = vmax.f32 %v3407, 0.0
      %v3424 = vmax.f32 %v3408, 0.0
      %v3425 = vmax.f32 %v3409, 0.0
      %v3426 = vmax.f32 %v3410, 0.0
      %v3427 = vmax.f32 %v3411, 0.0
      %v3428 = vmax.f32 %v3412, 0.0
      %v3429 = vmax.f32 %v3413, 0.0
      %v3430 = vld [vmem:[%s3] sm:$0xff]
      %v3431 = vld [vmem:[%s3 + $0x8] sm:$0xff]
      %v3432 = vld [vmem:[%s3 + $0x10] sm:$0xff]
      %v3433 = vld [vmem:[%s3 + $0x18] sm:$0xff]
      %v3434 = vld [vmem:[%s3 + $0x20] sm:$0xff]
      %v3435 = vld [vmem:[%s3 + $0x28] sm:$0xff]
      %v3436 = vld [vmem:[%s3 + $0x30] sm:$0xff]
      %v3437 = vld [vmem:[%s3 + $0x38] sm:$0xff]
      %v3438 = vld [vmem:[%s3 + $0x40] sm:$0xff]
      %v3439 = vld [vmem:[%s3 + $0x48] sm:$0xff]
      %v3440 = vld [vmem:[%s3 + $0x50] sm:$0xff]
      %v3441 = vld [vmem:[%s3 + $0x58] sm:$0xff]
      %v3442 = vld [vmem:[%s3 + $0x60] sm:$0xff]
      %v3443 = vld [vmem:[%s3 + $0x68] sm:$0xff]
      %v3444 = vld [vmem:[%s3 + $0x70] sm:$0xff]
      %v3445 = vld [vmem:[%s3 + $0x78] sm:$0xff]
      %v3462 = vunpack.c.l.b16 %v3430
      %v3463 = vunpack.c.h.b16 %v3430
      %v3464 = vunpack.c.l.b16 %v3431
      %v3465 = vunpack.c.h.b16 %v3431
      %v3466 = vunpack.c.l.b16 %v3432
      %v3467 = vunpack.c.h.b16 %v3432
      %v3468 = vunpack.c.l.b16 %v3433
      %v3469 = vunpack.c.h.b16 %v3433
      %v3470 = vunpack.c.l.b16 %v3434
      %v3471 = vunpack.c.h.b16 %v3434
      %v3472 = vunpack.c.l.b16 %v3435
      %v3473 = vunpack.c.h.b16 %v3435
      %v3474 = vunpack.c.l.b16 %v3436
      %v3475 = vunpack.c.h.b16 %v3436
      %v3476 = vunpack.c.l.b16 %v3437
      %v3477 = vunpack.c.h.b16 %v3437
      %v3478 = vunpack.c.l.b16 %v3438
      %v3479 = vunpack.c.h.b16 %v3438
      %v3480 = vunpack.c.l.b16 %v3439
      %v3481 = vunpack.c.h.b16 %v3439
      %v3482 = vunpack.c.l.b16 %v3440
      %v3483 = vunpack.c.h.b16 %v3440
      %v3484 = vunpack.c.l.b16 %v3441
      %v3485 = vunpack.c.h.b16 %v3441
      %v3486 = vunpack.c.l.b16 %v3442
      %v3487 = vunpack.c.h.b16 %v3442
      %v3488 = vunpack.c.l.b16 %v3443
      %v3489 = vunpack.c.h.b16 %v3443
      %v3490 = vunpack.c.l.b16 %v3444
      %v3491 = vunpack.c.h.b16 %v3444
      %v3492 = vunpack.c.l.b16 %v3445
      %v3493 = vunpack.c.h.b16 %v3445
      %v3494 = vpack.c.b16 %v3464, %v3462
      %v3495 = vpack.c.b16 %v3465, %v3463
      %v3496 = vpack.c.b16 %v3468, %v3466
      %v3497 = vpack.c.b16 %v3469, %v3467
      %v3498 = vpack.c.b16 %v3472, %v3470
      %v3499 = vpack.c.b16 %v3473, %v3471
      %v3500 = vpack.c.b16 %v3476, %v3474
      %v3501 = vpack.c.b16 %v3477, %v3475
      %v3502 = vpack.c.b16 %v3480, %v3478
      %v3503 = vpack.c.b16 %v3481, %v3479
      %v3504 = vpack.c.b16 %v3484, %v3482
      %v3505 = vpack.c.b16 %v3485, %v3483
      %v3506 = vpack.c.b16 %v3488, %v3486
      %v3507 = vpack.c.b16 %v3489, %v3487
      %v3508 = vpack.c.b16 %v3492, %v3490
      %v3509 = vpack.c.b16 %v3493, %v3491
      %3526 = vmatprep.subr.bf16.mxu0 %v3495
      %3527 = vmatpush1.bf16.msra.mxu0 %v3494
      %3528 = vmatprep.subr.bf16.mxu0 %v3497
      %3529 = vmatpush1.bf16.msra.mxu0 %v3496
      %3530 = vmatprep.subr.bf16.mxu0 %v3499
      %3531 = vmatpush1.bf16.msra.mxu0 %v3498
      %3532 = vmatprep.subr.bf16.mxu0 %v3501
      %3533 = vmatpush1.bf16.msra.mxu0 %v3500
      %3534 = vmatprep.subr.bf16.mxu0 %v3503
      %3535 = vmatpush1.bf16.msra.mxu0 %v3502
      %3536 = vmatprep.subr.bf16.mxu0 %v3505
      %3537 = vmatpush1.bf16.msra.mxu0 %v3504
      %3538 = vmatprep.subr.bf16.mxu0 %v3507
      %3539 = vmatpush1.bf16.msra.mxu0 %v3506
      %3540 = vmatprep.subr.bf16.mxu0 %v3509
      %3541 = vmatpush1.bf16.msra.mxu0 %v3508
      %3542 = vmatprep.subr.bf16.mxu0 0
      %3543 = vmatpush1.bf16.msra.mxu0 0
      %3544 = vmatprep.subr.bf16.mxu0 0
      %3545 = vmatpush1.bf16.msra.mxu0 0
      %3546 = vmatprep.subr.bf16.mxu0 0
      %3547 = vmatpush1.bf16.msra.mxu0 0
      %3548 = vmatprep.subr.bf16.mxu0 0
      %3549 = vmatpush1.bf16.msra.mxu0 0
      %3550 = vmatprep.subr.bf16.mxu0 0
      %3551 = vmatpush1.bf16.msra.mxu0 0
      %3552 = vmatprep.subr.bf16.mxu0 0
      %3553 = vmatpush1.bf16.msra.mxu0 0
      %3554 = vmatprep.subr.bf16.mxu0 0
      %3555 = vmatpush1.bf16.msra.mxu0 0
      %3556 = vmatprep.subr.bf16.mxu0 0
      %3557 = vmatpush1.bf16.msra.mxu0 0
      %3558 = vmatprep.mubr.bf16.mxu0 0
      %3559 = vmatmul.mubr.bf16.gmra.mrb[0].mxu0 %v1861
      %v3560 = vpop.f32.mrb[0].mxu0
      %v3561 = vadd.f32 0.0, %v3560
      %v3562 = vpop.f32.mrb[0].mxu0
      %v3563 = vadd.f32 0.0, %v3562
      %v3564 = vpop.f32.mrb[0].mxu0
      %v3565 = vadd.f32 0.0, %v3564
      %v3566 = vpop.f32.mrb[0].mxu0
      %v3567 = vadd.f32 0.0, %v3566
      %3568 = vmatprep.mubr.bf16.mxu0 0
      %3569 = vmatmul.mubr.bf16.gmra.mrb[0].mxu0 %v1862
      %v3570 = vpop.f32.mrb[0].mxu0
      %v3571 = vadd.f32 0.0, %v3570
      %v3572 = vpop.f32.mrb[0].mxu0
      %v3573 = vadd.f32 0.0, %v3572
      %v3574 = vpop.f32.mrb[0].mxu0
      %v3575 = vadd.f32 0.0, %v3574
      %v3576 = vpop.f32.mrb[0].mxu0
      %v3577 = vadd.f32 0.0, %v3576
      %3578 = vmatprep.mubr.bf16.mxu0 0
      %3579 = vmatmul.mubr.bf16.gmra.mrb[0].mxu0 %v1863
      %v3580 = vpop.f32.mrb[0].mxu0
      %v3581 = vadd.f32 0.0, %v3580
      %v3582 = vpop.f32.mrb[0].mxu0
      %v3583 = vadd.f32 0.0, %v3582
      %v3584 = vpop.f32.mrb[0].mxu0
      %v3585 = vadd.f32 0.0, %v3584
      %v3586 = vpop.f32.mrb[0].mxu0
      %v3587 = vadd.f32 0.0, %v3586
      %3588 = vmatprep.mubr.bf16.mxu0 0
      %3589 = vmatmul.mubr.bf16.gmra.mrb[0].mxu0 %v1864
      %v3590 = vpop.f32.mrb[0].mxu0
      %v3591 = vadd.f32 0.0, %v3590
      %v3592 = vpop.f32.mrb[0].mxu0
      %v3593 = vadd.f32 0.0, %v3592
      %v3594 = vpop.f32.mrb[0].mxu0
      %v3595 = vadd.f32 0.0, %v3594
      %v3596 = vpop.f32.mrb[0].mxu0
      %v3597 = vadd.f32 0.0, %v3596
      %3598 = vmatprep.mubr.bf16.mxu0 0
      %3599 = vmatmul.mubr.bf16.gmra.mrb[0].mxu0 %v1865
      %v3600 = vpop.f32.mrb[0].mxu0
      %v3601 = vadd.f32 0.0, %v3600
      %v3602 = vpop.f32.mrb[0].mxu0
      %v3603 = vadd.f32 0.0, %v3602
      %v3604 = vpop.f32.mrb[0].mxu0
      %v3605 = vadd.f32 0.0, %v3604
      %v3606 = vpop.f32.mrb[0].mxu0
      %v3607 = vadd.f32 0.0, %v3606
      %3608 = vmatprep.mubr.bf16.mxu0 0
      %3609 = vmatmul.mubr.bf16.gmra.mrb[0].mxu0 %v1866
      %v3610 = vpop.f32.mrb[0].mxu0
      %v3611 = vadd.f32 0.0, %v3610
      %v3612 = vpop.f32.mrb[0].mxu0
      %v3613 = vadd.f32 0.0, %v3612
      %v3614 = vpop.f32.mrb[0].mxu0
      %v3615 = vadd.f32 0.0, %v3614
      %v3616 = vpop.f32.mrb[0].mxu0
      %v3617 = vadd.f32 0.0, %v3616
      %3618 = vmatprep.mubr.bf16.mxu0 0
      %3619 = vmatmul.mubr.bf16.gmra.mrb[0].mxu0 %v1867
      %v3620 = vpop.f32.mrb[0].mxu0
      %v3621 = vadd.f32 0.0, %v3620
      %v3622 = vpop.f32.mrb[0].mxu0
      %v3623 = vadd.f32 0.0, %v3622
      %v3624 = vpop.f32.mrb[0].mxu0
      %v3625 = vadd.f32 0.0, %v3624
      %v3626 = vpop.f32.mrb[0].mxu0
      %v3627 = vadd.f32 0.0, %v3626
      %3628 = vmatprep.mubr.bf16.mxu0 0
      %3629 = vmatmul.mubr.bf16.gmra.mrb[0].mxu0 %v1868
      %v3630 = vpop.f32.mrb[0].mxu0
      %v3631 = vadd.f32 0.0, %v3630
      %v3632 = vpop.f32.mrb[0].mxu0
      %v3633 = vadd.f32 0.0, %v3632
      %v3634 = vpop.f32.mrb[0].mxu0
      %v3635 = vadd.f32 0.0, %v3634
      %v3636 = vpop.f32.mrb[0].mxu0
      %v3637 = vadd.f32 0.0, %v3636
      %3638 = vdwg.mxu0
      %v3639 = vld [vmem:[%s4] sm:$0x1]
      %v3641 = vlaneseq
      %v3642 = vshrl.u32 %v3641, 7
      %v3643 = vsub.s32 0, %v3642
      %v3644 = vrot.slane %v3639, %v3643
      %v3646 = vadd.f32 %v3561, %v3644
      %v3647 = vadd.f32 %v3565, %v3644
      %v3648 = vadd.f32 %v3571, %v3644
      %v3649 = vadd.f32 %v3575, %v3644
      %v3650 = vadd.f32 %v3581, %v3644
      %v3651 = vadd.f32 %v3585, %v3644
      %v3652 = vadd.f32 %v3591, %v3644
      %v3653 = vadd.f32 %v3595, %v3644
      %v3654 = vadd.f32 %v3601, %v3644
      %v3655 = vadd.f32 %v3605, %v3644
      %v3656 = vadd.f32 %v3611, %v3644
      %v3657 = vadd.f32 %v3615, %v3644
      %v3658 = vadd.f32 %v3621, %v3644
      %v3659 = vadd.f32 %v3625, %v3644
      %v3660 = vadd.f32 %v3631, %v3644
      %v3661 = vadd.f32 %v3635, %v3644
      %v3662 = vpack.c.bf16 %v3415, %v3414
      %v3663 = vpack.c.bf16 %v3417, %v3416
      %v3664 = vpack.c.bf16 %v3419, %v3418
      %v3665 = vpack.c.bf16 %v3421, %v3420
      %v3666 = vpack.c.bf16 %v3423, %v3422
      %v3667 = vpack.c.bf16 %v3425, %v3424
      %v3668 = vpack.c.bf16 %v3427, %v3426
      %v3669 = vpack.c.bf16 %v3429, %v3428
      %v3670 = vld [vmem:[%s5] sm:$0xf]
      %v3671 = vld [vmem:[%s5 + $0x4] sm:$0xf]
      %v3672 = vld [vmem:[%s5 + $0x8] sm:$0xf]
      %v3673 = vld [vmem:[%s5 + $0xc] sm:$0xf]
      %v3674 = vld [vmem:[%s5 + $0x10] sm:$0xf]
      %v3675 = vld [vmem:[%s5 + $0x14] sm:$0xf]
      %v3676 = vld [vmem:[%s5 + $0x18] sm:$0xf]
      %v3677 = vld [vmem:[%s5 + $0x1c] sm:$0xf]
      %v3678 = vld [vmem:[%s5 + $0x20] sm:$0xf]
      %v3679 = vld [vmem:[%s5 + $0x24] sm:$0xf]
      %v3680 = vld [vmem:[%s5 + $0x28] sm:$0xf]
      %v3681 = vld [vmem:[%s5 + $0x2c] sm:$0xf]
      %v3682 = vld [vmem:[%s5 + $0x30] sm:$0xf]
      %v3683 = vld [vmem:[%s5 + $0x34] sm:$0xf]
      %v3684 = vld [vmem:[%s5 + $0x38] sm:$0xf]
      %v3685 = vld [vmem:[%s5 + $0x3c] sm:$0xf]
      %v3702 = vunpack.c.l.b16 %v3670
      %v3703 = vunpack.c.l.b16 %v3671
      %v3704 = vunpack.c.l.b16 %v3672
      %v3705 = vunpack.c.l.b16 %v3673
      %v3706 = vunpack.c.l.b16 %v3674
      %v3707 = vunpack.c.l.b16 %v3675
      %v3708 = vunpack.c.l.b16 %v3676
      %v3709 = vunpack.c.l.b16 %v3677
      %v3710 = vunpack.c.l.b16 %v3678
      %v3711 = vunpack.c.l.b16 %v3679
      %v3712 = vunpack.c.l.b16 %v3680
      %v3713 = vunpack.c.l.b16 %v3681
      %v3714 = vunpack.c.l.b16 %v3682
      %v3715 = vunpack.c.l.b16 %v3683
      %v3716 = vunpack.c.l.b16 %v3684
      %v3717 = vunpack.c.l.b16 %v3685
      %v3718 = vpack.c.b16 %v3703, %v3702
      %v3719 = vpack.c.b16 %v3705, %v3704
      %v3720 = vpack.c.b16 %v3707, %v3706
      %v3721 = vpack.c.b16 %v3709, %v3708
      %v3722 = vpack.c.b16 %v3711, %v3710
      %v3723 = vpack.c.b16 %v3713, %v3712
      %v3724 = vpack.c.b16 %v3715, %v3714
      %v3725 = vpack.c.b16 %v3717, %v3716
      %3734 = vmatprep.subr.bf16.mxu0 0
      %3735 = vmatpush1.bf16.msra.mxu0 %v3718
      %3736 = vmatprep.subr.bf16.mxu0 0
      %3737 = vmatpush1.bf16.msra.mxu0 %v3719
      %3738 = vmatprep.subr.bf16.mxu0 0
      %3739 = vmatpush1.bf16.msra.mxu0 %v3720
      %3740 = vmatprep.subr.bf16.mxu0 0
      %3741 = vmatpush1.bf16.msra.mxu0 %v3721
      %3742 = vmatprep.subr.bf16.mxu0 0
      %3743 = vmatpush1.bf16.msra.mxu0 %v3722
      %3744 = vmatprep.subr.bf16.mxu0 0
      %3745 = vmatpush1.bf16.msra.mxu0 %v3723
      %3746 = vmatprep.subr.bf16.mxu0 0
      %3747 = vmatpush1.bf16.msra.mxu0 %v3724
      %3748 = vmatprep.subr.bf16.mxu0 0
      %3749 = vmatpush1.bf16.msra.mxu0 %v3725
      %3750 = vmatprep.subr.bf16.mxu0 0
      %3751 = vmatpush1.bf16.msra.mxu0 0
      %3752 = vmatprep.subr.bf16.mxu0 0
      %3753 = vmatpush1.bf16.msra.mxu0 0
      %3754 = vmatprep.subr.bf16.mxu0 0
      %3755 = vmatpush1.bf16.msra.mxu0 0
      %3756 = vmatprep.subr.bf16.mxu0 0
      %3757 = vmatpush1.bf16.msra.mxu0 0
      %3758 = vmatprep.subr.bf16.mxu0 0
      %3759 = vmatpush1.bf16.msra.mxu0 0
      %3760 = vmatprep.subr.bf16.mxu0 0
      %3761 = vmatpush1.bf16.msra.mxu0 0
      %3762 = vmatprep.subr.bf16.mxu0 0
      %3763 = vmatpush1.bf16.msra.mxu0 0
      %3764 = vmatprep.subr.bf16.mxu0 0
      %3765 = vmatpush1.bf16.msra.mxu0 0
      %3766 = vmatprep.mubr.bf16.mxu0 0
      %3767 = vmatmul.mubr.bf16.gmra.mrb[0].mxu0 %v3662
      %v3768 = vpop.f32.mrb[0].mxu0
      %v3769 = vadd.f32 0.0, %v3768
      %v3770 = vpop.f32.mrb[0].mxu0
      %v3771 = vpop.f32.mrb[0].mxu0
      %v3772 = vadd.f32 0.0, %v3771
      %v3773 = vpop.f32.mrb[0].mxu0
      %3774 = vmatprep.mubr.bf16.mxu0 0
      %3775 = vmatmul.mubr.bf16.gmra.mrb[0].mxu0 %v3663
      %v3776 = vpop.f32.mrb[0].mxu0
      %v3777 = vadd.f32 0.0, %v3776
      %v3778 = vpop.f32.mrb[0].mxu0
      %v3779 = vpop.f32.mrb[0].mxu0
      %v3780 = vadd.f32 0.0, %v3779
      %v3781 = vpop.f32.mrb[0].mxu0
      %3782 = vmatprep.mubr.bf16.mxu0 0
      %3783 = vmatmul.mubr.bf16.gmra.mrb[0].mxu0 %v3664
      %v3784 = vpop.f32.mrb[0].mxu0
      %v3785 = vadd.f32 0.0, %v3784
      %v3786 = vpop.f32.mrb[0].mxu0
      %v3787 = vpop.f32.mrb[0].mxu0
      %v3788 = vadd.f32 0.0, %v3787
      %v3789 = vpop.f32.mrb[0].mxu0
      %3790 = vmatprep.mubr.bf16.mxu0 0
      %3791 = vmatmul.mubr.bf16.gmra.mrb[0].mxu0 %v3665
      %v3792 = vpop.f32.mrb[0].mxu0
      %v3793 = vadd.f32 0.0, %v3792
      %v3794 = vpop.f32.mrb[0].mxu0
      %v3795 = vpop.f32.mrb[0].mxu0
      %v3796 = vadd.f32 0.0, %v3795
      %v3797 = vpop.f32.mrb[0].mxu0
      %3798 = vmatprep.mubr.bf16.mxu0 0
      %3799 = vmatmul.mubr.bf16.gmra.mrb[0].mxu0 %v3666
      %v3800 = vpop.f32.mrb[0].mxu0
      %v3801 = vadd.f32 0.0, %v3800
      %v3802 = vpop.f32.mrb[0].mxu0
      %v3803 = vpop.f32.mrb[0].mxu0
      %v3804 = vadd.f32 0.0, %v3803
      %v3805 = vpop.f32.mrb[0].mxu0
      %3806 = vmatprep.mubr.bf16.mxu0 0
      %3807 = vmatmul.mubr.bf16.gmra.mrb[0].mxu0 %v3667
      %v3808 = vpop.f32.mrb[0].mxu0
      %v3809 = vadd.f32 0.0, %v3808
      %v3810 = vpop.f32.mrb[0].mxu0
      %v3811 = vpop.f32.mrb[0].mxu0
      %v3812 = vadd.f32 0.0, %v3811
      %v3813 = vpop.f32.mrb[0].mxu0
      %3814 = vmatprep.mubr.bf16.mxu0 0
      %3815 = vmatmul.mubr.bf16.gmra.mrb[0].mxu0 %v3668
      %v3816 = vpop.f32.mrb[0].mxu0
      %v3817 = vadd.f32 0.0, %v3816
      %v3818 = vpop.f32.mrb[0].mxu0
      %v3819 = vpop.f32.mrb[0].mxu0
      %v3820 = vadd.f32 0.0, %v3819
      %v3821 = vpop.f32.mrb[0].mxu0
      %3822 = vmatprep.mubr.bf16.mxu0 0
      %3823 = vmatmul.mubr.bf16.gmra.mrb[0].mxu0 %v3669
      %v3824 = vpop.f32.mrb[0].mxu0
      %v3825 = vadd.f32 0.0, %v3824
      %v3826 = vpop.f32.mrb[0].mxu0
      %v3827 = vpop.f32.mrb[0].mxu0
      %v3828 = vadd.f32 0.0, %v3827
      %v3829 = vpop.f32.mrb[0].mxu0
      %3830 = vdwg.mxu0
      %v3831 = vadd.f32 %v3563, %v3769
      %v3832 = vadd.f32 %v3567, %v3772
      %v3833 = vadd.f32 %v3573, %v3777
      %v3834 = vadd.f32 %v3577, %v3780
      %v3835 = vadd.f32 %v3583, %v3785
      %v3836 = vadd.f32 %v3587, %v3788
      %v3837 = vadd.f32 %v3593, %v3793
      %v3838 = vadd.f32 %v3597, %v3796
      %v3839 = vadd.f32 %v3603, %v3801
      %v3840 = vadd.f32 %v3607, %v3804
      %v3841 = vadd.f32 %v3613, %v3809
      %v3842 = vadd.f32 %v3617, %v3812
      %v3843 = vadd.f32 %v3623, %v3817
      %v3844 = vadd.f32 %v3627, %v3820
      %v3845 = vadd.f32 %v3633, %v3825
      %v3846 = vadd.f32 %v3637, %v3828
      %v3847 = vld [vmem:[%s6] sm:$0x1]
      %v3849 = vlaneseq
      %v3850 = vshrl.u32 %v3849, 7
      %v3851 = vsub.s32 0, %v3850
      %v3852 = vrot.slane %v3847, %v3851
      %v3854 = vadd.f32 %v3831, %v3852
      %v3855 = vadd.f32 %v3832, %v3852
      %v3856 = vadd.f32 %v3833, %v3852
      %v3857 = vadd.f32 %v3834, %v3852
      %v3858 = vadd.f32 %v3835, %v3852
      %v3859 = vadd.f32 %v3836, %v3852
      %v3860 = vadd.f32 %v3837, %v3852
      %v3861 = vadd.f32 %v3838, %v3852
      %v3862 = vadd.f32 %v3839, %v3852
      %v3863 = vadd.f32 %v3840, %v3852
      %v3864 = vadd.f32 %v3841, %v3852
      %v3865 = vadd.f32 %v3842, %v3852
      %v3866 = vadd.f32 %v3843, %v3852
      %v3867 = vadd.f32 %v3844, %v3852
      %v3868 = vadd.f32 %v3845, %v3852
      %v3869 = vadd.f32 %v3846, %v3852
      %v3870 = vmax.f32 %v3854, 0.0
      %v3871 = vmax.f32 %v3855, 0.0
      %v3872 = vmax.f32 %v3856, 0.0
      %v3873 = vmax.f32 %v3857, 0.0
      %v3874 = vmax.f32 %v3858, 0.0
      %v3875 = vmax.f32 %v3859, 0.0
      %v3876 = vmax.f32 %v3860, 0.0
      %v3877 = vmax.f32 %v3861, 0.0
      %v3878 = vmax.f32 %v3862, 0.0
      %v3879 = vmax.f32 %v3863, 0.0
      %v3880 = vmax.f32 %v3864, 0.0
      %v3881 = vmax.f32 %v3865, 0.0
      %v3882 = vmax.f32 %v3866, 0.0
      %v3883 = vmax.f32 %v3867, 0.0
      %v3884 = vmax.f32 %v3868, 0.0
      %v3885 = vmax.f32 %v3869, 0.0
      %v3886 = vpack.c.bf16 %v3871, %v3870
      %v3887 = vpack.c.bf16 %v3873, %v3872
      %v3888 = vpack.c.bf16 %v3875, %v3874
      %v3889 = vpack.c.bf16 %v3877, %v3876
      %v3890 = vpack.c.bf16 %v3879, %v3878
      %v3891 = vpack.c.bf16 %v3881, %v3880
      %v3892 = vpack.c.bf16 %v3883, %v3882
      %v3893 = vpack.c.bf16 %v3885, %v3884
      %v3894 = vld [vmem:[%s7] sm:$0xf]
      %v3895 = vld [vmem:[%s7 + $0x4] sm:$0xf]
      %v3896 = vld [vmem:[%s7 + $0x8] sm:$0xf]
      %v3897 = vld [vmem:[%s7 + $0xc] sm:$0xf]
      %v3898 = vld [vmem:[%s7 + $0x10] sm:$0xf]
      %v3899 = vld [vmem:[%s7 + $0x14] sm:$0xf]
      %v3900 = vld [vmem:[%s7 + $0x18] sm:$0xf]
      %v3901 = vld [vmem:[%s7 + $0x1c] sm:$0xf]
      %v3902 = vld [vmem:[%s7 + $0x20] sm:$0xf]
      %v3903 = vld [vmem:[%s7 + $0x24] sm:$0xf]
      %v3904 = vld [vmem:[%s7 + $0x28] sm:$0xf]
      %v3905 = vld [vmem:[%s7 + $0x2c] sm:$0xf]
      %v3906 = vld [vmem:[%s7 + $0x30] sm:$0xf]
      %v3907 = vld [vmem:[%s7 + $0x34] sm:$0xf]
      %v3908 = vld [vmem:[%s7 + $0x38] sm:$0xf]
      %v3909 = vld [vmem:[%s7 + $0x3c] sm:$0xf]
      %v3910 = vld [vmem:[%s8] sm:$0x1]
      %v3912 = vlaneseq
      %v3913 = vshrl.u32 %v3912, 7
      %v3914 = vsub.s32 0, %v3913
      %v3915 = vrot.slane %v3910, %v3914
      %v3933 = vunpack.c.l.b16 %v3894
      %v3934 = vunpack.c.l.b16 %v3895
      %v3935 = vunpack.c.l.b16 %v3896
      %v3936 = vunpack.c.l.b16 %v3897
      %v3937 = vunpack.c.l.b16 %v3898
      %v3938 = vunpack.c.l.b16 %v3899
      %v3939 = vunpack.c.l.b16 %v3900
      %v3940 = vunpack.c.l.b16 %v3901
      %v3941 = vunpack.c.l.b16 %v3902
      %v3942 = vunpack.c.l.b16 %v3903
      %v3943 = vunpack.c.l.b16 %v3904
      %v3944 = vunpack.c.l.b16 %v3905
      %v3945 = vunpack.c.l.b16 %v3906
      %v3946 = vunpack.c.l.b16 %v3907
      %v3947 = vunpack.c.l.b16 %v3908
      %v3948 = vunpack.c.l.b16 %v3909
      %v3949 = vpack.c.b16 %v3934, %v3933
      %v3950 = vpack.c.b16 %v3936, %v3935
      %v3951 = vpack.c.b16 %v3938, %v3937
      %v3952 = vpack.c.b16 %v3940, %v3939
      %v3953 = vpack.c.b16 %v3942, %v3941
      %v3954 = vpack.c.b16 %v3944, %v3943
      %v3955 = vpack.c.b16 %v3946, %v3945
      %v3956 = vpack.c.b16 %v3948, %v3947
      %3965 = vmatprep.subr.bf16.mxu0 0
      %3966 = vmatpush1.bf16.msra.mxu0 %v3949
      %3967 = vmatprep.subr.bf16.mxu0 0
      %3968 = vmatpush1.bf16.msra.mxu0 %v3950
      %3969 = vmatprep.subr.bf16.mxu0 0
      %3970 = vmatpush1.bf16.msra.mxu0 %v3951
      %3971 = vmatprep.subr.bf16.mxu0 0
      %3972 = vmatpush1.bf16.msra.mxu0 %v3952
      %3973 = vmatprep.subr.bf16.mxu0 0
      %3974 = vmatpush1.bf16.msra.mxu0 %v3953
      %3975 = vmatprep.subr.bf16.mxu0 0
      %3976 = vmatpush1.bf16.msra.mxu0 %v3954
      %3977 = vmatprep.subr.bf16.mxu0 0
      %3978 = vmatpush1.bf16.msra.mxu0 %v3955
      %3979 = vmatprep.subr.bf16.mxu0 0
      %3980 = vmatpush1.bf16.msra.mxu0 %v3956
      %3981 = vmatprep.subr.bf16.mxu0 0
      %3982 = vmatpush1.bf16.msra.mxu0 0
      %3983 = vmatprep.subr.bf16.mxu0 0
      %3984 = vmatpush1.bf16.msra.mxu0 0
      %3985 = vmatprep.subr.bf16.mxu0 0
      %3986 = vmatpush1.bf16.msra.mxu0 0
      %3987 = vmatprep.subr.bf16.mxu0 0
      %3988 = vmatpush1.bf16.msra.mxu0 0
      %3989 = vmatprep.subr.bf16.mxu0 0
      %3990 = vmatpush1.bf16.msra.mxu0 0
      %3991 = vmatprep.subr.bf16.mxu0 0
      %3992 = vmatpush1.bf16.msra.mxu0 0
      %3993 = vmatprep.subr.bf16.mxu0 0
      %3994 = vmatpush1.bf16.msra.mxu0 0
      %3995 = vmatprep.subr.bf16.mxu0 0
      %3996 = vmatpush1.bf16.msra.mxu0 0
      %3997 = vmatprep.mubr.bf16.mxu0 0
      %3998 = vmatmul.mubr.bf16.gmra.mrb[0].mxu0 %v3886
      %v3999 = vpop.f32.mrb[0].mxu0
      %v4000 = vadd.f32 %v3915, %v3999
      %v4001 = vpop.f32.mrb[0].mxu0
      %v4002 = vpop.f32.mrb[0].mxu0
      %v4003 = vadd.f32 %v3915, %v4002
      %v4004 = vpop.f32.mrb[0].mxu0
      %4005 = vmatprep.mubr.bf16.mxu0 0
      %4006 = vmatmul.mubr.bf16.gmra.mrb[0].mxu0 %v3887
      %v4007 = vpop.f32.mrb[0].mxu0
      %v4008 = vadd.f32 %v3915, %v4007
      %v4009 = vpop.f32.mrb[0].mxu0
      %v4010 = vpop.f32.mrb[0].mxu0
      %v4011 = vadd.f32 %v3915, %v4010
      %v4012 = vpop.f32.mrb[0].mxu0
      %4013 = vmatprep.mubr.bf16.mxu0 0
      %4014 = vmatmul.mubr.bf16.gmra.mrb[0].mxu0 %v3888
      %v4015 = vpop.f32.mrb[0].mxu0
      %v4016 = vadd.f32 %v3915, %v4015
      %v4017 = vpop.f32.mrb[0].mxu0
      %v4018 = vpop.f32.mrb[0].mxu0
      %v4019 = vadd.f32 %v3915, %v4018
      %v4020 = vpop.f32.mrb[0].mxu0
      %4021 = vmatprep.mubr.bf16.mxu0 0
      %4022 = vmatmul.mubr.bf16.gmra.mrb[0].mxu0 %v3889
      %v4023 = vpop.f32.mrb[0].mxu0
      %v4024 = vadd.f32 %v3915, %v4023
      %v4025 = vpop.f32.mrb[0].mxu0
      %v4026 = vpop.f32.mrb[0].mxu0
      %v4027 = vadd.f32 %v3915, %v4026
      %v4028 = vpop.f32.mrb[0].mxu0
      %4029 = vmatprep.mubr.bf16.mxu0 0
      %4030 = vmatmul.mubr.bf16.gmra.mrb[0].mxu0 %v3890
      %v4031 = vpop.f32.mrb[0].mxu0
      %v4032 = vadd.f32 %v3915, %v4031
      %v4033 = vpop.f32.mrb[0].mxu0
      %v4034 = vpop.f32.mrb[0].mxu0
      %v4035 = vadd.f32 %v3915, %v4034
      %v4036 = vpop.f32.mrb[0].mxu0
      %4037 = vmatprep.mubr.bf16.mxu0 0
      %4038 = vmatmul.mubr.bf16.gmra.mrb[0].mxu0 %v3891
      %v4039 = vpop.f32.mrb[0].mxu0
      %v4040 = vadd.f32 %v3915, %v4039
      %v4041 = vpop.f32.mrb[0].mxu0
      %v4042 = vpop.f32.mrb[0].mxu0
      %v4043 = vadd.f32 %v3915, %v4042
      %v4044 = vpop.f32.mrb[0].mxu0
      %4045 = vmatprep.mubr.bf16.mxu0 0
      %4046 = vmatmul.mubr.bf16.gmra.mrb[0].mxu0 %v3892
      %v4047 = vpop.f32.mrb[0].mxu0
      %v4048 = vadd.f32 %v3915, %v4047
      %v4049 = vpop.f32.mrb[0].mxu0
      %v4050 = vpop.f32.mrb[0].mxu0
      %v4051 = vadd.f32 %v3915, %v4050
      %v4052 = vpop.f32.mrb[0].mxu0
      %4053 = vmatprep.mubr.bf16.mxu0 0
      %4054 = vmatmul.mubr.bf16.gmra.mrb[0].mxu0 %v3893
      %v4055 = vpop.f32.mrb[0].mxu0
      %v4056 = vadd.f32 %v3915, %v4055
      %v4057 = vpop.f32.mrb[0].mxu0
      %v4058 = vpop.f32.mrb[0].mxu0
      %v4059 = vadd.f32 %v3915, %v4058
      %v4060 = vpop.f32.mrb[0].mxu0
      %4061 = vdwg.mxu0
      %v4062 = vmax.f32 %v4000, %v4008
      %v4063 = vmax.f32 %v4003, %v4011
      %v4064 = vmax.f32 %v4062, %v4016
      %v4065 = vmax.f32 %v4063, %v4019
      %v4066 = vmax.f32 %v4064, %v4024
      %v4067 = vmax.f32 %v4065, %v4027
      %v4068 = vmax.f32 %v4066, %v4067
      %v4069 = vrot.slane %v4068, 4
      %v4070 = vmax.f32 %v4068, %v4069
      %v4071 = vrot.slane %v4070, 2
      %v4072 = vmax.f32 %v4070, %v4071
      %v4073 = vrot.slane %v4072, 1
      %v4074 = vmax.f32 %v4072, %v4073
      %v4075 = vmax.f32 %v4032, %v4040
      %v4076 = vmax.f32 %v4035, %v4043
      %v4077 = vmax.f32 %v4075, %v4048
      %v4078 = vmax.f32 %v4076, %v4051
      %v4079 = vmax.f32 %v4077, %v4056
      %v4080 = vmax.f32 %v4078, %v4059
      %v4081 = vmax.f32 %v4079, %v4080
      %v4082 = vrot.slane %v4081, 4
      %v4083 = vmax.f32 %v4081, %v4082
      %v4084 = vrot.slane %v4083, 2
      %v4085 = vmax.f32 %v4083, %v4084
      %v4086 = vrot.slane %v4085, 1
      %v4087 = vmax.f32 %v4085, %v4086
      %v4088 = vsub.f32 %v4000, %v4074
      %v4089 = vsub.f32 %v4003, %v4074
      %v4090 = vsub.f32 %v4008, %v4074
      %v4091 = vsub.f32 %v4011, %v4074
      %v4092 = vsub.f32 %v4016, %v4074
      %v4093 = vsub.f32 %v4019, %v4074
      %v4094 = vsub.f32 %v4024, %v4074
      %v4095 = vsub.f32 %v4027, %v4074
      %v4096 = vsub.f32 %v4032, %v4087
      %v4097 = vsub.f32 %v4035, %v4087
      %v4098 = vsub.f32 %v4040, %v4087
      %v4099 = vsub.f32 %v4043, %v4087
      %v4100 = vsub.f32 %v4048, %v4087
      %v4101 = vsub.f32 %v4051, %v4087
      %v4102 = vsub.f32 %v4056, %v4087
      %v4103 = vsub.f32 %v4059, %v4087
      %v4104 = vmul.f32 %v4088, 1.442695
      %v4105 = vpow.pop %v4104
      %v4106 = vmul.f32 %v4089, 1.442695
      %v4107 = vpow.pop %v4106
      %v4108 = vmul.f32 %v4090, 1.442695
      %v4109 = vpow.pop %v4108
      %v4110 = vmul.f32 %v4091, 1.442695
      %v4111 = vpow.pop %v4110
      %v4112 = vmul.f32 %v4092, 1.442695
      %v4113 = vpow.pop %v4112
      %v4114 = vmul.f32 %v4093, 1.442695
      %v4115 = vpow.pop %v4114
      %v4116 = vmul.f32 %v4094, 1.442695
      %v4117 = vpow.pop %v4116
      %v4118 = vmul.f32 %v4095, 1.442695
      %v4119 = vpow.pop %v4118
      %v4120 = vmul.f32 %v4096, 1.442695
      %v4121 = vpow.pop %v4120
      %v4122 = vmul.f32 %v4097, 1.442695
      %v4123 = vpow.pop %v4122
      %v4124 = vmul.f32 %v4098, 1.442695
      %v4125 = vpow.pop %v4124
      %v4126 = vmul.f32 %v4099, 1.442695
      %v4127 = vpow.pop %v4126
      %v4128 = vmul.f32 %v4100, 1.442695
      %v4129 = vpow.pop %v4128
      %v4130 = vmul.f32 %v4101, 1.442695
      %v4131 = vpow.pop %v4130
      %v4132 = vmul.f32 %v4102, 1.442695
      %v4133 = vpow.pop %v4132
      %v4134 = vmul.f32 %v4103, 1.442695
      %v4135 = vpow.pop %v4134
      %v4136 = vadd.f32 %v4105, %v4107
      %v4137 = vadd.f32 %v4136, %v4109
      %v4138 = vadd.f32 %v4137, %v4111
      %v4139 = vadd.f32 %v4138, %v4113
      %v4140 = vadd.f32 %v4139, %v4115
      %v4141 = vadd.f32 %v4140, %v4117
      %v4142 = vadd.f32 %v4141, %v4119
      %v4143 = vrot.slane %v4142, 4
      %v4144 = vadd.f32 %v4142, %v4143
      %v4145 = vrot.slane %v4144, 2
      %v4146 = vadd.f32 %v4144, %v4145
      %v4147 = vrot.slane %v4146, 1
      %v4148 = vadd.f32 %v4146, %v4147
      %v4149 = vadd.f32 %v4121, %v4123
      %v4150 = vadd.f32 %v4149, %v4125
      %v4151 = vadd.f32 %v4150, %v4127
      %v4152 = vadd.f32 %v4151, %v4129
      %v4153 = vadd.f32 %v4152, %v4131
      %v4154 = vadd.f32 %v4153, %v4133
      %v4155 = vadd.f32 %v4154, %v4135
      %v4156 = vrot.slane %v4155, 4
      %v4157 = vadd.f32 %v4155, %v4156
      %v4158 = vrot.slane %v4157, 2
      %v4159 = vadd.f32 %v4157, %v4158
      %v4160 = vrot.slane %v4159, 1
      %v4161 = vadd.f32 %v4159, %v4160
      %v4162 = vrcp.pop %v4148
      %v4163 = vrcp.pop %v4161
      %v4164 = vmul.f32 %v4105, %v4162
      %v4165 = vmul.f32 %v4107, %v4162
      %v4166 = vmul.f32 %v4109, %v4162
      %v4167 = vmul.f32 %v4111, %v4162
      %v4168 = vmul.f32 %v4113, %v4162
      %v4169 = vmul.f32 %v4115, %v4162
      %v4170 = vmul.f32 %v4117, %v4162
      %v4171 = vmul.f32 %v4119, %v4162
      %v4172 = vmul.f32 %v4121, %v4163
      %v4173 = vmul.f32 %v4123, %v4163
      %v4174 = vmul.f32 %v4125, %v4163
      %v4175 = vmul.f32 %v4127, %v4163
      %v4176 = vmul.f32 %v4129, %v4163
      %v4177 = vmul.f32 %v4131, %v4163
      %v4178 = vmul.f32 %v4133, %v4163
      %v4179 = vmul.f32 %v4135, %v4163
      %v4180 = vmul.f32 %v4164, %v3646
      %v4181 = vmul.f32 %v4165, %v3647
      %v4182 = vmul.f32 %v4166, %v3648
      %v4183 = vmul.f32 %v4167, %v3649
      %v4184 = vmul.f32 %v4168, %v3650
      %v4185 = vmul.f32 %v4169, %v3651
      %v4186 = vmul.f32 %v4170, %v3652
      %v4187 = vmul.f32 %v4171, %v3653
      %v4188 = vmul.f32 %v4172, %v3654
      %v4189 = vmul.f32 %v4173, %v3655
      %v4190 = vmul.f32 %v4174, %v3656
      %v4191 = vmul.f32 %v4175, %v3657
      %v4192 = vmul.f32 %v4176, %v3658
      %v4193 = vmul.f32 %v4177, %v3659
      %v4194 = vmul.f32 %v4178, %v3660
      %v4195 = vmul.f32 %v4179, %v3661
      %v4196 = vadd.f32 %v3414, %v4180
      %v4197 = vadd.f32 %v3415, %v4181
      %v4198 = vadd.f32 %v3416, %v4182
      %v4199 = vadd.f32 %v3417, %v4183
      %v4200 = vadd.f32 %v3418, %v4184
      %v4201 = vadd.f32 %v3419, %v4185
      %v4202 = vadd.f32 %v3420, %v4186
      %v4203 = vadd.f32 %v3421, %v4187
      %v4204 = vadd.f32 %v3422, %v4188
      %v4205 = vadd.f32 %v3423, %v4189
      %v4206 = vadd.f32 %v3424, %v4190
      %v4207 = vadd.f32 %v3425, %v4191
      %v4208 = vadd.f32 %v3426, %v4192
      %v4209 = vadd.f32 %v3427, %v4193
      %v4210 = vadd.f32 %v3428, %v4194
      %v4211 = vadd.f32 %v3429, %v4195
      %v4212 = vpack.c.bf16 %v4197, %v4196
      %v4213 = vpack.c.bf16 %v4199, %v4198
      %v4214 = vpack.c.bf16 %v4201, %v4200
      %v4215 = vpack.c.bf16 %v4203, %v4202
      %v4216 = vpack.c.bf16 %v4205, %v4204
      %v4217 = vpack.c.bf16 %v4207, %v4206
      %v4218 = vpack.c.bf16 %v4209, %v4208
      %v4219 = vpack.c.bf16 %v4211, %v4210
      %v4228 = vunpack.c.l.b16 %v4212
      %v4229 = vunpack.c.h.b16 %v4212
      %v4230 = vunpack.c.l.b16 %v4213
      %v4231 = vunpack.c.h.b16 %v4213
      %v4232 = vunpack.c.l.b16 %v4214
      %v4233 = vunpack.c.h.b16 %v4214
      %v4234 = vunpack.c.l.b16 %v4215
      %v4235 = vunpack.c.h.b16 %v4215
      %v4236 = vunpack.c.l.b16 %v4216
      %v4237 = vunpack.c.h.b16 %v4216
      %v4238 = vunpack.c.l.b16 %v4217
      %v4239 = vunpack.c.h.b16 %v4217
      %v4240 = vunpack.c.l.b16 %v4218
      %v4241 = vunpack.c.h.b16 %v4218
      %v4242 = vunpack.c.l.b16 %v4219
      %v4243 = vunpack.c.h.b16 %v4219
      %v4244 = vpack.c.b16 %v4228, %v4228
      %v4245 = vpack.c.b16 %v4229, %v4229
      %v4246 = vpack.c.b16 %v4230, %v4230
      %v4247 = vpack.c.b16 %v4231, %v4231
      %v4248 = vpack.c.b16 %v4232, %v4232
      %v4249 = vpack.c.b16 %v4233, %v4233
      %v4250 = vpack.c.b16 %v4234, %v4234
      %v4251 = vpack.c.b16 %v4235, %v4235
      %v4252 = vpack.c.b16 %v4236, %v4236
      %v4253 = vpack.c.b16 %v4237, %v4237
      %v4254 = vpack.c.b16 %v4238, %v4238
      %v4255 = vpack.c.b16 %v4239, %v4239
      %v4256 = vpack.c.b16 %v4240, %v4240
      %v4257 = vpack.c.b16 %v4241, %v4241
      %v4258 = vpack.c.b16 %v4242, %v4242
      %v4259 = vpack.c.b16 %v4243, %v4243
      %4276 = vst [vmem:[%s339] sm:$0xf] %v4244
      %4277 = vst [vmem:[%s339 + $0x4] sm:$0xf] %v4245
      %4278 = vst [vmem:[%s339 + $0x8] sm:$0xf] %v4246
      %4279 = vst [vmem:[%s339 + $0xc] sm:$0xf] %v4247
      %4280 = vst [vmem:[%s339 + $0x10] sm:$0xf] %v4248
      %4281 = vst [vmem:[%s339 + $0x14] sm:$0xf] %v4249
      %4282 = vst [vmem:[%s339 + $0x18] sm:$0xf] %v4250
      %4283 = vst [vmem:[%s339 + $0x1c] sm:$0xf] %v4251
      %4284 = vst [vmem:[%s339 + $0x20] sm:$0xf] %v4252
      %4285 = vst [vmem:[%s339 + $0x24] sm:$0xf] %v4253
      %4286 = vst [vmem:[%s339 + $0x28] sm:$0xf] %v4254
      %4287 = vst [vmem:[%s339 + $0x2c] sm:$0xf] %v4255
      %4288 = vst [vmem:[%s339 + $0x30] sm:$0xf] %v4256
      %4289 = vst [vmem:[%s339 + $0x34] sm:$0xf] %v4257
      %4290 = vst [vmem:[%s339 + $0x38] sm:$0xf] %v4258
      %4291 = vst [vmem:[%s339 + $0x3c] sm:$0xf] %v4259
      %s4292 = smul.u32 2, %s20
      %p4293 = scmp.lt.s32.totalorder %s4292, 3
      %s4294 = scalar_select %p4293, %s4292, 3
      %s4295 = smul.addr %s4294, 8
      %s4296 = smul.addr %s4295, 4
      %s4297 = scalar_lea.vmem %s9, %s4296
      // Predicated region
      $region57: #{cot_attention_pallas.1} parent=55 // pred_check
        %p4298 = pneg %p232
      $region58: #{cot_attention_pallas.1} parent=55 // pred_check_branch
        %4300 = sbr.rel (%p4298) target = $region60
      $region59: #{cot_attention_pallas.1} parent=55 // pred_region
        %s4301 = smul.u32 2, %s20
      $region60: #{cot_attention_pallas.1} parent=55 // pred_fallthru
        _
    $region56: #{cot_attention_pallas.1} parent=5 // pred_fallthru
      _
    %p4302 = scmp.le.s32.totalorder 2, %s15
    // Predicated region
    $region61: #{cot_attention_pallas.1} parent=5 // pred_check
      %p4303 = pneg %p4302
    $region62: #{cot_attention_pallas.1} parent=5 // pred_check_branch
      %4305 = sbr.rel (%p4303) target = $region64
    $region63: #{cot_attention_pallas.1} parent=5 // pred_region
      %s4306 = ssub.s32 %s15, 2
      // Predicated region
      $region65: #{cot_attention_pallas.1} parent=63 // pred_check
        %p4307 = pneg %p238
      $region66: #{cot_attention_pallas.1} parent=63 // pred_check_branch
        %4309 = sbr.rel (%p4307) target = $region68
      $region67: #{cot_attention_pallas.1} parent=63 // pred_region
        %s4310 = smul.u32 2, %s21
        %p4311 = scmp.lt.s32.totalorder %s4310, 3
        %s4312 = scalar_select %p4311, %s4310, 3
        %s4313 = smul.addr %s4312, 8
        %s4314 = smul.addr %s4313, 4
        %s4315 = scalar_lea.vmem %s9, %s4314
      $region68: #{cot_attention_pallas.1} parent=63 // pred_fallthru
        _
    $region64: #{cot_attention_pallas.1} parent=5 // pred_fallthru
      _
  $region6: #{cot_attention_pallas.1} parent=0 // loop_footer
    %s19 = sadd.s32 1, %s15
  $region7: #{cot_attention_pallas.1} parent=0 // loop_footer_branch
    %14 = sbr.rel target = $region3
  $region8: #{cot_attention_pallas.1} parent=0 // loop_exit
    _

</llo_original>
